<compile_context>
chip_gen: v7x
topology: tpu7x:2x2x1
jax: 0.10.0
libtpu: 0.0.40
codegen_flags: <defaults>
</compile_context>

<pallas_src>
import jax
import jax.numpy as jnp
from jax.experimental import pallas as pl
from jax.experimental.pallas import tpu as pltpu


def _gafn_four_kernel(x_ref, wc_ref, bl_ref, cf_ref, e_ref, et_ref, bn_ref, out_ref):
    eps = jnp.float32(1e-12)

    x = x_ref[...]                                                # (TM, dim) f32

    # (1) descriptor-wise L2 normalize (F.normalize(dim=3))
    xn = x * (1.0 / jnp.maximum(jnp.sqrt(jnp.sum(x * x, axis=-1, keepdims=True)), eps))

    # (2) 1x1 conv == row matmul with (2*alpha*centroids)^T plus bias; softmax over K
    logits = jnp.dot(xn, wc_ref[...], preferred_element_type=jnp.float32) + bl_ref[...]
    mx = jnp.max(logits, axis=-1, keepdims=True)
    ex = jnp.exp(logits - mx)
    sa = ex * (1.0 / jnp.sum(ex, axis=-1, keepdims=True))         # (TM, K)

    # (3) residuals in lane-dense layout: column j = k*dim + w
    K = e_ref.shape[0]
    xt = jnp.concatenate([xn] * K, axis=-1)                       # (TM, K*dim)
    sa_rep = jnp.dot(sa, e_ref[...], preferred_element_type=jnp.float32)   # expand K -> lanes
    r = (xt - cf_ref[...]) * sa_rep                               # (TM, K*dim)

    # (4) intra-cluster L2 normalize (F.normalize(dim=4)); segment sums via selector matmul
    ss = jnp.dot(r * r, et_ref[...], preferred_element_type=jnp.float32)   # (TM, K)
    inv = 1.0 / jnp.maximum(jnp.sqrt(ss), eps)
    rn = r * jnp.dot(inv, e_ref[...], preferred_element_type=jnp.float32)

    # (5) BatchNorm3d (eval mode) folded to a per-row affine
    y = rn * bn_ref[:, 0:1] + bn_ref[:, 1:2]

    # (6) final L2 normalize over the flattened K*dim descriptor; lane-dense store
    out_ref[...] = y * (1.0 / jnp.maximum(
        jnp.sqrt(jnp.sum(y * y, axis=-1, keepdims=True)), eps))


def gafn_four_forward(x, centroids, bn, *, alpha=1.0, bn_eps=1e-5, tm=None):
    """x: (N, C, D, dim) f32.  centroids: (K, dim) f32.
    bn: dict with 'gamma','beta','mean','var' of shape (C,) (BatchNorm3d eval state).
    Returns (N, C, D, K*dim) f32."""
    N, C, D, dim = x.shape
    K = centroids.shape[0]
    M = N * C * D
    KD = K * dim

    # Row-block size: MXU-sized, and >= 2 blocks so v7x megacore can shard the grid.
    if tm is None:
        tm = M
        for cand in (512, 256, 128, 64, 32, 16, 8):
            if M % cand == 0 and M // cand >= 2:
                tm = cand
                break
    grid = (M // tm,)

    f32 = jnp.float32
    x2d = x.reshape(M, dim).astype(f32)
    wc = (2.0 * alpha * centroids).T.astype(f32)                                  # (dim, K)
    bl = (-alpha * jnp.linalg.norm(centroids, axis=1)).reshape(1, K).astype(f32)  # (1, K)
    cf = centroids.reshape(1, KD).astype(f32)                                     # (1, K*dim)
    # 0/1 selector: e[k, k*dim + w] = 1  (cluster <-> lane-segment mapping)
    e = jnp.kron(jnp.eye(K, dtype=f32), jnp.ones((1, dim), f32))                  # (K, K*dim)
    et = e.T                                                                      # (K*dim, K)

    # BatchNorm3d(C) in eval mode -> per-channel affine -> per-row (scale, shift)
    scale_c = bn["gamma"] / jnp.sqrt(bn["var"] + bn_eps)                          # (C,)
    shift_c = bn["beta"] - bn["mean"] * scale_c                                   # (C,)
    row_scale = jnp.tile(jnp.repeat(scale_c, D), N)                               # (M,)
    row_shift = jnp.tile(jnp.repeat(shift_c, D), N)                               # (M,)
    bn_rows = jnp.stack([row_scale, row_shift], axis=-1).astype(f32)              # (M, 2)

    const = lambda shape: pl.BlockSpec(shape, lambda i: (0, 0))

    out2d = pl.pallas_call(
        _gafn_four_kernel,
        out_shape=jax.ShapeDtypeStruct((M, KD), f32),
        grid_spec=pltpu.PrefetchScalarGridSpec(
            num_scalar_prefetch=0,
            grid=grid,
            in_specs=[
                pl.BlockSpec((tm, dim), lambda i: (i, 0)),   # x rows
                const((dim, K)),                             # conv weight (2*alpha*centroids)^T
                const((1, K)),                               # conv bias -alpha*||c_k||
                const((1, KD)),                              # centroids, lane-dense
                const((K, KD)),                              # cluster -> lane expansion selector
                const((KD, K)),                              # lane -> cluster segment-sum selector
                pl.BlockSpec((tm, 2), lambda i: (i, 0)),     # per-row BN (scale, shift)
            ],
            out_specs=pl.BlockSpec((tm, KD), lambda i: (i, 0)),
        ),
        compiler_params=pltpu.CompilerParams(
            dimension_semantics=("parallel",)),
    )(x2d, wc, bl, cf, e, et, bn_rows)

    return out2d.reshape(N, C, D, KD)


def _reference(x, centroids, bn, *, alpha=1.0, bn_eps=1e-5):
    """Plain-JAX mirror of GAFN_Four.forward (eval-mode BatchNorm)."""
    N, C, D, dim = x.shape
    K = centroids.shape[0]
    eps = 1e-12
    hp = jax.lax.Precision.HIGHEST

    xn = x / jnp.maximum(jnp.linalg.norm(x, axis=3, keepdims=True), eps)
    logits = jnp.einsum("ncdw,kw->nkcd", xn, 2.0 * alpha * centroids, precision=hp)
    logits = logits - alpha * jnp.linalg.norm(centroids, axis=1)[None, :, None, None]
    sa = jax.nn.softmax(logits, axis=1)                                       # (N,K,C,D)

    residual = xn[:, None, :, :, :] - centroids[None, :, None, None, :]       # (N,K,C,D,dim)
    residual = residual * sa[..., None]
    vlad = jnp.transpose(residual, (0, 2, 3, 1, 4))                           # (N,C,D,K,dim)
    vlad = vlad / jnp.maximum(jnp.linalg.norm(vlad, axis=4, keepdims=True), eps)

    scale = bn["gamma"] / jnp.sqrt(bn["var"] + bn_eps)
    shift = bn["beta"] - bn["mean"] * scale
    vlad = vlad * scale[None, :, None, None, None] + shift[None, :, None, None, None]

    vlad = vlad.reshape(N, C, D, K * dim)
    vlad = vlad / jnp.maximum(jnp.linalg.norm(vlad, axis=3, keepdims=True), eps)
    return vlad


if __name__ == "__main__":
    # Shapes implied by the module: x is (N, C, D, dim); BatchNorm3d(8) requires C == 8.
    N, C, D, dim, K = 2, 8, 16, 32, 16

    key = jax.random.PRNGKey(0)
    kx, kc, kg, kb, km, kv = jax.random.split(key, 6)

    x = jax.random.normal(kx, (N, C, D, dim), jnp.float32)
    centroids = jax.random.uniform(kc, (K, dim), jnp.float32)      # torch.rand-like init
    # TODO(synk): BatchNorm3d training-mode batch statistics are not implemented;
    # the kernel uses eval-mode running stats (supplied here as BN state).
    bn = {
        "gamma": jax.random.uniform(kg, (C,), jnp.float32, 0.5, 1.5),
        "beta": 0.1 * jax.random.normal(kb, (C,), jnp.float32),
        "mean": 0.1 * jax.random.normal(km, (C,), jnp.float32),
        "var": jax.random.uniform(kv, (C,), jnp.float32, 0.5, 1.5),
    }

    out = gafn_four_forward(x, centroids, bn)
    out = jax.block_until_ready(out)

    ref = _reference(x, centroids, bn)
    assert out.shape == (N, C, D, K * dim)
    assert jnp.allclose(out, ref, atol=3e-5, rtol=3e-5), "mismatch vs reference"

    print("KERNEL_OK")
</pallas_src>

<mosaic_0001>
module attributes {stable_mosaic.version = 11 : i64} {
  func.func @_gafn_four_kernel(%arg0: i32, %arg1: memref<128x32xf32, #tpu.memory_space<vmem>>, %arg2: memref<32x16xf32, #tpu.memory_space<vmem>>, %arg3: memref<1x16xf32, #tpu.memory_space<vmem>>, %arg4: memref<1x512xf32, #tpu.memory_space<vmem>>, %arg5: memref<16x512xf32, #tpu.memory_space<vmem>>, %arg6: memref<512x16xf32, #tpu.memory_space<vmem>>, %arg7: memref<128x2xf32, #tpu.memory_space<vmem>>, %arg8: memref<128x512xf32, #tpu.memory_space<vmem>>) attributes {dimension_semantics = [#tpu.dimension_semantics<parallel>], iteration_bounds = array<i64: 2>, scalar_prefetch = 0 : i64, scratch_operands = 0 : i64, tpu.core_type = #tpu.core_type<tc>, window_params = [{transform_indices = @transform_0, window_bounds = array<i64: 128, 32>}, {pipeline_mode = #tpu.pipeline_mode<synchronous>, transform_indices = @transform_1, window_bounds = array<i64: 32, 16>}, {pipeline_mode = #tpu.pipeline_mode<synchronous>, transform_indices = @transform_2, window_bounds = array<i64: 1, 16>}, {pipeline_mode = #tpu.pipeline_mode<synchronous>, transform_indices = @transform_3, window_bounds = array<i64: 1, 512>}, {pipeline_mode = #tpu.pipeline_mode<synchronous>, transform_indices = @transform_4, window_bounds = array<i64: 16, 512>}, {pipeline_mode = #tpu.pipeline_mode<synchronous>, transform_indices = @transform_5, window_bounds = array<i64: 512, 16>}, {transform_indices = @transform_6, window_bounds = array<i64: 128, 2>}, {transform_indices = @transform_7, window_bounds = array<i64: 128, 512>}]} {
    %c0 = arith.constant 0 : index
    %c0_0 = arith.constant 0 : index
    %0 = vector.load %arg1[%c0, %c0_0] : memref<128x32xf32, #tpu.memory_space<vmem>>, vector<128x32xf32>
    %1 = arith.mulf %0, %0 : vector<128x32xf32>
    %cst = arith.constant dense<0.000000e+00> : vector<128xf32>
    %2 = vector.multi_reduction <add>, %1, %cst [1] : vector<128x32xf32> to vector<128xf32>
    %3 = vector.shape_cast %2 : vector<128xf32> to vector<128x1xf32>
    %4 = math.sqrt %3 : vector<128x1xf32>
    %cst_1 = arith.constant 9.99999996E-13 : f32
    %5 = vector.broadcast %cst_1 : f32 to vector<128x1xf32>
    %6 = arith.maximumf %4, %5 : vector<128x1xf32>
    %cst_2 = arith.constant 1.000000e+00 : f32
    %7 = vector.broadcast %cst_2 : f32 to vector<128x1xf32>
    %8 = arith.divf %7, %6 : vector<128x1xf32>
    %9 = vector.broadcast %8 : vector<128x1xf32> to vector<128x32xf32>
    %10 = arith.mulf %0, %9 : vector<128x32xf32>
    %c0_3 = arith.constant 0 : index
    %c0_4 = arith.constant 0 : index
    %11 = vector.load %arg2[%c0_3, %c0_4] : memref<32x16xf32, #tpu.memory_space<vmem>>, vector<32x16xf32>
    %cst_5 = arith.constant dense<0.000000e+00> : vector<128x16xf32>
    %12 = tpu.matmul %10, %11, %cst_5 {dimension_numbers = #tpu.dot_dimension_numbers<[1], [0], [0], [1], [0, 0, 1, 1], [], []>} : vector<128x32xf32>, vector<32x16xf32>, vector<128x16xf32> -> vector<128x16xf32>
    %c0_6 = arith.constant 0 : index
    %c0_7 = arith.constant 0 : index
    %13 = vector.load %arg3[%c0_6, %c0_7] : memref<1x16xf32, #tpu.memory_space<vmem>>, vector<1x16xf32>
    %14 = vector.broadcast %13 : vector<1x16xf32> to vector<128x16xf32>
    %15 = arith.addf %12, %14 : vector<128x16xf32>
    %cst_8 = arith.constant dense<0xFF800000> : vector<128xf32>
    %16 = vector.multi_reduction <maximumf>, %15, %cst_8 [1] : vector<128x16xf32> to vector<128xf32>
    %17 = vector.shape_cast %16 : vector<128xf32> to vector<128x1xf32>
    %18 = vector.broadcast %17 : vector<128x1xf32> to vector<128x16xf32>
    %19 = arith.subf %15, %18 : vector<128x16xf32>
    %20 = math.exp %19 : vector<128x16xf32>
    %cst_9 = arith.constant dense<0.000000e+00> : vector<128xf32>
    %21 = vector.multi_reduction <add>, %20, %cst_9 [1] : vector<128x16xf32> to vector<128xf32>
    %22 = vector.shape_cast %21 : vector<128xf32> to vector<128x1xf32>
    %cst_10 = arith.constant 1.000000e+00 : f32
    %23 = vector.broadcast %cst_10 : f32 to vector<128x1xf32>
    %24 = arith.divf %23, %22 : vector<128x1xf32>
    %25 = vector.broadcast %24 : vector<128x1xf32> to vector<128x16xf32>
    %26 = arith.mulf %20, %25 : vector<128x16xf32>
    %27 = tpu.concatenate %10, %10, %10, %10, %10, %10, %10, %10, %10, %10, %10, %10, %10, %10, %10, %10 in 1 : vector<128x32xf32>, vector<128x32xf32>, vector<128x32xf32>, vector<128x32xf32>, vector<128x32xf32>, vector<128x32xf32>, vector<128x32xf32>, vector<128x32xf32>, vector<128x32xf32>, vector<128x32xf32>, vector<128x32xf32>, vector<128x32xf32>, vector<128x32xf32>, vector<128x32xf32>, vector<128x32xf32>, vector<128x32xf32> -> vector<128x512xf32>
    %c0_11 = arith.constant 0 : index
    %c0_12 = arith.constant 0 : index
    %28 = vector.load %arg5[%c0_11, %c0_12] : memref<16x512xf32, #tpu.memory_space<vmem>>, vector<16x512xf32>
    %cst_13 = arith.constant dense<0.000000e+00> : vector<128x512xf32>
    %29 = tpu.matmul %26, %28, %cst_13 {dimension_numbers = #tpu.dot_dimension_numbers<[1], [0], [0], [1], [0, 0, 1, 1], [], []>} : vector<128x16xf32>, vector<16x512xf32>, vector<128x512xf32> -> vector<128x512xf32>
    %c0_14 = arith.constant 0 : index
    %c0_15 = arith.constant 0 : index
    %30 = vector.load %arg4[%c0_14, %c0_15] : memref<1x512xf32, #tpu.memory_space<vmem>>, vector<1x512xf32>
    %31 = vector.broadcast %30 : vector<1x512xf32> to vector<128x512xf32>
    %32 = arith.subf %27, %31 : vector<128x512xf32>
    %33 = arith.mulf %32, %29 : vector<128x512xf32>
    %34 = arith.mulf %33, %33 : vector<128x512xf32>
    %c0_16 = arith.constant 0 : index
    %c0_17 = arith.constant 0 : index
    %35 = vector.load %arg6[%c0_16, %c0_17] : memref<512x16xf32, #tpu.memory_space<vmem>>, vector<512x16xf32>
    %cst_18 = arith.constant dense<0.000000e+00> : vector<128x16xf32>
    %36 = tpu.matmul %34, %35, %cst_18 {dimension_numbers = #tpu.dot_dimension_numbers<[1], [0], [0], [1], [0, 0, 1, 1], [], []>} : vector<128x512xf32>, vector<512x16xf32>, vector<128x16xf32> -> vector<128x16xf32>
    %37 = math.sqrt %36 : vector<128x16xf32>
    %cst_19 = arith.constant 9.99999996E-13 : f32
    %38 = vector.broadcast %cst_19 : f32 to vector<128x16xf32>
    %39 = arith.maximumf %37, %38 : vector<128x16xf32>
    %cst_20 = arith.constant 1.000000e+00 : f32
    %40 = vector.broadcast %cst_20 : f32 to vector<128x16xf32>
    %41 = arith.divf %40, %39 : vector<128x16xf32>
    %c0_21 = arith.constant 0 : index
    %c0_22 = arith.constant 0 : index
    %42 = vector.load %arg5[%c0_21, %c0_22] : memref<16x512xf32, #tpu.memory_space<vmem>>, vector<16x512xf32>
    %cst_23 = arith.constant dense<0.000000e+00> : vector<128x512xf32>
    %43 = tpu.matmul %41, %42, %cst_23 {dimension_numbers = #tpu.dot_dimension_numbers<[1], [0], [0], [1], [0, 0, 1, 1], [], []>} : vector<128x16xf32>, vector<16x512xf32>, vector<128x512xf32> -> vector<128x512xf32>
    %44 = arith.mulf %33, %43 : vector<128x512xf32>
    %c0_24 = arith.constant 0 : index
    %c0_25 = arith.constant 0 : index
    %45 = vector.load %arg7[%c0_24, %c0_25] : memref<128x2xf32, #tpu.memory_space<vmem>>, vector<128x1xf32>
    %46 = vector.broadcast %45 : vector<128x1xf32> to vector<128x512xf32>
    %47 = arith.mulf %44, %46 : vector<128x512xf32>
    %c0_26 = arith.constant 0 : index
    %c1 = arith.constant 1 : index
    %48 = vector.load %arg7[%c0_26, %c1] : memref<128x2xf32, #tpu.memory_space<vmem>>, vector<128x1xf32>
    %49 = vector.broadcast %48 : vector<128x1xf32> to vector<128x512xf32>
    %50 = arith.addf %47, %49 : vector<128x512xf32>
    %51 = arith.mulf %50, %50 : vector<128x512xf32>
    %cst_27 = arith.constant dense<0.000000e+00> : vector<128xf32>
    %52 = vector.multi_reduction <add>, %51, %cst_27 [1] : vector<128x512xf32> to vector<128xf32>
    %53 = vector.shape_cast %52 : vector<128xf32> to vector<128x1xf32>
    %54 = math.sqrt %53 : vector<128x1xf32>
    %cst_28 = arith.constant 9.99999996E-13 : f32
    %55 = vector.broadcast %cst_28 : f32 to vector<128x1xf32>
    %56 = arith.maximumf %54, %55 : vector<128x1xf32>
    %cst_29 = arith.constant 1.000000e+00 : f32
    %57 = vector.broadcast %cst_29 : f32 to vector<128x1xf32>
    %58 = arith.divf %57, %56 : vector<128x1xf32>
    %59 = vector.broadcast %58 : vector<128x1xf32> to vector<128x512xf32>
    %60 = arith.mulf %50, %59 : vector<128x512xf32>
    %c0_30 = arith.constant 0 : index
    %c0_31 = arith.constant 0 : index
    %61 = vector.load %arg8[%c0_30, %c0_31] : memref<128x512xf32, #tpu.memory_space<vmem>>, vector<128x512xf32>
    tpu.vector_store %arg8[%c0_30, %c0_31], %60 {strides = array<i32>} : memref<128x512xf32, #tpu.memory_space<vmem>>, vector<128x512xf32>,
    return
  }
  func.func @transform_0(%arg0: i32) -> (i32, i32) {
    %c0_i32 = arith.constant 0 : i32
    %c0_i32_0 = arith.constant 0 : i32
    return %arg0, %c0_i32 : i32, i32
  }
  func.func @transform_1(%arg0: i32) -> (i32, i32) {
    %c0_i32 = arith.constant 0 : i32
    %c0_i32_0 = arith.constant 0 : i32
    %c0_i32_1 = arith.constant 0 : i32
    return %c0_i32, %c0_i32_0 : i32, i32
  }
  func.func @transform_2(%arg0: i32) -> (i32, i32) {
    %c0_i32 = arith.constant 0 : i32
    %c0_i32_0 = arith.constant 0 : i32
    %c0_i32_1 = arith.constant 0 : i32
    return %c0_i32, %c0_i32_0 : i32, i32
  }
  func.func @transform_3(%arg0: i32) -> (i32, i32) {
    %c0_i32 = arith.constant 0 : i32
    %c0_i32_0 = arith.constant 0 : i32
    %c0_i32_1 = arith.constant 0 : i32
    return %c0_i32, %c0_i32_0 : i32, i32
  }
  func.func @transform_4(%arg0: i32) -> (i32, i32) {
    %c0_i32 = arith.constant 0 : i32
    %c0_i32_0 = arith.constant 0 : i32
    %c0_i32_1 = arith.constant 0 : i32
    return %c0_i32, %c0_i32_0 : i32, i32
  }
  func.func @transform_5(%arg0: i32) -> (i32, i32) {
    %c0_i32 = arith.constant 0 : i32
    %c0_i32_0 = arith.constant 0 : i32
    %c0_i32_1 = arith.constant 0 : i32
    return %c0_i32, %c0_i32_0 : i32, i32
  }
  func.func @transform_6(%arg0: i32) -> (i32, i32) {
    %c0_i32 = arith.constant 0 : i32
    %c0_i32_0 = arith.constant 0 : i32
    return %arg0, %c0_i32 : i32, i32
  }
  func.func @transform_7(%arg0: i32) -> (i32, i32) {
    %c0_i32 = arith.constant 0 : i32
    %c0_i32_0 = arith.constant 0 : i32
    return %arg0, %c0_i32 : i32, i32
  }
}

</mosaic_0001>

<llo_original>
// kernel: tpu_custom_call.1
$region0: #{tpu_custom_call.1}
  #allocation0 [shape = 'u32[]', space=smem, size = 0x4, offset = 0x4, fixed_abs, tag = 'smem constant byte address 0x4 - core index']
  #allocation1 [shape = 'u32[144,128]{1,0:T(1,128)}', space=vmem, size = 0x12000, scoped, tag = 'internal scratch']
  %s0 = inlined_call_operand.vmem [shape: f32[256,32], index: 0, kind: input, shape index: {}]
  %s1 = inlined_call_operand.vmem [shape: f32[32,16], index: 1, kind: input, shape index: {}]
  %s2 = inlined_call_operand.vmem [shape: f32[1,16], index: 2, kind: input, shape index: {}]
  %s3 = inlined_call_operand.vmem [shape: f32[1,512], index: 3, kind: input, shape index: {}]
  %s4 = inlined_call_operand.vmem [shape: f32[16,512], index: 4, kind: input, shape index: {}]
  %s5 = inlined_call_operand.vmem [shape: f32[512,16], index: 5, kind: input, shape index: {}]
  %s6 = inlined_call_operand.vmem [shape: f32[256,2], index: 6, kind: input, shape index: {}]
  %s7 = inlined_call_operand.hbm [shape: f32[256,512], index: 7, kind: output, shape index: {}]
  %s8 = sld [smem:[#allocation0]]
  $region61: #{tpu_custom_call.1} parent=0
    _
  %s10 = ssub.s32 1, %s8
  %s11 = scalar_select 0, %s10, %s8
  $region1: #{tpu_custom_call.1} parent=0
    #allocation2 [shape = 'u8[524288]{0}', space=vmem, size = 0x80000, scoped, tag = 'output window, operand 0']
    #allocation3 [shape = 's32[2]{0}', space=sflag, size = 0x8, scoped, tag = 'scoped memory for tpu_custom_call.1']
    %12 = vsyncpa [#allocation3], 0
    %s13 = scalar_lea.sflag [#allocation3], 1
    %14 = vsyncpa %s13, 0
    loop: start=0, step=1, limit=4
    $region2: #{tpu_custom_call.1} parent=1 // loop_pre_header
      _
    $region3: #{tpu_custom_call.1} parent=1 // loop_header
      %s16 = sphi 0, %s20
      %p17 = scmp.ge.s32.totalorder %s16, 4
      %s26 = sphi 0, %s28
      %s29 = sphi 0, %s26
      %s30 = sphi 0, %s29
      %s46 = sphi 0, %s30
      %s50 = sphi 0, %s50
      %s52 = sphi 0, %s50
      %s53 = sphi 0, %s52
      %s67 = sphi 0, %s53
      %s71 = sphi 0, %s71
      %s73 = sphi 0, %s71
      %s74 = sphi 0, %s73
      %s88 = sphi 0, %s74
      %s92 = sphi 0, %s92
      %s94 = sphi 0, %s92
      %s95 = sphi 0, %s94
      %s109 = sphi 0, %s95
      %s113 = sphi 0, %s113
      %s115 = sphi 0, %s113
      %s116 = sphi 0, %s115
      %s130 = sphi 0, %s116
      %s134 = sphi 0, %s134
      %s136 = sphi 0, %s134
      %s137 = sphi 0, %s136
      %s151 = sphi 0, %s137
      %s157 = sphi 0, %s159
      %s160 = sphi 0, %s157
      %s161 = sphi 0, %s160
      %s177 = sphi 0, %s161
      %s183 = sphi 0, %s185
      %s186 = sphi 0, %s183
      %s187 = sphi 0, %s186
      %s203 = sphi 0, %s187
    $region4: #{tpu_custom_call.1} parent=1 // loop_header_branch
      %19 = sbr.rel (%p17) target = $region8
    $region5: #{tpu_custom_call.1} parent=1 // loop_body
      %s21 = ssub.s32 %s16, 1
      %s22 = ssub.s32 %s16, 2
      %s23 = sadd.s32 %s16, 1
      %s24 = ssub.s32 %s16, %s23
      %p25 = scmp.eq.s32.totalorder %s24, 0
      %s27 = sadd.s32 %s26, 1
      %s28 = scalar_select %p25, %s26, %s27
      %p31 = pneg %p25
      %p32 = scmp.eq.s32.totalorder %s16, 1
      %p33 = por %p31, %p32
      %p34 = scmp.ne.s32.totalorder %s26, %s29
      %p35 = scmp.eq.s32.totalorder %s16, 0
      %p36 = por %p34, %p35
      %p37 = scmp.ne.s32.totalorder %s26, %s29
      %p38 = scmp.eq.s32.totalorder %s21, 1
      %p39 = por %p37, %p38
      %p40 = scmp.ne.s32.totalorder %s29, %s30
      %p41 = scmp.eq.s32.totalorder %s21, 0
      %p42 = por %p40, %p41
      %p43 = scmp.ne.s32.totalorder %s29, %s30
      %p44 = scmp.eq.s32.totalorder %s22, 1
      %p45 = por %p43, %p44
      %p47 = scmp.ne.s32.totalorder %s30, %s46
      %p48 = scmp.eq.s32.totalorder %s22, 0
      %p49 = por %p47, %p48
      %s51 = sadd.s32 %s50, 1
      %p54 = scmp.eq.s32.totalorder %s16, 1
      %p55 = scmp.ne.s32.totalorder %s50, %s52
      %p56 = scmp.eq.s32.totalorder %s16, 0
      %p57 = por %p55, %p56
      %p58 = scmp.ne.s32.totalorder %s50, %s52
      %p59 = scmp.eq.s32.totalorder %s21, 1
      %p60 = por %p58, %p59
      %p61 = scmp.ne.s32.totalorder %s52, %s53
      %p62 = scmp.eq.s32.totalorder %s21, 0
      %p63 = por %p61, %p62
      %p64 = scmp.ne.s32.totalorder %s52, %s53
      %p65 = scmp.eq.s32.totalorder %s22, 1
      %p66 = por %p64, %p65
      %p68 = scmp.ne.s32.totalorder %s53, %s67
      %p69 = scmp.eq.s32.totalorder %s22, 0
      %p70 = por %p68, %p69
      %s72 = sadd.s32 %s71, 1
      %p75 = scmp.eq.s32.totalorder %s16, 1
      %p76 = scmp.ne.s32.totalorder %s71, %s73
      %p77 = scmp.eq.s32.totalorder %s16, 0
      %p78 = por %p76, %p77
      %p79 = scmp.ne.s32.totalorder %s71, %s73
      %p80 = scmp.eq.s32.totalorder %s21, 1
      %p81 = por %p79, %p80
      %p82 = scmp.ne.s32.totalorder %s73, %s74
      %p83 = scmp.eq.s32.totalorder %s21, 0
      %p84 = por %p82, %p83
      %p85 = scmp.ne.s32.totalorder %s73, %s74
      %p86 = scmp.eq.s32.totalorder %s22, 1
      %p87 = por %p85, %p86
      %p89 = scmp.ne.s32.totalorder %s74, %s88
      %p90 = scmp.eq.s32.totalorder %s22, 0
      %p91 = por %p89, %p90
      %s93 = sadd.s32 %s92, 1
      %p96 = scmp.eq.s32.totalorder %s16, 1
      %p97 = scmp.ne.s32.totalorder %s92, %s94
      %p98 = scmp.eq.s32.totalorder %s16, 0
      %p99 = por %p97, %p98
      %p100 = scmp.ne.s32.totalorder %s92, %s94
      %p101 = scmp.eq.s32.totalorder %s21, 1
      %p102 = por %p100, %p101
      %p103 = scmp.ne.s32.totalorder %s94, %s95
      %p104 = scmp.eq.s32.totalorder %s21, 0
      %p105 = por %p103, %p104
      %p106 = scmp.ne.s32.totalorder %s94, %s95
      %p107 = scmp.eq.s32.totalorder %s22, 1
      %p108 = por %p106, %p107
      %p110 = scmp.ne.s32.totalorder %s95, %s109
      %p111 = scmp.eq.s32.totalorder %s22, 0
      %p112 = por %p110, %p111
      %s114 = sadd.s32 %s113, 1
      %p117 = scmp.eq.s32.totalorder %s16, 1
      %p118 = scmp.ne.s32.totalorder %s113, %s115
      %p119 = scmp.eq.s32.totalorder %s16, 0
      %p120 = por %p118, %p119
      %p121 = scmp.ne.s32.totalorder %s113, %s115
      %p122 = scmp.eq.s32.totalorder %s21, 1
      %p123 = por %p121, %p122
      %p124 = scmp.ne.s32.totalorder %s115, %s116
      %p125 = scmp.eq.s32.totalorder %s21, 0
      %p126 = por %p124, %p125
      %p127 = scmp.ne.s32.totalorder %s115, %s116
      %p128 = scmp.eq.s32.totalorder %s22, 1
      %p129 = por %p127, %p128
      %p131 = scmp.ne.s32.totalorder %s116, %s130
      %p132 = scmp.eq.s32.totalorder %s22, 0
      %p133 = por %p131, %p132
      %s135 = sadd.s32 %s134, 1
      %p138 = scmp.eq.s32.totalorder %s16, 1
      %p139 = scmp.ne.s32.totalorder %s134, %s136
      %p140 = scmp.eq.s32.totalorder %s16, 0
      %p141 = por %p139, %p140
      %p142 = scmp.ne.s32.totalorder %s134, %s136
      %p143 = scmp.eq.s32.totalorder %s21, 1
      %p144 = por %p142, %p143
      %p145 = scmp.ne.s32.totalorder %s136, %s137
      %p146 = scmp.eq.s32.totalorder %s21, 0
      %p147 = por %p145, %p146
      %p148 = scmp.ne.s32.totalorder %s136, %s137
      %p149 = scmp.eq.s32.totalorder %s22, 1
      %p150 = por %p148, %p149
      %p152 = scmp.ne.s32.totalorder %s137, %s151
      %p153 = scmp.eq.s32.totalorder %s22, 0
      %p154 = por %p152, %p153
      %s155 = ssub.s32 %s16, %s23
      %p156 = scmp.eq.s32.totalorder %s155, 0
      %s158 = sadd.s32 %s157, 1
      %s159 = scalar_select %p156, %s157, %s158
      %p162 = pneg %p156
      %p163 = scmp.eq.s32.totalorder %s16, 1
      %p164 = por %p162, %p163
      %p165 = scmp.ne.s32.totalorder %s157, %s160
      %p166 = scmp.eq.s32.totalorder %s16, 0
      %p167 = por %p165, %p166
      %p168 = scmp.ne.s32.totalorder %s157, %s160
      %p169 = scmp.eq.s32.totalorder %s21, 1
      %p170 = por %p168, %p169
      %p171 = scmp.ne.s32.totalorder %s160, %s161
      %p172 = scmp.eq.s32.totalorder %s21, 0
      %p173 = por %p171, %p172
      %p174 = scmp.ne.s32.totalorder %s160, %s161
      %p175 = scmp.eq.s32.totalorder %s22, 1
      %p176 = por %p174, %p175
      %p178 = scmp.ne.s32.totalorder %s161, %s177
      %p179 = scmp.eq.s32.totalorder %s22, 0
      %p180 = por %p178, %p179
      %s181 = ssub.s32 %s16, %s23
      %p182 = scmp.eq.s32.totalorder %s181, 0
      %s184 = sadd.s32 %s183, 1
      %s185 = scalar_select %p182, %s183, %s184
      %p188 = pneg %p182
      %p189 = scmp.eq.s32.totalorder %s16, 1
      %p190 = por %p188, %p189
      %p191 = scmp.ne.s32.totalorder %s183, %s186
      %p192 = scmp.eq.s32.totalorder %s16, 0
      %p193 = por %p191, %p192
      %p194 = scmp.ne.s32.totalorder %s183, %s186
      %p195 = scmp.eq.s32.totalorder %s21, 1
      %p196 = por %p194, %p195
      %p197 = scmp.ne.s32.totalorder %s186, %s187
      %p198 = scmp.eq.s32.totalorder %s21, 0
      %p199 = por %p197, %p198
      %p200 = scmp.ne.s32.totalorder %s186, %s187
      %p201 = scmp.eq.s32.totalorder %s22, 1
      %p202 = por %p200, %p201
      %p204 = scmp.ne.s32.totalorder %s187, %s203
      %p205 = scmp.eq.s32.totalorder %s22, 0
      %p206 = por %p204, %p205
      %p207 = scmp.le.s32.totalorder 1, %s16
      %p208 = scmp.lt.s32.totalorder %s16, 3
      %p209 = pnand %p207, %p208
      %p210 = pneg %p209
      // Predicated region
      $region9: #{tpu_custom_call.1} parent=5 // pred_check
        _
      $region10: #{tpu_custom_call.1} parent=5 // pred_check_branch
        %212 = sbr.rel (%p209) target = $region12
      $region11: #{tpu_custom_call.1} parent=5 // pred_region
        %s213 = ssub.s32 %s16, 1
        // Predicated region
        $region13: #{tpu_custom_call.1} parent=11 // pred_check
          %p214 = pneg %p63
        $region14: #{tpu_custom_call.1} parent=11 // pred_check_branch
          %216 = sbr.rel (%p214) target = $region16
        $region15: #{tpu_custom_call.1} parent=11 // pred_region
          _
        $region16: #{tpu_custom_call.1} parent=11 // pred_fallthru
          _
        // Predicated region
        $region17: #{tpu_custom_call.1} parent=11 // pred_check
          %p217 = pneg %p84
        $region18: #{tpu_custom_call.1} parent=11 // pred_check_branch
          %219 = sbr.rel (%p217) target = $region20
        $region19: #{tpu_custom_call.1} parent=11 // pred_region
          _
        $region20: #{tpu_custom_call.1} parent=11 // pred_fallthru
          _
        // Predicated region
        $region21: #{tpu_custom_call.1} parent=11 // pred_check
          %p220 = pneg %p105
        $region22: #{tpu_custom_call.1} parent=11 // pred_check_branch
          %222 = sbr.rel (%p220) target = $region24
        $region23: #{tpu_custom_call.1} parent=11 // pred_region
          _
        $region24: #{tpu_custom_call.1} parent=11 // pred_fallthru
          _
        // Predicated region
        $region25: #{tpu_custom_call.1} parent=11 // pred_check
          %p223 = pneg %p126
        $region26: #{tpu_custom_call.1} parent=11 // pred_check_branch
          %225 = sbr.rel (%p223) target = $region28
        $region27: #{tpu_custom_call.1} parent=11 // pred_region
          _
        $region28: #{tpu_custom_call.1} parent=11 // pred_fallthru
          _
        // Predicated region
        $region29: #{tpu_custom_call.1} parent=11 // pred_check
          %p226 = pneg %p147
        $region30: #{tpu_custom_call.1} parent=11 // pred_check_branch
          %228 = sbr.rel (%p226) target = $region32
        $region31: #{tpu_custom_call.1} parent=11 // pred_region
          _
        $region32: #{tpu_custom_call.1} parent=11 // pred_fallthru
          _
      $region12: #{tpu_custom_call.1} parent=5 // pred_fallthru
        _
      %p229 = scmp.lt.s32.totalorder %s16, 2
      // Predicated region
      $region33: #{tpu_custom_call.1} parent=5 // pred_check
        %p230 = pneg %p229
      $region34: #{tpu_custom_call.1} parent=5 // pred_check_branch
        %232 = sbr.rel (%p230) target = $region36
      $region35: #{tpu_custom_call.1} parent=5 // pred_region
        // Predicated region
        $region37: #{tpu_custom_call.1} parent=35 // pred_check
          %p233 = pneg %p36
        $region38: #{tpu_custom_call.1} parent=35 // pred_check_branch
          %235 = sbr.rel (%p233) target = $region40
        $region39: #{tpu_custom_call.1} parent=35 // pred_region
          %s236 = smul.u32 16, %s16
          %p237 = scmp.lt.s32.totalorder %s236, 31
          %s238 = scalar_select %p237, %s236, 31
          %s239 = smul.addr %s238, 8
          %s240 = scalar_lea.vmem %s0, %s239
          %s241 = smul.u32 16, %s16
        $region40: #{tpu_custom_call.1} parent=35 // pred_fallthru
          _
        // Predicated region
        $region41: #{tpu_custom_call.1} parent=35 // pred_check
          %p242 = pneg %p167
        $region42: #{tpu_custom_call.1} parent=35 // pred_check_branch
          %244 = sbr.rel (%p242) target = $region44
        $region43: #{tpu_custom_call.1} parent=35 // pred_region
          %s245 = smul.u32 16, %s16
          %p246 = scmp.lt.s32.totalorder %s245, 31
          %s247 = scalar_select %p246, %s245, 31
          %s248 = smul.addr %s247, 8
          %s249 = scalar_lea.vmem %s6, %s248
          %s250 = smul.u32 16, %s16
        $region44: #{tpu_custom_call.1} parent=35 // pred_fallthru
          _
      $region36: #{tpu_custom_call.1} parent=5 // pred_fallthru
        _
      %p251 = scmp.le.s32.totalorder 1, %s16
      %p252 = scmp.lt.s32.totalorder %s16, 3
      %p253 = pnand %p251, %p252
      %p254 = pneg %p253
      // Predicated region
      $region45: #{tpu_custom_call.1} parent=5 // pred_check
        _
      $region46: #{tpu_custom_call.1} parent=5 // pred_check_branch
        %256 = sbr.rel (%p253) target = $region48
      $region47: #{tpu_custom_call.1} parent=5 // pred_region
        %s257 = ssub.s32 %s16, 1
        %s258 = smul.u32 16, %s21
        %p259 = scmp.lt.s32.totalorder %s258, 31
        %s260 = scalar_select %p259, %s258, 31
        %s261 = smul.addr %s260, 8
        %s262 = scalar_lea.vmem %s0, %s261
        %p263 = pneg %p42
        %p264 = pneg %p39
        %p265 = pneg %p63
        %p266 = pneg %p60
        %p267 = pneg %p84
        %p268 = pneg %p81
        %p269 = pneg %p105
        %p270 = pneg %p102
        %p271 = pneg %p126
        %p272 = pneg %p123
        %p273 = pneg %p147
        %p274 = pneg %p144
        %s275 = smul.u32 16, %s21
        %p276 = scmp.lt.s32.totalorder %s275, 31
        %s277 = scalar_select %p276, %s275, 31
        %s278 = smul.addr %s277, 8
        %s279 = scalar_lea.vmem %s6, %s278
        %p280 = pneg %p173
        %p281 = pneg %p170
        %p282 = pneg %p199
        %p283 = pneg %p196
        %s284 = sand.u32 %s186, 1
        %s285 = scalar_lea.sflag [#allocation3], %s284
        %s286 = sand.u32 %s186, 1
        %s287 = smul.addr %s286, 512
        %s288 = scalar_lea.vmem [#allocation2], %s287
        %s289 = smul.u32 16, %s21
        %p290 = scmp.lt.s32.totalorder %s289, 31
        %s291 = scalar_select %p290, %s289, 31
        %s292 = smul.addr %s291, 8
        %s293 = scalar_lea.vmem %s0, %s292
        %s294 = smul.u32 16, %s21
        %s295 = smul.u32 16, %s21
        %p296 = scmp.lt.s32.totalorder %s295, 31
        %s297 = scalar_select %p296, %s295, 31
        %s298 = smul.addr %s297, 8
        %s299 = scalar_lea.vmem %s6, %s298
        %s300 = smul.u32 16, %s21
        %s301 = smul.u32 16, %s21
        %v302 = vld [vmem:[%s293] sm:$0xff]
        %v303 = vld [vmem:[%s293 + $0x8] sm:$0xff]
        %v304 = vld [vmem:[%s293 + $0x10] sm:$0xff]
        %v305 = vld [vmem:[%s293 + $0x18] sm:$0xff]
        %v306 = vld [vmem:[%s293 + $0x20] sm:$0xff]
        %v307 = vld [vmem:[%s293 + $0x28] sm:$0xff]
        %v308 = vld [vmem:[%s293 + $0x30] sm:$0xff]
        %v309 = vld [vmem:[%s293 + $0x38] sm:$0xff]
        %v310 = vld [vmem:[%s293 + $0x40] sm:$0xff]
        %v311 = vld [vmem:[%s293 + $0x48] sm:$0xff]
        %v312 = vld [vmem:[%s293 + $0x50] sm:$0xff]
        %v313 = vld [vmem:[%s293 + $0x58] sm:$0xff]
        %v314 = vld [vmem:[%s293 + $0x60] sm:$0xff]
        %v315 = vld [vmem:[%s293 + $0x68] sm:$0xff]
        %v316 = vld [vmem:[%s293 + $0x70] sm:$0xff]
        %v317 = vld [vmem:[%s293 + $0x78] sm:$0xff]
        %v318 = vmul.f32 %v302, %v302
        %v319 = vmul.f32 %v303, %v303
        %v320 = vmul.f32 %v304, %v304
        %v321 = vmul.f32 %v305, %v305
        %v322 = vmul.f32 %v306, %v306
        %v323 = vmul.f32 %v307, %v307
        %v324 = vmul.f32 %v308, %v308
        %v325 = vmul.f32 %v309, %v309
        %v326 = vmul.f32 %v310, %v310
        %v327 = vmul.f32 %v311, %v311
        %v328 = vmul.f32 %v312, %v312
        %v329 = vmul.f32 %v313, %v313
        %v330 = vmul.f32 %v314, %v314
        %v331 = vmul.f32 %v315, %v315
        %v332 = vmul.f32 %v316, %v316
        %v333 = vmul.f32 %v317, %v317
        %vm334 = vcmask 261120
        %v335 = vsel %vm334, %v318, 0.0
        %336 = vadd.xlane.f32.xlu0 %v335
        %v337 = vpop.xlane.xlu0 %336
        %v338 = vsel %vm334, %v319, 0.0
        %339 = vadd.xlane.f32.xlu0 %v338
        %v340 = vpop.xlane.xlu0 %339
        %v341 = vsel %vm334, %v320, 0.0
        %342 = vadd.xlane.f32.xlu0 %v341
        %v343 = vpop.xlane.xlu0 %342
        %v344 = vsel %vm334, %v321, 0.0
        %345 = vadd.xlane.f32.xlu0 %v344
        %v346 = vpop.xlane.xlu0 %345
        %v347 = vsel %vm334, %v322, 0.0
        %348 = vadd.xlane.f32.xlu0 %v347
        %v349 = vpop.xlane.xlu0 %348
        %v350 = vsel %vm334, %v323, 0.0
        %351 = vadd.xlane.f32.xlu0 %v350
        %v352 = vpop.xlane.xlu0 %351
        %v353 = vsel %vm334, %v324, 0.0
        %354 = vadd.xlane.f32.xlu0 %v353
        %v355 = vpop.xlane.xlu0 %354
        %v356 = vsel %vm334, %v325, 0.0
        %357 = vadd.xlane.f32.xlu0 %v356
        %v358 = vpop.xlane.xlu0 %357
        %v359 = vsel %vm334, %v326, 0.0
        %360 = vadd.xlane.f32.xlu0 %v359
        %v361 = vpop.xlane.xlu0 %360
        %v362 = vsel %vm334, %v327, 0.0
        %363 = vadd.xlane.f32.xlu0 %v362
        %v364 = vpop.xlane.xlu0 %363
        %v365 = vsel %vm334, %v328, 0.0
        %366 = vadd.xlane.f32.xlu0 %v365
        %v367 = vpop.xlane.xlu0 %366
        %v368 = vsel %vm334, %v329, 0.0
        %369 = vadd.xlane.f32.xlu0 %v368
        %v370 = vpop.xlane.xlu0 %369
        %v371 = vsel %vm334, %v330, 0.0
        %372 = vadd.xlane.f32.xlu0 %v371
        %v373 = vpop.xlane.xlu0 %372
        %v374 = vsel %vm334, %v331, 0.0
        %375 = vadd.xlane.f32.xlu0 %v374
        %v376 = vpop.xlane.xlu0 %375
        %v377 = vsel %vm334, %v332, 0.0
        %378 = vadd.xlane.f32.xlu0 %v377
        %v379 = vpop.xlane.xlu0 %378
        %v380 = vsel %vm334, %v333, 0.0
        %381 = vadd.xlane.f32.xlu0 %v380
        %v382 = vpop.xlane.xlu0 %381
        %v383 = vrsqrt.pop %v337
        %v384 = vmul.f32 %v337, %v383
        %vm385 = vcmp.eq.f32.partialorder %v337, inf
        %v386 = vsel %vm385, %v337, %v384
        %vm387 = vcmp.eq.f32.partialorder %v337, 0.0
        %v388 = vand.u32 %v337, 2147483648
        %v389 = vsel %vm387, %v388, %v386
        %v390 = vrsqrt.pop %v340
        %v391 = vmul.f32 %v340, %v390
        %vm392 = vcmp.eq.f32.partialorder %v340, inf
        %v393 = vsel %vm392, %v340, %v391
        %vm394 = vcmp.eq.f32.partialorder %v340, 0.0
        %v395 = vand.u32 %v340, 2147483648
        %v396 = vsel %vm394, %v395, %v393
        %v397 = vrsqrt.pop %v343
        %v398 = vmul.f32 %v343, %v397
        %vm399 = vcmp.eq.f32.partialorder %v343, inf
        %v400 = vsel %vm399, %v343, %v398
        %vm401 = vcmp.eq.f32.partialorder %v343, 0.0
        %v402 = vand.u32 %v343, 2147483648
        %v403 = vsel %vm401, %v402, %v400
        %v404 = vrsqrt.pop %v346
        %v405 = vmul.f32 %v346, %v404
        %vm406 = vcmp.eq.f32.partialorder %v346, inf
        %v407 = vsel %vm406, %v346, %v405
        %vm408 = vcmp.eq.f32.partialorder %v346, 0.0
        %v409 = vand.u32 %v346, 2147483648
        %v410 = vsel %vm408, %v409, %v407
        %v411 = vrsqrt.pop %v349
        %v412 = vmul.f32 %v349, %v411
        %vm413 = vcmp.eq.f32.partialorder %v349, inf
        %v414 = vsel %vm413, %v349, %v412
        %vm415 = vcmp.eq.f32.partialorder %v349, 0.0
        %v416 = vand.u32 %v349, 2147483648
        %v417 = vsel %vm415, %v416, %v414
        %v418 = vrsqrt.pop %v352
        %v419 = vmul.f32 %v352, %v418
        %vm420 = vcmp.eq.f32.partialorder %v352, inf
        %v421 = vsel %vm420, %v352, %v419
        %vm422 = vcmp.eq.f32.partialorder %v352, 0.0
        %v423 = vand.u32 %v352, 2147483648
        %v424 = vsel %vm422, %v423, %v421
        %v425 = vrsqrt.pop %v355
        %v426 = vmul.f32 %v355, %v425
        %vm427 = vcmp.eq.f32.partialorder %v355, inf
        %v428 = vsel %vm427, %v355, %v426
        %vm429 = vcmp.eq.f32.partialorder %v355, 0.0
        %v430 = vand.u32 %v355, 2147483648
        %v431 = vsel %vm429, %v430, %v428
        %v432 = vrsqrt.pop %v358
        %v433 = vmul.f32 %v358, %v432
        %vm434 = vcmp.eq.f32.partialorder %v358, inf
        %v435 = vsel %vm434, %v358, %v433
        %vm436 = vcmp.eq.f32.partialorder %v358, 0.0
        %v437 = vand.u32 %v358, 2147483648
        %v438 = vsel %vm436, %v437, %v435
        %v439 = vrsqrt.pop %v361
        %v440 = vmul.f32 %v361, %v439
        %vm441 = vcmp.eq.f32.partialorder %v361, inf
        %v442 = vsel %vm441, %v361, %v440
        %vm443 = vcmp.eq.f32.partialorder %v361, 0.0
        %v444 = vand.u32 %v361, 2147483648
        %v445 = vsel %vm443, %v444, %v442
        %v446 = vrsqrt.pop %v364
        %v447 = vmul.f32 %v364, %v446
        %vm448 = vcmp.eq.f32.partialorder %v364, inf
        %v449 = vsel %vm448, %v364, %v447
        %vm450 = vcmp.eq.f32.partialorder %v364, 0.0
        %v451 = vand.u32 %v364, 2147483648
        %v452 = vsel %vm450, %v451, %v449
        %v453 = vrsqrt.pop %v367
        %v454 = vmul.f32 %v367, %v453
        %vm455 = vcmp.eq.f32.partialorder %v367, inf
        %v456 = vsel %vm455, %v367, %v454
        %vm457 = vcmp.eq.f32.partialorder %v367, 0.0
        %v458 = vand.u32 %v367, 2147483648
        %v459 = vsel %vm457, %v458, %v456
        %v460 = vrsqrt.pop %v370
        %v461 = vmul.f32 %v370, %v460
        %vm462 = vcmp.eq.f32.partialorder %v370, inf
        %v463 = vsel %vm462, %v370, %v461
        %vm464 = vcmp.eq.f32.partialorder %v370, 0.0
        %v465 = vand.u32 %v370, 2147483648
        %v466 = vsel %vm464, %v465, %v463
        %v467 = vrsqrt.pop %v373
        %v468 = vmul.f32 %v373, %v467
        %vm469 = vcmp.eq.f32.partialorder %v373, inf
        %v470 = vsel %vm469, %v373, %v468
        %vm471 = vcmp.eq.f32.partialorder %v373, 0.0
        %v472 = vand.u32 %v373, 2147483648
        %v473 = vsel %vm471, %v472, %v470
        %v474 = vrsqrt.pop %v376
        %v475 = vmul.f32 %v376, %v474
        %vm476 = vcmp.eq.f32.partialorder %v376, inf
        %v477 = vsel %vm476, %v376, %v475
        %vm478 = vcmp.eq.f32.partialorder %v376, 0.0
        %v479 = vand.u32 %v376, 2147483648
        %v480 = vsel %vm478, %v479, %v477
        %v481 = vrsqrt.pop %v379
        %v482 = vmul.f32 %v379, %v481
        %vm483 = vcmp.eq.f32.partialorder %v379, inf
        %v484 = vsel %vm483, %v379, %v482
        %vm485 = vcmp.eq.f32.partialorder %v379, 0.0
        %v486 = vand.u32 %v379, 2147483648
        %v487 = vsel %vm485, %v486, %v484
        %v488 = vrsqrt.pop %v382
        %v489 = vmul.f32 %v382, %v488
        %vm490 = vcmp.eq.f32.partialorder %v382, inf
        %v491 = vsel %vm490, %v382, %v489
        %vm492 = vcmp.eq.f32.partialorder %v382, 0.0
        %v493 = vand.u32 %v382, 2147483648
        %v494 = vsel %vm492, %v493, %v491
        %v495 = vmax.f32 %v389, 1e-12
        %v496 = vmax.f32 %v396, 1e-12
        %v497 = vmax.f32 %v403, 1e-12
        %v498 = vmax.f32 %v410, 1e-12
        %v499 = vmax.f32 %v417, 1e-12
        %v500 = vmax.f32 %v424, 1e-12
        %v501 = vmax.f32 %v431, 1e-12
        %v502 = vmax.f32 %v438, 1e-12
        %v503 = vmax.f32 %v445, 1e-12
        %v504 = vmax.f32 %v452, 1e-12
        %v505 = vmax.f32 %v459, 1e-12
        %v506 = vmax.f32 %v466, 1e-12
        %v507 = vmax.f32 %v473, 1e-12
        %v508 = vmax.f32 %v480, 1e-12
        %v509 = vmax.f32 %v487, 1e-12
        %v510 = vmax.f32 %v494, 1e-12
        %v511 = vrcp.pop %v495
        %v512 = vmul.f32 1.0, %v511
        %v513 = vrcp.pop %v496
        %v514 = vmul.f32 1.0, %v513
        %v515 = vrcp.pop %v497
        %v516 = vmul.f32 1.0, %v515
        %v517 = vrcp.pop %v498
        %v518 = vmul.f32 1.0, %v517
        %v519 = vrcp.pop %v499
        %v520 = vmul.f32 1.0, %v519
        %v521 = vrcp.pop %v500
        %v522 = vmul.f32 1.0, %v521
        %v523 = vrcp.pop %v501
        %v524 = vmul.f32 1.0, %v523
        %v525 = vrcp.pop %v502
        %v526 = vmul.f32 1.0, %v525
        %v527 = vrcp.pop %v503
        %v528 = vmul.f32 1.0, %v527
        %v529 = vrcp.pop %v504
        %v530 = vmul.f32 1.0, %v529
        %v531 = vrcp.pop %v505
        %v532 = vmul.f32 1.0, %v531
        %v533 = vrcp.pop %v506
        %v534 = vmul.f32 1.0, %v533
        %v535 = vrcp.pop %v507
        %v536 = vmul.f32 1.0, %v535
        %v537 = vrcp.pop %v508
        %v538 = vmul.f32 1.0, %v537
        %v539 = vrcp.pop %v509
        %v540 = vmul.f32 1.0, %v539
        %v541 = vrcp.pop %v510
        %v542 = vmul.f32 1.0, %v541
        %v543 = vmul.f32 %v302, %v512
        %v544 = vmul.f32 %v303, %v514
        %v545 = vmul.f32 %v304, %v516
        %v546 = vmul.f32 %v305, %v518
        %v547 = vmul.f32 %v306, %v520
        %v548 = vmul.f32 %v307, %v522
        %v549 = vmul.f32 %v308, %v524
        %v550 = vmul.f32 %v309, %v526
        %v551 = vmul.f32 %v310, %v528
        %v552 = vmul.f32 %v311, %v530
        %v553 = vmul.f32 %v312, %v532
        %v554 = vmul.f32 %v313, %v534
        %v555 = vmul.f32 %v314, %v536
        %v556 = vmul.f32 %v315, %v538
        %v557 = vmul.f32 %v316, %v540
        %v558 = vmul.f32 %v317, %v542
        %v559 = vld [vmem:[%s1] sm:$0xff]
        %v560 = vld [vmem:[%s1 + $0x8] sm:$0xff]
        %v561 = vld [vmem:[%s1 + $0x10] sm:$0xff]
        %v562 = vld [vmem:[%s1 + $0x18] sm:$0xff]
        %v563 = vld [vmem:[%s2] sm:$0x1]
        %v565 = vlaneseq
        %v566 = vshrl.u32 %v565, 7
        %v567 = vsub.s32 0, %v566
        %v568 = vrot.slane %v563, %v567
        %v571 = vsel %vm334, %v543, 0
        %v574 = vsel %vm334, %v544, 0
        %v577 = vsel %vm334, %v545, 0
        %v580 = vsel %vm334, %v546, 0
        %v583 = vsel %vm334, %v547, 0
        %v586 = vsel %vm334, %v548, 0
        %v589 = vsel %vm334, %v549, 0
        %v592 = vsel %vm334, %v550, 0
        %v595 = vsel %vm334, %v551, 0
        %v598 = vsel %vm334, %v552, 0
        %v601 = vsel %vm334, %v553, 0
        %v604 = vsel %vm334, %v554, 0
        %v607 = vsel %vm334, %v555, 0
        %v610 = vsel %vm334, %v556, 0
        %v613 = vsel %vm334, %v557, 0
        %v616 = vsel %vm334, %v558, 0
        %618 = vmatprep.subr.mxu0 0.0
        %619 = vmatpush1.msra.mxu0 %v559
        %620 = vmatprep.subr.mxu0 0.0
        %621 = vmatpush1.msra.mxu0 %v560
        %622 = vmatprep.subr.mxu0 0.0
        %623 = vmatpush1.msra.mxu0 %v561
        %624 = vmatprep.subr.mxu0 0.0
        %625 = vmatpush1.msra.mxu0 %v562
        %626 = vmatprep.subr.mxu0 0.0
        %627 = vmatpush1.msra.mxu0 0.0
        %628 = vmatprep.subr.mxu0 0.0
        %629 = vmatpush1.msra.mxu0 0.0
        %630 = vmatprep.subr.mxu0 0.0
        %631 = vmatpush1.msra.mxu0 0.0
        %632 = vmatprep.subr.mxu0 0.0
        %633 = vmatpush1.msra.mxu0 0.0
        %634 = vmatprep.subr.mxu0 0.0
        %635 = vmatpush1.msra.mxu0 0.0
        %636 = vmatprep.subr.mxu0 0.0
        %637 = vmatpush1.msra.mxu0 0.0
        %638 = vmatprep.subr.mxu0 0.0
        %639 = vmatpush1.msra.mxu0 0.0
        %640 = vmatprep.subr.mxu0 0.0
        %641 = vmatpush1.msra.mxu0 0.0
        %642 = vmatprep.subr.mxu0 0.0
        %643 = vmatpush1.msra.mxu0 0.0
        %644 = vmatprep.subr.mxu0 0.0
        %645 = vmatpush1.msra.mxu0 0.0
        %646 = vmatprep.subr.mxu0 0.0
        %647 = vmatpush1.msra.mxu0 0.0
        %648 = vmatprep.subr.mxu0 0.0
        %649 = vmatpush1.msra.mxu0 0.0
        %650 = vmatprep.subr.mxu0 0.0
        %651 = vmatpush1.msra.mxu0 0.0
        %652 = vmatprep.subr.mxu0 0.0
        %653 = vmatpush1.msra.mxu0 0.0
        %654 = vmatprep.subr.mxu0 0.0
        %655 = vmatpush1.msra.mxu0 0.0
        %656 = vmatprep.subr.mxu0 0.0
        %657 = vmatpush1.msra.mxu0 0.0
        %658 = vmatprep.subr.mxu0 0.0
        %659 = vmatpush1.msra.mxu0 0.0
        %660 = vmatprep.subr.mxu0 0.0
        %661 = vmatpush1.msra.mxu0 0.0
        %662 = vmatprep.subr.mxu0 0.0
        %663 = vmatpush1.msra.mxu0 0.0
        %664 = vmatprep.subr.mxu0 0.0
        %665 = vmatpush1.msra.mxu0 0.0
        %666 = vmatprep.subr.mxu0 0.0
        %667 = vmatpush1.msra.mxu0 0.0
        %668 = vmatprep.subr.mxu0 0.0
        %669 = vmatpush1.msra.mxu0 0.0
        %670 = vmatprep.subr.mxu0 0.0
        %671 = vmatpush1.msra.mxu0 0.0
        %672 = vmatprep.subr.mxu0 0.0
        %673 = vmatpush1.msra.mxu0 0.0
        %674 = vmatprep.subr.mxu0 0.0
        %675 = vmatpush1.msra.mxu0 0.0
        %676 = vmatprep.subr.mxu0 0.0
        %677 = vmatpush1.msra.mxu0 0.0
        %678 = vmatprep.subr.mxu0 0.0
        %679 = vmatpush1.msra.mxu0 0.0
        %680 = vmatprep.subr.mxu0 0.0
        %681 = vmatpush1.msra.mxu0 0.0
        %682 = vmatprep.mubr.f32.mxu0 0.0
        %683 = vmatmul.mubr.f32.gmra.mrb[0].mxu0 %v571
        %v684 = vpop.f32.mrb[0].mxu0
        %v685 = vadd.f32 %v568, %v684
        %v686 = vpop.f32.mrb[0].mxu0
        %687 = vmatprep.mubr.f32.mxu0 0.0
        %688 = vmatmul.mubr.f32.gmra.mrb[0].mxu0 %v574
        %v689 = vpop.f32.mrb[0].mxu0
        %v690 = vadd.f32 %v568, %v689
        %v691 = vpop.f32.mrb[0].mxu0
        %692 = vmatprep.mubr.f32.mxu0 0.0
        %693 = vmatmul.mubr.f32.gmra.mrb[0].mxu0 %v577
        %v694 = vpop.f32.mrb[0].mxu0
        %v695 = vadd.f32 %v568, %v694
        %v696 = vpop.f32.mrb[0].mxu0
        %697 = vmatprep.mubr.f32.mxu0 0.0
        %698 = vmatmul.mubr.f32.gmra.mrb[0].mxu0 %v580
        %v699 = vpop.f32.mrb[0].mxu0
        %v700 = vadd.f32 %v568, %v699
        %v701 = vpop.f32.mrb[0].mxu0
        %702 = vmatprep.mubr.f32.mxu0 0.0
        %703 = vmatmul.mubr.f32.gmra.mrb[0].mxu0 %v583
        %v704 = vpop.f32.mrb[0].mxu0
        %v705 = vadd.f32 %v568, %v704
        %v706 = vpop.f32.mrb[0].mxu0
        %707 = vmatprep.mubr.f32.mxu0 0.0
        %708 = vmatmul.mubr.f32.gmra.mrb[0].mxu0 %v586
        %v709 = vpop.f32.mrb[0].mxu0
        %v710 = vadd.f32 %v568, %v709
        %v711 = vpop.f32.mrb[0].mxu0
        %712 = vmatprep.mubr.f32.mxu0 0.0
        %713 = vmatmul.mubr.f32.gmra.mrb[0].mxu0 %v589
        %v714 = vpop.f32.mrb[0].mxu0
        %v715 = vadd.f32 %v568, %v714
        %v716 = vpop.f32.mrb[0].mxu0
        %717 = vmatprep.mubr.f32.mxu0 0.0
        %718 = vmatmul.mubr.f32.gmra.mrb[0].mxu0 %v592
        %v719 = vpop.f32.mrb[0].mxu0
        %v720 = vadd.f32 %v568, %v719
        %v721 = vpop.f32.mrb[0].mxu0
        %722 = vmatprep.mubr.f32.mxu0 0.0
        %723 = vmatmul.mubr.f32.gmra.mrb[0].mxu0 %v595
        %v724 = vpop.f32.mrb[0].mxu0
        %v725 = vadd.f32 %v568, %v724
        %v726 = vpop.f32.mrb[0].mxu0
        %727 = vmatprep.mubr.f32.mxu0 0.0
        %728 = vmatmul.mubr.f32.gmra.mrb[0].mxu0 %v598
        %v729 = vpop.f32.mrb[0].mxu0
        %v730 = vadd.f32 %v568, %v729
        %v731 = vpop.f32.mrb[0].mxu0
        %732 = vmatprep.mubr.f32.mxu0 0.0
        %733 = vmatmul.mubr.f32.gmra.mrb[0].mxu0 %v601
        %v734 = vpop.f32.mrb[0].mxu0
        %v735 = vadd.f32 %v568, %v734
        %v736 = vpop.f32.mrb[0].mxu0
        %737 = vmatprep.mubr.f32.mxu0 0.0
        %738 = vmatmul.mubr.f32.gmra.mrb[0].mxu0 %v604
        %v739 = vpop.f32.mrb[0].mxu0
        %v740 = vadd.f32 %v568, %v739
        %v741 = vpop.f32.mrb[0].mxu0
        %742 = vmatprep.mubr.f32.mxu0 0.0
        %743 = vmatmul.mubr.f32.gmra.mrb[0].mxu0 %v607
        %v744 = vpop.f32.mrb[0].mxu0
        %v745 = vadd.f32 %v568, %v744
        %v746 = vpop.f32.mrb[0].mxu0
        %747 = vmatprep.mubr.f32.mxu0 0.0
        %748 = vmatmul.mubr.f32.gmra.mrb[0].mxu0 %v610
        %v749 = vpop.f32.mrb[0].mxu0
        %v750 = vadd.f32 %v568, %v749
        %v751 = vpop.f32.mrb[0].mxu0
        %752 = vmatprep.mubr.f32.mxu0 0.0
        %753 = vmatmul.mubr.f32.gmra.mrb[0].mxu0 %v613
        %v754 = vpop.f32.mrb[0].mxu0
        %v755 = vadd.f32 %v568, %v754
        %v756 = vpop.f32.mrb[0].mxu0
        %757 = vmatprep.mubr.f32.mxu0 0.0
        %758 = vmatmul.mubr.f32.gmra.mrb[0].mxu0 %v616
        %v759 = vpop.f32.mrb[0].mxu0
        %v760 = vadd.f32 %v568, %v759
        %v761 = vpop.f32.mrb[0].mxu0
        %762 = vdwg.mxu0
        %vm763 = vcmask 130048
        %v764 = vsel %vm763, %v685, -inf
        %765 = vmax.xlane.f32.xlu0 %v764
        %v766 = vpop.xlane.xlu0 %765
        %v767 = vsel %vm763, %v690, -inf
        %768 = vmax.xlane.f32.xlu0 %v767
        %v769 = vpop.xlane.xlu0 %768
        %v770 = vsel %vm763, %v695, -inf
        %771 = vmax.xlane.f32.xlu0 %v770
        %v772 = vpop.xlane.xlu0 %771
        %v773 = vsel %vm763, %v700, -inf
        %774 = vmax.xlane.f32.xlu0 %v773
        %v775 = vpop.xlane.xlu0 %774
        %v776 = vsel %vm763, %v705, -inf
        %777 = vmax.xlane.f32.xlu0 %v776
        %v778 = vpop.xlane.xlu0 %777
        %v779 = vsel %vm763, %v710, -inf
        %780 = vmax.xlane.f32.xlu0 %v779
        %v781 = vpop.xlane.xlu0 %780
        %v782 = vsel %vm763, %v715, -inf
        %783 = vmax.xlane.f32.xlu0 %v782
        %v784 = vpop.xlane.xlu0 %783
        %v785 = vsel %vm763, %v720, -inf
        %786 = vmax.xlane.f32.xlu0 %v785
        %v787 = vpop.xlane.xlu0 %786
        %v788 = vsel %vm763, %v725, -inf
        %789 = vmax.xlane.f32.xlu0 %v788
        %v790 = vpop.xlane.xlu0 %789
        %v791 = vsel %vm763, %v730, -inf
        %792 = vmax.xlane.f32.xlu0 %v791
        %v793 = vpop.xlane.xlu0 %792
        %v794 = vsel %vm763, %v735, -inf
        %795 = vmax.xlane.f32.xlu0 %v794
        %v796 = vpop.xlane.xlu0 %795
        %v797 = vsel %vm763, %v740, -inf
        %798 = vmax.xlane.f32.xlu0 %v797
        %v799 = vpop.xlane.xlu0 %798
        %v800 = vsel %vm763, %v745, -inf
        %801 = vmax.xlane.f32.xlu0 %v800
        %v802 = vpop.xlane.xlu0 %801
        %v803 = vsel %vm763, %v750, -inf
        %804 = vmax.xlane.f32.xlu0 %v803
        %v805 = vpop.xlane.xlu0 %804
        %v806 = vsel %vm763, %v755, -inf
        %807 = vmax.xlane.f32.xlu0 %v806
        %v808 = vpop.xlane.xlu0 %807
        %v809 = vsel %vm763, %v760, -inf
        %810 = vmax.xlane.f32.xlu0 %v809
        %v811 = vpop.xlane.xlu0 %810
        %v812 = vsub.f32 %v685, %v766
        %v813 = vsub.f32 %v690, %v769
        %v814 = vsub.f32 %v695, %v772
        %v815 = vsub.f32 %v700, %v775
        %v816 = vsub.f32 %v705, %v778
        %v817 = vsub.f32 %v710, %v781
        %v818 = vsub.f32 %v715, %v784
        %v819 = vsub.f32 %v720, %v787
        %v820 = vsub.f32 %v725, %v790
        %v821 = vsub.f32 %v730, %v793
        %v822 = vsub.f32 %v735, %v796
        %v823 = vsub.f32 %v740, %v799
        %v824 = vsub.f32 %v745, %v802
        %v825 = vsub.f32 %v750, %v805
        %v826 = vsub.f32 %v755, %v808
        %v827 = vsub.f32 %v760, %v811
        %v828 = vmul.f32 %v812, 1.442695
        %v829 = vpow.pop %v828
        %v830 = vmul.f32 %v813, 1.442695
        %v831 = vpow.pop %v830
        %v832 = vmul.f32 %v814, 1.442695
        %v833 = vpow.pop %v832
        %v834 = vmul.f32 %v815, 1.442695
        %v835 = vpow.pop %v834
        %v836 = vmul.f32 %v816, 1.442695
        %v837 = vpow.pop %v836
        %v838 = vmul.f32 %v817, 1.442695
        %v839 = vpow.pop %v838
        %v840 = vmul.f32 %v818, 1.442695
        %v841 = vpow.pop %v840
        %v842 = vmul.f32 %v819, 1.442695
        %v843 = vpow.pop %v842
        %v844 = vmul.f32 %v820, 1.442695
        %v845 = vpow.pop %v844
        %v846 = vmul.f32 %v821, 1.442695
        %v847 = vpow.pop %v846
        %v848 = vmul.f32 %v822, 1.442695
        %v849 = vpow.pop %v848
        %v850 = vmul.f32 %v823, 1.442695
        %v851 = vpow.pop %v850
        %v852 = vmul.f32 %v824, 1.442695
        %v853 = vpow.pop %v852
        %v854 = vmul.f32 %v825, 1.442695
        %v855 = vpow.pop %v854
        %v856 = vmul.f32 %v826, 1.442695
        %v857 = vpow.pop %v856
        %v858 = vmul.f32 %v827, 1.442695
        %v859 = vpow.pop %v858
        %v860 = vsel %vm763, %v829, 0.0
        %861 = vadd.xlane.f32.xlu0 %v860
        %v862 = vpop.xlane.xlu0 %861
        %v863 = vsel %vm763, %v831, 0.0
        %864 = vadd.xlane.f32.xlu0 %v863
        %v865 = vpop.xlane.xlu0 %864
        %v866 = vsel %vm763, %v833, 0.0
        %867 = vadd.xlane.f32.xlu0 %v866
        %v868 = vpop.xlane.xlu0 %867
        %v869 = vsel %vm763, %v835, 0.0
        %870 = vadd.xlane.f32.xlu0 %v869
        %v871 = vpop.xlane.xlu0 %870
        %v872 = vsel %vm763, %v837, 0.0
        %873 = vadd.xlane.f32.xlu0 %v872
        %v874 = vpop.xlane.xlu0 %873
        %v875 = vsel %vm763, %v839, 0.0
        %876 = vadd.xlane.f32.xlu0 %v875
        %v877 = vpop.xlane.xlu0 %876
        %v878 = vsel %vm763, %v841, 0.0
        %879 = vadd.xlane.f32.xlu0 %v878
        %v880 = vpop.xlane.xlu0 %879
        %v881 = vsel %vm763, %v843, 0.0
        %882 = vadd.xlane.f32.xlu0 %v881
        %v883 = vpop.xlane.xlu0 %882
        %v884 = vsel %vm763, %v845, 0.0
        %885 = vadd.xlane.f32.xlu0 %v884
        %v886 = vpop.xlane.xlu0 %885
        %v887 = vsel %vm763, %v847, 0.0
        %888 = vadd.xlane.f32.xlu0 %v887
        %v889 = vpop.xlane.xlu0 %888
        %v890 = vsel %vm763, %v849, 0.0
        %891 = vadd.xlane.f32.xlu0 %v890
        %v892 = vpop.xlane.xlu0 %891
        %v893 = vsel %vm763, %v851, 0.0
        %894 = vadd.xlane.f32.xlu0 %v893
        %v895 = vpop.xlane.xlu0 %894
        %v896 = vsel %vm763, %v853, 0.0
        %897 = vadd.xlane.f32.xlu0 %v896
        %v898 = vpop.xlane.xlu0 %897
        %v899 = vsel %vm763, %v855, 0.0
        %900 = vadd.xlane.f32.xlu0 %v899
        %v901 = vpop.xlane.xlu0 %900
        %v902 = vsel %vm763, %v857, 0.0
        %903 = vadd.xlane.f32.xlu0 %v902
        %v904 = vpop.xlane.xlu0 %903
        %v905 = vsel %vm763, %v859, 0.0
        %906 = vadd.xlane.f32.xlu0 %v905
        %v907 = vpop.xlane.xlu0 %906
        %v908 = vrcp.pop %v862
        %v909 = vmul.f32 1.0, %v908
        %v910 = vrcp.pop %v865
        %v911 = vmul.f32 1.0, %v910
        %v912 = vrcp.pop %v868
        %v913 = vmul.f32 1.0, %v912
        %v914 = vrcp.pop %v871
        %v915 = vmul.f32 1.0, %v914
        %v916 = vrcp.pop %v874
        %v917 = vmul.f32 1.0, %v916
        %v918 = vrcp.pop %v877
        %v919 = vmul.f32 1.0, %v918
        %v920 = vrcp.pop %v880
        %v921 = vmul.f32 1.0, %v920
        %v922 = vrcp.pop %v883
        %v923 = vmul.f32 1.0, %v922
        %v924 = vrcp.pop %v886
        %v925 = vmul.f32 1.0, %v924
        %v926 = vrcp.pop %v889
        %v927 = vmul.f32 1.0, %v926
        %v928 = vrcp.pop %v892
        %v929 = vmul.f32 1.0, %v928
        %v930 = vrcp.pop %v895
        %v931 = vmul.f32 1.0, %v930
        %v932 = vrcp.pop %v898
        %v933 = vmul.f32 1.0, %v932
        %v934 = vrcp.pop %v901
        %v935 = vmul.f32 1.0, %v934
        %v936 = vrcp.pop %v904
        %v937 = vmul.f32 1.0, %v936
        %v938 = vrcp.pop %v907
        %v939 = vmul.f32 1.0, %v938
        %v940 = vmul.f32 %v829, %v909
        %v941 = vmul.f32 %v831, %v911
        %v942 = vmul.f32 %v833, %v913
        %v943 = vmul.f32 %v835, %v915
        %v944 = vmul.f32 %v837, %v917
        %v945 = vmul.f32 %v839, %v919
        %v946 = vmul.f32 %v841, %v921
        %v947 = vmul.f32 %v843, %v923
        %v948 = vmul.f32 %v845, %v925
        %v949 = vmul.f32 %v847, %v927
        %v950 = vmul.f32 %v849, %v929
        %v951 = vmul.f32 %v851, %v931
        %v952 = vmul.f32 %v853, %v933
        %v953 = vmul.f32 %v855, %v935
        %v954 = vmul.f32 %v857, %v937
        %v955 = vmul.f32 %v859, %v939
        %956 = vrot.lane.b32.xlu0 %v543, 32
        %v957 = vpop.permute.xlu0 %956
        %958 = vrot.lane.b32.xlu0 %v544, 32
        %v959 = vpop.permute.xlu0 %958
        %960 = vrot.lane.b32.xlu0 %v545, 32
        %v961 = vpop.permute.xlu0 %960
        %962 = vrot.lane.b32.xlu0 %v546, 32
        %v963 = vpop.permute.xlu0 %962
        %964 = vrot.lane.b32.xlu0 %v547, 32
        %v965 = vpop.permute.xlu0 %964
        %966 = vrot.lane.b32.xlu0 %v548, 32
        %v967 = vpop.permute.xlu0 %966
        %968 = vrot.lane.b32.xlu0 %v549, 32
        %v969 = vpop.permute.xlu0 %968
        %970 = vrot.lane.b32.xlu0 %v550, 32
        %v971 = vpop.permute.xlu0 %970
        %972 = vrot.lane.b32.xlu0 %v551, 32
        %v973 = vpop.permute.xlu0 %972
        %974 = vrot.lane.b32.xlu0 %v552, 32
        %v975 = vpop.permute.xlu0 %974
        %976 = vrot.lane.b32.xlu0 %v553, 32
        %v977 = vpop.permute.xlu0 %976
        %978 = vrot.lane.b32.xlu0 %v554, 32
        %v979 = vpop.permute.xlu0 %978
        %980 = vrot.lane.b32.xlu0 %v555, 32
        %v981 = vpop.permute.xlu0 %980
        %982 = vrot.lane.b32.xlu0 %v556, 32
        %v983 = vpop.permute.xlu0 %982
        %984 = vrot.lane.b32.xlu0 %v557, 32
        %v985 = vpop.permute.xlu0 %984
        %986 = vrot.lane.b32.xlu0 %v558, 32
        %v987 = vpop.permute.xlu0 %986
        %1004 = vrot.lane.b32.xlu0 %v543, 64
        %v1005 = vpop.permute.xlu0 %1004
        %1006 = vrot.lane.b32.xlu0 %v544, 64
        %v1007 = vpop.permute.xlu0 %1006
        %1008 = vrot.lane.b32.xlu0 %v545, 64
        %v1009 = vpop.permute.xlu0 %1008
        %1010 = vrot.lane.b32.xlu0 %v546, 64
        %v1011 = vpop.permute.xlu0 %1010
        %1012 = vrot.lane.b32.xlu0 %v547, 64
        %v1013 = vpop.permute.xlu0 %1012
        %1014 = vrot.lane.b32.xlu0 %v548, 64
        %v1015 = vpop.permute.xlu0 %1014
        %1016 = vrot.lane.b32.xlu0 %v549, 64
        %v1017 = vpop.permute.xlu0 %1016
        %1018 = vrot.lane.b32.xlu0 %v550, 64
        %v1019 = vpop.permute.xlu0 %1018
        %1020 = vrot.lane.b32.xlu0 %v551, 64
        %v1021 = vpop.permute.xlu0 %1020
        %1022 = vrot.lane.b32.xlu0 %v552, 64
        %v1023 = vpop.permute.xlu0 %1022
        %1024 = vrot.lane.b32.xlu0 %v553, 64
        %v1025 = vpop.permute.xlu0 %1024
        %1026 = vrot.lane.b32.xlu0 %v554, 64
        %v1027 = vpop.permute.xlu0 %1026
        %1028 = vrot.lane.b32.xlu0 %v555, 64
        %v1029 = vpop.permute.xlu0 %1028
        %1030 = vrot.lane.b32.xlu0 %v556, 64
        %v1031 = vpop.permute.xlu0 %1030
        %1032 = vrot.lane.b32.xlu0 %v557, 64
        %v1033 = vpop.permute.xlu0 %1032
        %1034 = vrot.lane.b32.xlu0 %v558, 64
        %v1035 = vpop.permute.xlu0 %1034
        %1052 = vrot.lane.b32.xlu0 %v543, 96
        %v1053 = vpop.permute.xlu0 %1052
        %1054 = vrot.lane.b32.xlu0 %v544, 96
        %v1055 = vpop.permute.xlu0 %1054
        %1056 = vrot.lane.b32.xlu0 %v545, 96
        %v1057 = vpop.permute.xlu0 %1056
        %1058 = vrot.lane.b32.xlu0 %v546, 96
        %v1059 = vpop.permute.xlu0 %1058
        %1060 = vrot.lane.b32.xlu0 %v547, 96
        %v1061 = vpop.permute.xlu0 %1060
        %1062 = vrot.lane.b32.xlu0 %v548, 96
        %v1063 = vpop.permute.xlu0 %1062
        %1064 = vrot.lane.b32.xlu0 %v549, 96
        %v1065 = vpop.permute.xlu0 %1064
        %1066 = vrot.lane.b32.xlu0 %v550, 96
        %v1067 = vpop.permute.xlu0 %1066
        %1068 = vrot.lane.b32.xlu0 %v551, 96
        %v1069 = vpop.permute.xlu0 %1068
        %1070 = vrot.lane.b32.xlu0 %v552, 96
        %v1071 = vpop.permute.xlu0 %1070
        %1072 = vrot.lane.b32.xlu0 %v553, 96
        %v1073 = vpop.permute.xlu0 %1072
        %1074 = vrot.lane.b32.xlu0 %v554, 96
        %v1075 = vpop.permute.xlu0 %1074
        %1076 = vrot.lane.b32.xlu0 %v555, 96
        %v1077 = vpop.permute.xlu0 %1076
        %1078 = vrot.lane.b32.xlu0 %v556, 96
        %v1079 = vpop.permute.xlu0 %1078
        %1080 = vrot.lane.b32.xlu0 %v557, 96
        %v1081 = vpop.permute.xlu0 %1080
        %1082 = vrot.lane.b32.xlu0 %v558, 96
        %v1083 = vpop.permute.xlu0 %1082
        %v1100 = vsel %vm334, %v543, %v957
        %v1101 = vsel %vm334, %v544, %v959
        %v1102 = vsel %vm334, %v545, %v961
        %v1103 = vsel %vm334, %v546, %v963
        %v1104 = vsel %vm334, %v547, %v965
        %v1105 = vsel %vm334, %v548, %v967
        %v1106 = vsel %vm334, %v549, %v969
        %v1107 = vsel %vm334, %v550, %v971
        %v1108 = vsel %vm334, %v551, %v973
        %v1109 = vsel %vm334, %v552, %v975
        %v1110 = vsel %vm334, %v553, %v977
        %v1111 = vsel %vm334, %v554, %v979
        %v1112 = vsel %vm334, %v555, %v981
        %v1113 = vsel %vm334, %v556, %v983
        %v1114 = vsel %vm334, %v557, %v985
        %v1115 = vsel %vm334, %v558, %v987
        %vm1116 = vcmask 523264
        %v1117 = vsel %vm1116, %v1100, %v1005
        %v1118 = vsel %vm1116, %v1101, %v1007
        %v1119 = vsel %vm1116, %v1102, %v1009
        %v1120 = vsel %vm1116, %v1103, %v1011
        %v1121 = vsel %vm1116, %v1104, %v1013
        %v1122 = vsel %vm1116, %v1105, %v1015
        %v1123 = vsel %vm1116, %v1106, %v1017
        %v1124 = vsel %vm1116, %v1107, %v1019
        %v1125 = vsel %vm1116, %v1108, %v1021
        %v1126 = vsel %vm1116, %v1109, %v1023
        %v1127 = vsel %vm1116, %v1110, %v1025
        %v1128 = vsel %vm1116, %v1111, %v1027
        %v1129 = vsel %vm1116, %v1112, %v1029
        %v1130 = vsel %vm1116, %v1113, %v1031
        %v1131 = vsel %vm1116, %v1114, %v1033
        %v1132 = vsel %vm1116, %v1115, %v1035
        %vm1133 = vcmask 785408
        %v1134 = vsel %vm1133, %v1117, %v1053
        %v1135 = vsel %vm1133, %v1118, %v1055
        %v1136 = vsel %vm1133, %v1119, %v1057
        %v1137 = vsel %vm1133, %v1120, %v1059
        %v1138 = vsel %vm1133, %v1121, %v1061
        %v1139 = vsel %vm1133, %v1122, %v1063
        %v1140 = vsel %vm1133, %v1123, %v1065
        %v1141 = vsel %vm1133, %v1124, %v1067
        %v1142 = vsel %vm1133, %v1125, %v1069
        %v1143 = vsel %vm1133, %v1126, %v1071
        %v1144 = vsel %vm1133, %v1127, %v1073
        %v1145 = vsel %vm1133, %v1128, %v1075
        %v1146 = vsel %vm1133, %v1129, %v1077
        %v1147 = vsel %vm1133, %v1130, %v1079
        %v1148 = vsel %vm1133, %v1131, %v1081
        %v1149 = vsel %vm1133, %v1132, %v1083
        %v1150 = vld [vmem:[%s4] sm:$0xff]
        %v1151 = vld [vmem:[%s4 + $0x8] sm:$0xff]
        %v1152 = vld [vmem:[%s4 + $0x10] sm:$0xff]
        %v1153 = vld [vmem:[%s4 + $0x18] sm:$0xff]
        %v1154 = vld [vmem:[%s4 + $0x20] sm:$0xff]
        %v1155 = vld [vmem:[%s4 + $0x28] sm:$0xff]
        %v1156 = vld [vmem:[%s4 + $0x30] sm:$0xff]
        %v1157 = vld [vmem:[%s4 + $0x38] sm:$0xff]
        %v1159 = vsel %vm763, %v940, 0
        %v1162 = vsel %vm763, %v941, 0
        %v1165 = vsel %vm763, %v942, 0
        %v1168 = vsel %vm763, %v943, 0
        %v1171 = vsel %vm763, %v944, 0
        %v1174 = vsel %vm763, %v945, 0
        %v1177 = vsel %vm763, %v946, 0
        %v1180 = vsel %vm763, %v947, 0
        %v1183 = vsel %vm763, %v948, 0
        %v1186 = vsel %vm763, %v949, 0
        %v1189 = vsel %vm763, %v950, 0
        %v1192 = vsel %vm763, %v951, 0
        %v1195 = vsel %vm763, %v952, 0
        %v1198 = vsel %vm763, %v953, 0
        %v1201 = vsel %vm763, %v954, 0
        %v1204 = vsel %vm763, %v955, 0
        %1206 = vmatprep.subr.mxu0 %v1151
        %1207 = vmatpush1.msra.mxu0 %v1150
        %1208 = vmatprep.subr.mxu0 %v1155
        %1209 = vmatpush1.msra.mxu0 %v1154
        %1210 = vmatprep.subr.mxu0 0.0
        %1211 = vmatpush1.msra.mxu0 0.0
        %1212 = vmatprep.subr.mxu0 0.0
        %1213 = vmatpush1.msra.mxu0 0.0
        %1214 = vmatprep.subr.mxu0 0.0
        %1215 = vmatpush1.msra.mxu0 0.0
        %1216 = vmatprep.subr.mxu0 0.0
        %1217 = vmatpush1.msra.mxu0 0.0
        %1218 = vmatprep.subr.mxu0 0.0
        %1219 = vmatpush1.msra.mxu0 0.0
        %1220 = vmatprep.subr.mxu0 0.0
        %1221 = vmatpush1.msra.mxu0 0.0
        %1222 = vmatprep.subr.mxu0 0.0
        %1223 = vmatpush1.msra.mxu0 0.0
        %1224 = vmatprep.subr.mxu0 0.0
        %1225 = vmatpush1.msra.mxu0 0.0
        %1226 = vmatprep.subr.mxu0 0.0
        %1227 = vmatpush1.msra.mxu0 0.0
        %1228 = vmatprep.subr.mxu0 0.0
        %1229 = vmatpush1.msra.mxu0 0.0
        %1230 = vmatprep.subr.mxu0 0.0
        %1231 = vmatpush1.msra.mxu0 0.0
        %1232 = vmatprep.subr.mxu0 0.0
        %1233 = vmatpush1.msra.mxu0 0.0
        %1234 = vmatprep.subr.mxu0 0.0
        %1235 = vmatpush1.msra.mxu0 0.0
        %1236 = vmatprep.subr.mxu0 0.0
        %1237 = vmatpush1.msra.mxu0 0.0
        %1238 = vmatprep.subr.mxu0 0.0
        %1239 = vmatpush1.msra.mxu0 0.0
        %1240 = vmatprep.subr.mxu0 0.0
        %1241 = vmatpush1.msra.mxu0 0.0
        %1242 = vmatprep.subr.mxu0 0.0
        %1243 = vmatpush1.msra.mxu0 0.0
        %1244 = vmatprep.subr.mxu0 0.0
        %1245 = vmatpush1.msra.mxu0 0.0
        %1246 = vmatprep.subr.mxu0 0.0
        %1247 = vmatpush1.msra.mxu0 0.0
        %1248 = vmatprep.subr.mxu0 0.0
        %1249 = vmatpush1.msra.mxu0 0.0
        %1250 = vmatprep.subr.mxu0 0.0
        %1251 = vmatpush1.msra.mxu0 0.0
        %1252 = vmatprep.subr.mxu0 0.0
        %1253 = vmatpush1.msra.mxu0 0.0
        %1254 = vmatprep.subr.mxu0 0.0
        %1255 = vmatpush1.msra.mxu0 0.0
        %1256 = vmatprep.subr.mxu0 0.0
        %1257 = vmatpush1.msra.mxu0 0.0
        %1258 = vmatprep.subr.mxu0 0.0
        %1259 = vmatpush1.msra.mxu0 0.0
        %1260 = vmatprep.subr.mxu0 0.0
        %1261 = vmatpush1.msra.mxu0 0.0
        %1262 = vmatprep.subr.mxu0 0.0
        %1263 = vmatpush1.msra.mxu0 0.0
        %1264 = vmatprep.subr.mxu0 0.0
        %1265 = vmatpush1.msra.mxu0 0.0
        %1266 = vmatprep.subr.mxu0 0.0
        %1267 = vmatpush1.msra.mxu0 0.0
        %1268 = vmatprep.subr.mxu0 0.0
        %1269 = vmatpush1.msra.mxu0 0.0
        %1270 = vmatprep.mubr.f32.mxu0 0.0
        %1271 = vmatmul.mubr.f32.gmra.mrb[0].mxu0 %v1159
        %v1272 = vpop.f32.mrb[0].mxu0
        %v1273 = vadd.f32 0.0, %v1272
        %v1274 = vpop.f32.mrb[0].mxu0
        %v1275 = vadd.f32 0.0, %v1274
        %1276 = vmatprep.mubr.f32.mxu0 0.0
        %1277 = vmatmul.mubr.f32.gmra.mrb[0].mxu0 %v1162
        %v1278 = vpop.f32.mrb[0].mxu0
        %v1279 = vadd.f32 0.0, %v1278
        %v1280 = vpop.f32.mrb[0].mxu0
        %v1281 = vadd.f32 0.0, %v1280
        %1282 = vmatprep.mubr.f32.mxu0 0.0
        %1283 = vmatmul.mubr.f32.gmra.mrb[0].mxu0 %v1165
        %v1284 = vpop.f32.mrb[0].mxu0
        %v1285 = vadd.f32 0.0, %v1284
        %v1286 = vpop.f32.mrb[0].mxu0
        %v1287 = vadd.f32 0.0, %v1286
        %1288 = vmatprep.mubr.f32.mxu0 0.0
        %1289 = vmatmul.mubr.f32.gmra.mrb[0].mxu0 %v1168
        %v1290 = vpop.f32.mrb[0].mxu0
        %v1291 = vadd.f32 0.0, %v1290
        %v1292 = vpop.f32.mrb[0].mxu0
        %v1293 = vadd.f32 0.0, %v1292
        %1294 = vmatprep.mubr.f32.mxu0 0.0
        %1295 = vmatmul.mubr.f32.gmra.mrb[0].mxu0 %v1171
        %v1296 = vpop.f32.mrb[0].mxu0
        %v1297 = vadd.f32 0.0, %v1296
        %v1298 = vpop.f32.mrb[0].mxu0
        %v1299 = vadd.f32 0.0, %v1298
        %1300 = vmatprep.mubr.f32.mxu0 0.0
        %1301 = vmatmul.mubr.f32.gmra.mrb[0].mxu0 %v1174
        %v1302 = vpop.f32.mrb[0].mxu0
        %v1303 = vadd.f32 0.0, %v1302
        %v1304 = vpop.f32.mrb[0].mxu0
        %v1305 = vadd.f32 0.0, %v1304
        %1306 = vmatprep.mubr.f32.mxu0 0.0
        %1307 = vmatmul.mubr.f32.gmra.mrb[0].mxu0 %v1177
        %v1308 = vpop.f32.mrb[0].mxu0
        %v1309 = vadd.f32 0.0, %v1308
        %v1310 = vpop.f32.mrb[0].mxu0
        %v1311 = vadd.f32 0.0, %v1310
        %1312 = vmatprep.mubr.f32.mxu0 0.0
        %1313 = vmatmul.mubr.f32.gmra.mrb[0].mxu0 %v1180
        %v1314 = vpop.f32.mrb[0].mxu0
        %v1315 = vadd.f32 0.0, %v1314
        %v1316 = vpop.f32.mrb[0].mxu0
        %v1317 = vadd.f32 0.0, %v1316
        %1318 = vmatprep.mubr.f32.mxu0 0.0
        %1319 = vmatmul.mubr.f32.gmra.mrb[0].mxu0 %v1183
        %v1320 = vpop.f32.mrb[0].mxu0
        %v1321 = vadd.f32 0.0, %v1320
        %v1322 = vpop.f32.mrb[0].mxu0
        %v1323 = vadd.f32 0.0, %v1322
        %1324 = vmatprep.mubr.f32.mxu0 0.0
        %1325 = vmatmul.mubr.f32.gmra.mrb[0].mxu0 %v1186
        %v1326 = vpop.f32.mrb[0].mxu0
        %v1327 = vadd.f32 0.0, %v1326
        %v1328 = vpop.f32.mrb[0].mxu0
        %v1329 = vadd.f32 0.0, %v1328
        %1330 = vmatprep.mubr.f32.mxu0 0.0
        %1331 = vmatmul.mubr.f32.gmra.mrb[0].mxu0 %v1189
        %v1332 = vpop.f32.mrb[0].mxu0
        %v1333 = vadd.f32 0.0, %v1332
        %v1334 = vpop.f32.mrb[0].mxu0
        %v1335 = vadd.f32 0.0, %v1334
        %1336 = vmatprep.mubr.f32.mxu0 0.0
        %1337 = vmatmul.mubr.f32.gmra.mrb[0].mxu0 %v1192
        %v1338 = vpop.f32.mrb[0].mxu0
        %v1339 = vadd.f32 0.0, %v1338
        %v1340 = vpop.f32.mrb[0].mxu0
        %v1341 = vadd.f32 0.0, %v1340
        %1342 = vmatprep.mubr.f32.mxu0 0.0
        %1343 = vmatmul.mubr.f32.gmra.mrb[0].mxu0 %v1195
        %v1344 = vpop.f32.mrb[0].mxu0
        %v1345 = vadd.f32 0.0, %v1344
        %v1346 = vpop.f32.mrb[0].mxu0
        %v1347 = vadd.f32 0.0, %v1346
        %1348 = vmatprep.mubr.f32.mxu0 0.0
        %1349 = vmatmul.mubr.f32.gmra.mrb[0].mxu0 %v1198
        %v1350 = vpop.f32.mrb[0].mxu0
        %v1351 = vadd.f32 0.0, %v1350
        %v1352 = vpop.f32.mrb[0].mxu0
        %v1353 = vadd.f32 0.0, %v1352
        %1354 = vmatprep.mubr.f32.mxu0 0.0
        %1355 = vmatmul.mubr.f32.gmra.mrb[0].mxu0 %v1201
        %v1356 = vpop.f32.mrb[0].mxu0
        %v1357 = vadd.f32 0.0, %v1356
        %v1358 = vpop.f32.mrb[0].mxu0
        %v1359 = vadd.f32 0.0, %v1358
        %1360 = vmatprep.mubr.f32.mxu0 0.0
        %1361 = vmatmul.mubr.f32.gmra.mrb[0].mxu0 %v1204
        %v1362 = vpop.f32.mrb[0].mxu0
        %v1363 = vadd.f32 0.0, %v1362
        %v1364 = vpop.f32.mrb[0].mxu0
        %v1365 = vadd.f32 0.0, %v1364
        %1366 = vdwg.mxu0
        %1367 = vmatprep.subr.mxu0 %v1153
        %1368 = vmatpush1.msra.mxu0 %v1152
        %1369 = vmatprep.subr.mxu0 %v1157
        %1370 = vmatpush1.msra.mxu0 %v1156
        %1371 = vmatprep.subr.mxu0 0.0
        %1372 = vmatpush1.msra.mxu0 0.0
        %1373 = vmatprep.subr.mxu0 0.0
        %1374 = vmatpush1.msra.mxu0 0.0
        %1375 = vmatprep.subr.mxu0 0.0
        %1376 = vmatpush1.msra.mxu0 0.0
        %1377 = vmatprep.subr.mxu0 0.0
        %1378 = vmatpush1.msra.mxu0 0.0
        %1379 = vmatprep.subr.mxu0 0.0
        %1380 = vmatpush1.msra.mxu0 0.0
        %1381 = vmatprep.subr.mxu0 0.0
        %1382 = vmatpush1.msra.mxu0 0.0
        %1383 = vmatprep.subr.mxu0 0.0
        %1384 = vmatpush1.msra.mxu0 0.0
        %1385 = vmatprep.subr.mxu0 0.0
        %1386 = vmatpush1.msra.mxu0 0.0
        %1387 = vmatprep.subr.mxu0 0.0
        %1388 = vmatpush1.msra.mxu0 0.0
        %1389 = vmatprep.subr.mxu0 0.0
        %1390 = vmatpush1.msra.mxu0 0.0
        %1391 = vmatprep.subr.mxu0 0.0
        %1392 = vmatpush1.msra.mxu0 0.0
        %1393 = vmatprep.subr.mxu0 0.0
        %1394 = vmatpush1.msra.mxu0 0.0
        %1395 = vmatprep.subr.mxu0 0.0
        %1396 = vmatpush1.msra.mxu0 0.0
        %1397 = vmatprep.subr.mxu0 0.0
        %1398 = vmatpush1.msra.mxu0 0.0
        %1399 = vmatprep.subr.mxu0 0.0
        %1400 = vmatpush1.msra.mxu0 0.0
        %1401 = vmatprep.subr.mxu0 0.0
        %1402 = vmatpush1.msra.mxu0 0.0
        %1403 = vmatprep.subr.mxu0 0.0
        %1404 = vmatpush1.msra.mxu0 0.0
        %1405 = vmatprep.subr.mxu0 0.0
        %1406 = vmatpush1.msra.mxu0 0.0
        %1407 = vmatprep.subr.mxu0 0.0
        %1408 = vmatpush1.msra.mxu0 0.0
        %1409 = vmatprep.subr.mxu0 0.0
        %1410 = vmatpush1.msra.mxu0 0.0
        %1411 = vmatprep.subr.mxu0 0.0
        %1412 = vmatpush1.msra.mxu0 0.0
        %1413 = vmatprep.subr.mxu0 0.0
        %1414 = vmatpush1.msra.mxu0 0.0
        %1415 = vmatprep.subr.mxu0 0.0
        %1416 = vmatpush1.msra.mxu0 0.0
        %1417 = vmatprep.subr.mxu0 0.0
        %1418 = vmatpush1.msra.mxu0 0.0
        %1419 = vmatprep.subr.mxu0 0.0
        %1420 = vmatpush1.msra.mxu0 0.0
        %1421 = vmatprep.subr.mxu0 0.0
        %1422 = vmatpush1.msra.mxu0 0.0
        %1423 = vmatprep.subr.mxu0 0.0
        %1424 = vmatpush1.msra.mxu0 0.0
        %1425 = vmatprep.subr.mxu0 0.0
        %1426 = vmatpush1.msra.mxu0 0.0
        %1427 = vmatprep.subr.mxu0 0.0
        %1428 = vmatpush1.msra.mxu0 0.0
        %1429 = vmatprep.subr.mxu0 0.0
        %1430 = vmatpush1.msra.mxu0 0.0
        %1431 = vmatprep.mubr.f32.mxu0 0.0
        %1432 = vmatmul.mubr.f32.gmra.mrb[0].mxu0 %v1159
        %v1433 = vpop.f32.mrb[0].mxu0
        %v1434 = vadd.f32 0.0, %v1433
        %v1435 = vpop.f32.mrb[0].mxu0
        %v1436 = vadd.f32 0.0, %v1435
        %1437 = vmatprep.mubr.f32.mxu0 0.0
        %1438 = vmatmul.mubr.f32.gmra.mrb[0].mxu0 %v1162
        %v1439 = vpop.f32.mrb[0].mxu0
        %v1440 = vadd.f32 0.0, %v1439
        %v1441 = vpop.f32.mrb[0].mxu0
        %v1442 = vadd.f32 0.0, %v1441
        %1443 = vmatprep.mubr.f32.mxu0 0.0
        %1444 = vmatmul.mubr.f32.gmra.mrb[0].mxu0 %v1165
        %v1445 = vpop.f32.mrb[0].mxu0
        %v1446 = vadd.f32 0.0, %v1445
        %v1447 = vpop.f32.mrb[0].mxu0
        %v1448 = vadd.f32 0.0, %v1447
        %1449 = vmatprep.mubr.f32.mxu0 0.0
        %1450 = vmatmul.mubr.f32.gmra.mrb[0].mxu0 %v1168
        %v1451 = vpop.f32.mrb[0].mxu0
        %v1452 = vadd.f32 0.0, %v1451
        %v1453 = vpop.f32.mrb[0].mxu0
        %v1454 = vadd.f32 0.0, %v1453
        %1455 = vmatprep.mubr.f32.mxu0 0.0
        %1456 = vmatmul.mubr.f32.gmra.mrb[0].mxu0 %v1171
        %v1457 = vpop.f32.mrb[0].mxu0
        %v1458 = vadd.f32 0.0, %v1457
        %v1459 = vpop.f32.mrb[0].mxu0
        %v1460 = vadd.f32 0.0, %v1459
        %1461 = vmatprep.mubr.f32.mxu0 0.0
        %1462 = vmatmul.mubr.f32.gmra.mrb[0].mxu0 %v1174
        %v1463 = vpop.f32.mrb[0].mxu0
        %v1464 = vadd.f32 0.0, %v1463
        %v1465 = vpop.f32.mrb[0].mxu0
        %v1466 = vadd.f32 0.0, %v1465
        %1467 = vmatprep.mubr.f32.mxu0 0.0
        %1468 = vmatmul.mubr.f32.gmra.mrb[0].mxu0 %v1177
        %v1469 = vpop.f32.mrb[0].mxu0
        %v1470 = vadd.f32 0.0, %v1469
        %v1471 = vpop.f32.mrb[0].mxu0
        %v1472 = vadd.f32 0.0, %v1471
        %1473 = vmatprep.mubr.f32.mxu0 0.0
        %1474 = vmatmul.mubr.f32.gmra.mrb[0].mxu0 %v1180
        %v1475 = vpop.f32.mrb[0].mxu0
        %v1476 = vadd.f32 0.0, %v1475
        %v1477 = vpop.f32.mrb[0].mxu0
        %v1478 = vadd.f32 0.0, %v1477
        %1479 = vmatprep.mubr.f32.mxu0 0.0
        %1480 = vmatmul.mubr.f32.gmra.mrb[0].mxu0 %v1183
        %v1481 = vpop.f32.mrb[0].mxu0
        %v1482 = vadd.f32 0.0, %v1481
        %v1483 = vpop.f32.mrb[0].mxu0
        %v1484 = vadd.f32 0.0, %v1483
        %1485 = vmatprep.mubr.f32.mxu0 0.0
        %1486 = vmatmul.mubr.f32.gmra.mrb[0].mxu0 %v1186
        %v1487 = vpop.f32.mrb[0].mxu0
        %v1488 = vadd.f32 0.0, %v1487
        %v1489 = vpop.f32.mrb[0].mxu0
        %v1490 = vadd.f32 0.0, %v1489
        %1491 = vmatprep.mubr.f32.mxu0 0.0
        %1492 = vmatmul.mubr.f32.gmra.mrb[0].mxu0 %v1189
        %v1493 = vpop.f32.mrb[0].mxu0
        %v1494 = vadd.f32 0.0, %v1493
        %v1495 = vpop.f32.mrb[0].mxu0
        %v1496 = vadd.f32 0.0, %v1495
        %1497 = vmatprep.mubr.f32.mxu0 0.0
        %1498 = vmatmul.mubr.f32.gmra.mrb[0].mxu0 %v1192
        %v1499 = vpop.f32.mrb[0].mxu0
        %v1500 = vadd.f32 0.0, %v1499
        %v1501 = vpop.f32.mrb[0].mxu0
        %v1502 = vadd.f32 0.0, %v1501
        %1503 = vmatprep.mubr.f32.mxu0 0.0
        %1504 = vmatmul.mubr.f32.gmra.mrb[0].mxu0 %v1195
        %v1505 = vpop.f32.mrb[0].mxu0
        %v1506 = vadd.f32 0.0, %v1505
        %v1507 = vpop.f32.mrb[0].mxu0
        %v1508 = vadd.f32 0.0, %v1507
        %1509 = vmatprep.mubr.f32.mxu0 0.0
        %1510 = vmatmul.mubr.f32.gmra.mrb[0].mxu0 %v1198
        %v1511 = vpop.f32.mrb[0].mxu0
        %v1512 = vadd.f32 0.0, %v1511
        %v1513 = vpop.f32.mrb[0].mxu0
        %v1514 = vadd.f32 0.0, %v1513
        %1515 = vmatprep.mubr.f32.mxu0 0.0
        %1516 = vmatmul.mubr.f32.gmra.mrb[0].mxu0 %v1201
        %v1517 = vpop.f32.mrb[0].mxu0
        %v1518 = vadd.f32 0.0, %v1517
        %v1519 = vpop.f32.mrb[0].mxu0
        %v1520 = vadd.f32 0.0, %v1519
        %1521 = vmatprep.mubr.f32.mxu0 0.0
        %1522 = vmatmul.mubr.f32.gmra.mrb[0].mxu0 %v1204
        %v1523 = vpop.f32.mrb[0].mxu0
        %v1524 = vadd.f32 0.0, %v1523
        %v1525 = vpop.f32.mrb[0].mxu0
        %v1526 = vadd.f32 0.0, %v1525
        %1527 = vdwg.mxu0
        %v1528 = vld [vmem:[%s3] sm:$0xf]
        %v1530 = vlaneseq
        %v1531 = vshrl.u32 %v1530, 7
        %v1532 = vsub.s32 0, %v1531
        %v1533 = vrot.slane %v1528, %v1532
        %v1534 = vlaneseq
        %v1535 = vshrl.u32 %v1534, 7
        %v1536 = vsub.s32 1, %v1535
        %v1537 = vrot.slane %v1528, %v1536
        %v1538 = vlaneseq
        %v1539 = vshrl.u32 %v1538, 7
        %v1540 = vsub.s32 2, %v1539
        %v1541 = vrot.slane %v1528, %v1540
        %v1542 = vlaneseq
        %v1543 = vshrl.u32 %v1542, 7
        %v1544 = vsub.s32 3, %v1543
        %v1545 = vrot.slane %v1528, %v1544
        %v1550 = vsub.f32 %v1134, %v1533
        %v1551 = vsub.f32 %v1134, %v1537
        %v1552 = vsub.f32 %v1134, %v1541
        %v1553 = vsub.f32 %v1134, %v1545
        %v1554 = vsub.f32 %v1135, %v1533
        %v1555 = vsub.f32 %v1135, %v1537
        %v1556 = vsub.f32 %v1135, %v1541
        %v1557 = vsub.f32 %v1135, %v1545
        %v1558 = vsub.f32 %v1136, %v1533
        %v1559 = vsub.f32 %v1136, %v1537
        %v1560 = vsub.f32 %v1136, %v1541
        %v1561 = vsub.f32 %v1136, %v1545
        %v1562 = vsub.f32 %v1137, %v1533
        %v1563 = vsub.f32 %v1137, %v1537
        %v1564 = vsub.f32 %v1137, %v1541
        %v1565 = vsub.f32 %v1137, %v1545
        %v1566 = vsub.f32 %v1138, %v1533
        %v1567 = vsub.f32 %v1138, %v1537
        %v1568 = vsub.f32 %v1138, %v1541
        %v1569 = vsub.f32 %v1138, %v1545
        %v1570 = vsub.f32 %v1139, %v1533
        %v1571 = vsub.f32 %v1139, %v1537
        %v1572 = vsub.f32 %v1139, %v1541
        %v1573 = vsub.f32 %v1139, %v1545
        %v1574 = vsub.f32 %v1140, %v1533
        %v1575 = vsub.f32 %v1140, %v1537
        %v1576 = vsub.f32 %v1140, %v1541
        %v1577 = vsub.f32 %v1140, %v1545
        %v1578 = vsub.f32 %v1141, %v1533
        %v1579 = vsub.f32 %v1141, %v1537
        %v1580 = vsub.f32 %v1141, %v1541
        %v1581 = vsub.f32 %v1141, %v1545
        %v1582 = vsub.f32 %v1142, %v1533
        %v1583 = vsub.f32 %v1142, %v1537
        %v1584 = vsub.f32 %v1142, %v1541
        %v1585 = vsub.f32 %v1142, %v1545
        %v1586 = vsub.f32 %v1143, %v1533
        %v1587 = vsub.f32 %v1143, %v1537
        %v1588 = vsub.f32 %v1143, %v1541
        %v1589 = vsub.f32 %v1143, %v1545
        %v1590 = vsub.f32 %v1144, %v1533
        %v1591 = vsub.f32 %v1144, %v1537
        %v1592 = vsub.f32 %v1144, %v1541
        %v1593 = vsub.f32 %v1144, %v1545
        %v1594 = vsub.f32 %v1145, %v1533
        %v1595 = vsub.f32 %v1145, %v1537
        %v1596 = vsub.f32 %v1145, %v1541
        %v1597 = vsub.f32 %v1145, %v1545
        %v1598 = vsub.f32 %v1146, %v1533
        %v1599 = vsub.f32 %v1146, %v1537
        %v1600 = vsub.f32 %v1146, %v1541
        %v1601 = vsub.f32 %v1146, %v1545
        %v1602 = vsub.f32 %v1147, %v1533
        %v1603 = vsub.f32 %v1147, %v1537
        %v1604 = vsub.f32 %v1147, %v1541
        %v1605 = vsub.f32 %v1147, %v1545
        %v1606 = vsub.f32 %v1148, %v1533
        %v1607 = vsub.f32 %v1148, %v1537
        %v1608 = vsub.f32 %v1148, %v1541
        %v1609 = vsub.f32 %v1148, %v1545
        %v1610 = vsub.f32 %v1149, %v1533
        %v1611 = vsub.f32 %v1149, %v1537
        %v1612 = vsub.f32 %v1149, %v1541
        %v1613 = vsub.f32 %v1149, %v1545
        %v1614 = vmul.f32 %v1550, %v1273
        %v1615 = vmul.f32 %v1551, %v1275
        %v1616 = vmul.f32 %v1552, %v1434
        %v1617 = vmul.f32 %v1553, %v1436
        %v1618 = vmul.f32 %v1554, %v1279
        %v1619 = vmul.f32 %v1555, %v1281
        %v1620 = vmul.f32 %v1556, %v1440
        %v1621 = vmul.f32 %v1557, %v1442
        %v1622 = vmul.f32 %v1558, %v1285
        %v1623 = vmul.f32 %v1559, %v1287
        %v1624 = vmul.f32 %v1560, %v1446
        %v1625 = vmul.f32 %v1561, %v1448
        %v1626 = vmul.f32 %v1562, %v1291
        %v1627 = vmul.f32 %v1563, %v1293
        %v1628 = vmul.f32 %v1564, %v1452
        %v1629 = vmul.f32 %v1565, %v1454
        %v1630 = vmul.f32 %v1566, %v1297
        %v1631 = vmul.f32 %v1567, %v1299
        %v1632 = vmul.f32 %v1568, %v1458
        %v1633 = vmul.f32 %v1569, %v1460
        %v1634 = vmul.f32 %v1570, %v1303
        %v1635 = vmul.f32 %v1571, %v1305
        %v1636 = vmul.f32 %v1572, %v1464
        %v1637 = vmul.f32 %v1573, %v1466
        %v1638 = vmul.f32 %v1574, %v1309
        %v1639 = vmul.f32 %v1575, %v1311
        %v1640 = vmul.f32 %v1576, %v1470
        %v1641 = vmul.f32 %v1577, %v1472
        %v1642 = vmul.f32 %v1578, %v1315
        %v1643 = vmul.f32 %v1579, %v1317
        %v1644 = vmul.f32 %v1580, %v1476
        %v1645 = vmul.f32 %v1581, %v1478
        %v1646 = vmul.f32 %v1582, %v1321
        %v1647 = vmul.f32 %v1583, %v1323
        %v1648 = vmul.f32 %v1584, %v1482
        %v1649 = vmul.f32 %v1585, %v1484
        %v1650 = vmul.f32 %v1586, %v1327
        %v1651 = vmul.f32 %v1587, %v1329
        %v1652 = vmul.f32 %v1588, %v1488
        %v1653 = vmul.f32 %v1589, %v1490
        %v1654 = vmul.f32 %v1590, %v1333
        %v1655 = vmul.f32 %v1591, %v1335
        %v1656 = vmul.f32 %v1592, %v1494
        %v1657 = vmul.f32 %v1593, %v1496
        %v1658 = vmul.f32 %v1594, %v1339
        %v1659 = vmul.f32 %v1595, %v1341
        %v1660 = vmul.f32 %v1596, %v1500
        %v1661 = vmul.f32 %v1597, %v1502
        %v1662 = vmul.f32 %v1598, %v1345
        %v1663 = vmul.f32 %v1599, %v1347
        %v1664 = vmul.f32 %v1600, %v1506
        %v1665 = vmul.f32 %v1601, %v1508
        %v1666 = vmul.f32 %v1602, %v1351
        %v1667 = vmul.f32 %v1603, %v1353
        %v1668 = vmul.f32 %v1604, %v1512
        %v1669 = vmul.f32 %v1605, %v1514
        %v1670 = vmul.f32 %v1606, %v1357
        %v1671 = vmul.f32 %v1607, %v1359
        %v1672 = vmul.f32 %v1608, %v1518
        %v1673 = vmul.f32 %v1609, %v1520
        %v1674 = vmul.f32 %v1610, %v1363
        %v1675 = vmul.f32 %v1611, %v1365
        %v1676 = vmul.f32 %v1612, %v1524
        %v1677 = vmul.f32 %v1613, %v1526
        %v1678 = vmul.f32 %v1614, %v1614
        %v1679 = vmul.f32 %v1615, %v1615
        %v1680 = vmul.f32 %v1616, %v1616
        %v1681 = vmul.f32 %v1617, %v1617
        %v1682 = vmul.f32 %v1618, %v1618
        %v1683 = vmul.f32 %v1619, %v1619
        %v1684 = vmul.f32 %v1620, %v1620
        %v1685 = vmul.f32 %v1621, %v1621
        %v1686 = vmul.f32 %v1622, %v1622
        %v1687 = vmul.f32 %v1623, %v1623
        %v1688 = vmul.f32 %v1624, %v1624
        %v1689 = vmul.f32 %v1625, %v1625
        %v1690 = vmul.f32 %v1626, %v1626
        %v1691 = vmul.f32 %v1627, %v1627
        %v1692 = vmul.f32 %v1628, %v1628
        %v1693 = vmul.f32 %v1629, %v1629
        %v1694 = vmul.f32 %v1630, %v1630
        %v1695 = vmul.f32 %v1631, %v1631
        %v1696 = vmul.f32 %v1632, %v1632
        %v1697 = vmul.f32 %v1633, %v1633
        %v1698 = vmul.f32 %v1634, %v1634
        %v1699 = vmul.f32 %v1635, %v1635
        %v1700 = vmul.f32 %v1636, %v1636
        %v1701 = vmul.f32 %v1637, %v1637
        %v1702 = vmul.f32 %v1638, %v1638
        %v1703 = vmul.f32 %v1639, %v1639
        %v1704 = vmul.f32 %v1640, %v1640
        %v1705 = vmul.f32 %v1641, %v1641
        %v1706 = vmul.f32 %v1642, %v1642
        %v1707 = vmul.f32 %v1643, %v1643
        %v1708 = vmul.f32 %v1644, %v1644
        %v1709 = vmul.f32 %v1645, %v1645
        %v1710 = vmul.f32 %v1646, %v1646
        %v1711 = vmul.f32 %v1647, %v1647
        %v1712 = vmul.f32 %v1648, %v1648
        %v1713 = vmul.f32 %v1649, %v1649
        %v1714 = vmul.f32 %v1650, %v1650
        %v1715 = vmul.f32 %v1651, %v1651
        %v1716 = vmul.f32 %v1652, %v1652
        %v1717 = vmul.f32 %v1653, %v1653
        %v1718 = vmul.f32 %v1654, %v1654
        %v1719 = vmul.f32 %v1655, %v1655
        %v1720 = vmul.f32 %v1656, %v1656
        %v1721 = vmul.f32 %v1657, %v1657
        %v1722 = vmul.f32 %v1658, %v1658
        %v1723 = vmul.f32 %v1659, %v1659
        %v1724 = vmul.f32 %v1660, %v1660
        %v1725 = vmul.f32 %v1661, %v1661
        %v1726 = vmul.f32 %v1662, %v1662
        %v1727 = vmul.f32 %v1663, %v1663
        %v1728 = vmul.f32 %v1664, %v1664
        %v1729 = vmul.f32 %v1665, %v1665
        %v1730 = vmul.f32 %v1666, %v1666
        %v1731 = vmul.f32 %v1667, %v1667
        %v1732 = vmul.f32 %v1668, %v1668
        %v1733 = vmul.f32 %v1669, %v1669
        %v1734 = vmul.f32 %v1670, %v1670
        %v1735 = vmul.f32 %v1671, %v1671
        %v1736 = vmul.f32 %v1672, %v1672
        %v1737 = vmul.f32 %v1673, %v1673
        %v1738 = vmul.f32 %v1674, %v1674
        %v1739 = vmul.f32 %v1675, %v1675
        %v1740 = vmul.f32 %v1676, %v1676
        %v1741 = vmul.f32 %v1677, %v1677
        %v1742 = vld [vmem:[%s5] sm:$0xff]
        %v1743 = vld [vmem:[%s5 + $0x8] sm:$0xff]
        %v1744 = vld [vmem:[%s5 + $0x10] sm:$0xff]
        %v1745 = vld [vmem:[%s5 + $0x18] sm:$0xff]
        %v1746 = vld [vmem:[%s5 + $0x20] sm:$0xff]
        %v1747 = vld [vmem:[%s5 + $0x28] sm:$0xff]
        %v1748 = vld [vmem:[%s5 + $0x30] sm:$0xff]
        %v1749 = vld [vmem:[%s5 + $0x38] sm:$0xff]
        %v1750 = vld [vmem:[%s5 + $0x40] sm:$0xff]
        %v1751 = vld [vmem:[%s5 + $0x48] sm:$0xff]
        %v1752 = vld [vmem:[%s5 + $0x50] sm:$0xff]
        %v1753 = vld [vmem:[%s5 + $0x58] sm:$0xff]
        %v1754 = vld [vmem:[%s5 + $0x60] sm:$0xff]
        %v1755 = vld [vmem:[%s5 + $0x68] sm:$0xff]
        %v1756 = vld [vmem:[%s5 + $0x70] sm:$0xff]
        %v1757 = vld [vmem:[%s5 + $0x78] sm:$0xff]
        %v1758 = vld [vmem:[%s5 + $0x80] sm:$0xff]
        %v1759 = vld [vmem:[%s5 + $0x88] sm:$0xff]
        %v1760 = vld [vmem:[%s5 + $0x90] sm:$0xff]
        %v1761 = vld [vmem:[%s5 + $0x98] sm:$0xff]
        %v1762 = vld [vmem:[%s5 + $0xa0] sm:$0xff]
        %v1763 = vld [vmem:[%s5 + $0xa8] sm:$0xff]
        %v1764 = vld [vmem:[%s5 + $0xb0] sm:$0xff]
        %v1765 = vld [vmem:[%s5 + $0xb8] sm:$0xff]
        %v1766 = vld [vmem:[%s5 + $0xc0] sm:$0xff]
        %v1767 = vld [vmem:[%s5 + $0xc8] sm:$0xff]
        %v1768 = vld [vmem:[%s5 + $0xd0] sm:$0xff]
        %v1769 = vld [vmem:[%s5 + $0xd8] sm:$0xff]
        %v1770 = vld [vmem:[%s5 + $0xe0] sm:$0xff]
        %v1771 = vld [vmem:[%s5 + $0xe8] sm:$0xff]
        %v1772 = vld [vmem:[%s5 + $0xf0] sm:$0xff]
        %v1773 = vld [vmem:[%s5 + $0xf8] sm:$0xff]
        %v1774 = vld [vmem:[%s5 + $0x100] sm:$0xff]
        %v1775 = vld [vmem:[%s5 + $0x108] sm:$0xff]
        %v1776 = vld [vmem:[%s5 + $0x110] sm:$0xff]
        %v1777 = vld [vmem:[%s5 + $0x118] sm:$0xff]
        %v1778 = vld [vmem:[%s5 + $0x120] sm:$0xff]
        %v1779 = vld [vmem:[%s5 + $0x128] sm:$0xff]
        %v1780 = vld [vmem:[%s5 + $0x130] sm:$0xff]
        %v1781 = vld [vmem:[%s5 + $0x138] sm:$0xff]
        %v1782 = vld [vmem:[%s5 + $0x140] sm:$0xff]
        %v1783 = vld [vmem:[%s5 + $0x148] sm:$0xff]
        %v1784 = vld [vmem:[%s5 + $0x150] sm:$0xff]
        %v1785 = vld [vmem:[%s5 + $0x158] sm:$0xff]
        %v1786 = vld [vmem:[%s5 + $0x160] sm:$0xff]
        %v1787 = vld [vmem:[%s5 + $0x168] sm:$0xff]
        %v1788 = vld [vmem:[%s5 + $0x170] sm:$0xff]
        %v1789 = vld [vmem:[%s5 + $0x178] sm:$0xff]
        %v1790 = vld [vmem:[%s5 + $0x180] sm:$0xff]
        %v1791 = vld [vmem:[%s5 + $0x188] sm:$0xff]
        %v1792 = vld [vmem:[%s5 + $0x190] sm:$0xff]
        %v1793 = vld [vmem:[%s5 + $0x198] sm:$0xff]
        %v1794 = vld [vmem:[%s5 + $0x1a0] sm:$0xff]
        %v1795 = vld [vmem:[%s5 + $0x1a8] sm:$0xff]
        %v1796 = vld [vmem:[%s5 + $0x1b0] sm:$0xff]
        %v1797 = vld [vmem:[%s5 + $0x1b8] sm:$0xff]
        %v1798 = vld [vmem:[%s5 + $0x1c0] sm:$0xff]
        %v1799 = vld [vmem:[%s5 + $0x1c8] sm:$0xff]
        %v1800 = vld [vmem:[%s5 + $0x1d0] sm:$0xff]
        %v1801 = vld [vmem:[%s5 + $0x1d8] sm:$0xff]
        %v1802 = vld [vmem:[%s5 + $0x1e0] sm:$0xff]
        %v1803 = vld [vmem:[%s5 + $0x1e8] sm:$0xff]
        %v1804 = vld [vmem:[%s5 + $0x1f0] sm:$0xff]
        %v1805 = vld [vmem:[%s5 + $0x1f8] sm:$0xff]
        %1806 = vmatprep.subr.mxu0 0.0
        %1807 = vmatpush1.msra.mxu0 %v1742
        %1808 = vmatprep.subr.mxu0 0.0
        %1809 = vmatpush1.msra.mxu0 %v1743
        %1810 = vmatprep.subr.mxu0 0.0
        %1811 = vmatpush1.msra.mxu0 %v1744
        %1812 = vmatprep.subr.mxu0 0.0
        %1813 = vmatpush1.msra.mxu0 %v1745
        %1814 = vmatprep.subr.mxu0 0.0
        %1815 = vmatpush1.msra.mxu0 %v1746
        %1816 = vmatprep.subr.mxu0 0.0
        %1817 = vmatpush1.msra.mxu0 %v1747
        %1818 = vmatprep.subr.mxu0 0.0
        %1819 = vmatpush1.msra.mxu0 %v1748
        %1820 = vmatprep.subr.mxu0 0.0
        %1821 = vmatpush1.msra.mxu0 %v1749
        %1822 = vmatprep.subr.mxu0 0.0
        %1823 = vmatpush1.msra.mxu0 %v1750
        %1824 = vmatprep.subr.mxu0 0.0
        %1825 = vmatpush1.msra.mxu0 %v1751
        %1826 = vmatprep.subr.mxu0 0.0
        %1827 = vmatpush1.msra.mxu0 %v1752
        %1828 = vmatprep.subr.mxu0 0.0
        %1829 = vmatpush1.msra.mxu0 %v1753
        %1830 = vmatprep.subr.mxu0 0.0
        %1831 = vmatpush1.msra.mxu0 %v1754
        %1832 = vmatprep.subr.mxu0 0.0
        %1833 = vmatpush1.msra.mxu0 %v1755
        %1834 = vmatprep.subr.mxu0 0.0
        %1835 = vmatpush1.msra.mxu0 %v1756
        %1836 = vmatprep.subr.mxu0 0.0
        %1837 = vmatpush1.msra.mxu0 %v1757
        %1838 = vmatprep.subr.mxu0 0.0
        %1839 = vmatpush1.msra.mxu0 %v1758
        %1840 = vmatprep.subr.mxu0 0.0
        %1841 = vmatpush1.msra.mxu0 %v1759
        %1842 = vmatprep.subr.mxu0 0.0
        %1843 = vmatpush1.msra.mxu0 %v1760
        %1844 = vmatprep.subr.mxu0 0.0
        %1845 = vmatpush1.msra.mxu0 %v1761
        %1846 = vmatprep.subr.mxu0 0.0
        %1847 = vmatpush1.msra.mxu0 %v1762
        %1848 = vmatprep.subr.mxu0 0.0
        %1849 = vmatpush1.msra.mxu0 %v1763
        %1850 = vmatprep.subr.mxu0 0.0
        %1851 = vmatpush1.msra.mxu0 %v1764
        %1852 = vmatprep.subr.mxu0 0.0
        %1853 = vmatpush1.msra.mxu0 %v1765
        %1854 = vmatprep.subr.mxu0 0.0
        %1855 = vmatpush1.msra.mxu0 %v1766
        %1856 = vmatprep.subr.mxu0 0.0
        %1857 = vmatpush1.msra.mxu0 %v1767
        %1858 = vmatprep.subr.mxu0 0.0
        %1859 = vmatpush1.msra.mxu0 %v1768
        %1860 = vmatprep.subr.mxu0 0.0
        %1861 = vmatpush1.msra.mxu0 %v1769
        %1862 = vmatprep.subr.mxu0 0.0
        %1863 = vmatpush1.msra.mxu0 %v1770
        %1864 = vmatprep.subr.mxu0 0.0
        %1865 = vmatpush1.msra.mxu0 %v1771
        %1866 = vmatprep.subr.mxu0 0.0
        %1867 = vmatpush1.msra.mxu0 %v1772
        %1868 = vmatprep.subr.mxu0 0.0
        %1869 = vmatpush1.msra.mxu0 %v1773
        %1870 = vmatprep.mubr.f32.mxu0 %v1679
        %1871 = vmatmul.mubr.f32.gmra.mrb[0].mxu0 %v1678
        %v1872 = vpop.f32.mrb[0].mxu0
        %v1873 = vadd.f32 0.0, %v1872
        %v1874 = vpop.f32.mrb[0].mxu0
        %1875 = vmatprep.mubr.f32.mxu0 %v1683
        %1876 = vmatmul.mubr.f32.gmra.mrb[0].mxu0 %v1682
        %v1877 = vpop.f32.mrb[0].mxu0
        %v1878 = vadd.f32 0.0, %v1877
        %v1879 = vpop.f32.mrb[0].mxu0
        %1880 = vmatprep.mubr.f32.mxu0 %v1687
        %1881 = vmatmul.mubr.f32.gmra.mrb[0].mxu0 %v1686
        %v1882 = vpop.f32.mrb[0].mxu0
        %v1883 = vadd.f32 0.0, %v1882
        %v1884 = vpop.f32.mrb[0].mxu0
        %1885 = vmatprep.mubr.f32.mxu0 %v1691
        %1886 = vmatmul.mubr.f32.gmra.mrb[0].mxu0 %v1690
        %v1887 = vpop.f32.mrb[0].mxu0
        %v1888 = vadd.f32 0.0, %v1887
        %v1889 = vpop.f32.mrb[0].mxu0
        %1890 = vmatprep.mubr.f32.mxu0 %v1695
        %1891 = vmatmul.mubr.f32.gmra.mrb[0].mxu0 %v1694
        %v1892 = vpop.f32.mrb[0].mxu0
        %v1893 = vadd.f32 0.0, %v1892
        %v1894 = vpop.f32.mrb[0].mxu0
        %1895 = vmatprep.mubr.f32.mxu0 %v1699
        %1896 = vmatmul.mubr.f32.gmra.mrb[0].mxu0 %v1698
        %v1897 = vpop.f32.mrb[0].mxu0
        %v1898 = vadd.f32 0.0, %v1897
        %v1899 = vpop.f32.mrb[0].mxu0
        %1900 = vmatprep.mubr.f32.mxu0 %v1703
        %1901 = vmatmul.mubr.f32.gmra.mrb[0].mxu0 %v1702
        %v1902 = vpop.f32.mrb[0].mxu0
        %v1903 = vadd.f32 0.0, %v1902
        %v1904 = vpop.f32.mrb[0].mxu0
        %1905 = vmatprep.mubr.f32.mxu0 %v1707
        %1906 = vmatmul.mubr.f32.gmra.mrb[0].mxu0 %v1706
        %v1907 = vpop.f32.mrb[0].mxu0
        %v1908 = vadd.f32 0.0, %v1907
        %v1909 = vpop.f32.mrb[0].mxu0
        %1910 = vmatprep.mubr.f32.mxu0 %v1711
        %1911 = vmatmul.mubr.f32.gmra.mrb[0].mxu0 %v1710
        %v1912 = vpop.f32.mrb[0].mxu0
        %v1913 = vadd.f32 0.0, %v1912
        %v1914 = vpop.f32.mrb[0].mxu0
        %1915 = vmatprep.mubr.f32.mxu0 %v1715
        %1916 = vmatmul.mubr.f32.gmra.mrb[0].mxu0 %v1714
        %v1917 = vpop.f32.mrb[0].mxu0
        %v1918 = vadd.f32 0.0, %v1917
        %v1919 = vpop.f32.mrb[0].mxu0
        %1920 = vmatprep.mubr.f32.mxu0 %v1719
        %1921 = vmatmul.mubr.f32.gmra.mrb[0].mxu0 %v1718
        %v1922 = vpop.f32.mrb[0].mxu0
        %v1923 = vadd.f32 0.0, %v1922
        %v1924 = vpop.f32.mrb[0].mxu0
        %1925 = vmatprep.mubr.f32.mxu0 %v1723
        %1926 = vmatmul.mubr.f32.gmra.mrb[0].mxu0 %v1722
        %v1927 = vpop.f32.mrb[0].mxu0
        %v1928 = vadd.f32 0.0, %v1927
        %v1929 = vpop.f32.mrb[0].mxu0
        %1930 = vmatprep.mubr.f32.mxu0 %v1727
        %1931 = vmatmul.mubr.f32.gmra.mrb[0].mxu0 %v1726
        %v1932 = vpop.f32.mrb[0].mxu0
        %v1933 = vadd.f32 0.0, %v1932
        %v1934 = vpop.f32.mrb[0].mxu0
        %1935 = vmatprep.mubr.f32.mxu0 %v1731
        %1936 = vmatmul.mubr.f32.gmra.mrb[0].mxu0 %v1730
        %v1937 = vpop.f32.mrb[0].mxu0
        %v1938 = vadd.f32 0.0, %v1937
        %v1939 = vpop.f32.mrb[0].mxu0
        %1940 = vmatprep.mubr.f32.mxu0 %v1735
        %1941 = vmatmul.mubr.f32.gmra.mrb[0].mxu0 %v1734
        %v1942 = vpop.f32.mrb[0].mxu0
        %v1943 = vadd.f32 0.0, %v1942
        %v1944 = vpop.f32.mrb[0].mxu0
        %1945 = vmatprep.mubr.f32.mxu0 %v1739
        %1946 = vmatmul.mubr.f32.gmra.mrb[0].mxu0 %v1738
        %v1947 = vpop.f32.mrb[0].mxu0
        %v1948 = vadd.f32 0.0, %v1947
        %v1949 = vpop.f32.mrb[0].mxu0
        %1950 = vdwg.mxu0
        %1951 = vmatprep.subr.mxu0 0.0
        %1952 = vmatpush1.msra.mxu0 %v1774
        %1953 = vmatprep.subr.mxu0 0.0
        %1954 = vmatpush1.msra.mxu0 %v1775
        %1955 = vmatprep.subr.mxu0 0.0
        %1956 = vmatpush1.msra.mxu0 %v1776
        %1957 = vmatprep.subr.mxu0 0.0
        %1958 = vmatpush1.msra.mxu0 %v1777
        %1959 = vmatprep.subr.mxu0 0.0
        %1960 = vmatpush1.msra.mxu0 %v1778
        %1961 = vmatprep.subr.mxu0 0.0
        %1962 = vmatpush1.msra.mxu0 %v1779
        %1963 = vmatprep.subr.mxu0 0.0
        %1964 = vmatpush1.msra.mxu0 %v1780
        %1965 = vmatprep.subr.mxu0 0.0
        %1966 = vmatpush1.msra.mxu0 %v1781
        %1967 = vmatprep.subr.mxu0 0.0
        %1968 = vmatpush1.msra.mxu0 %v1782
        %1969 = vmatprep.subr.mxu0 0.0
        %1970 = vmatpush1.msra.mxu0 %v1783
        %1971 = vmatprep.subr.mxu0 0.0
        %1972 = vmatpush1.msra.mxu0 %v1784
        %1973 = vmatprep.subr.mxu0 0.0
        %1974 = vmatpush1.msra.mxu0 %v1785
        %1975 = vmatprep.subr.mxu0 0.0
        %1976 = vmatpush1.msra.mxu0 %v1786
        %1977 = vmatprep.subr.mxu0 0.0
        %1978 = vmatpush1.msra.mxu0 %v1787
        %1979 = vmatprep.subr.mxu0 0.0
        %1980 = vmatpush1.msra.mxu0 %v1788
        %1981 = vmatprep.subr.mxu0 0.0
        %1982 = vmatpush1.msra.mxu0 %v1789
        %1983 = vmatprep.subr.mxu0 0.0
        %1984 = vmatpush1.msra.mxu0 %v1790
        %1985 = vmatprep.subr.mxu0 0.0
        %1986 = vmatpush1.msra.mxu0 %v1791
        %1987 = vmatprep.subr.mxu0 0.0
        %1988 = vmatpush1.msra.mxu0 %v1792
        %1989 = vmatprep.subr.mxu0 0.0
        %1990 = vmatpush1.msra.mxu0 %v1793
        %1991 = vmatprep.subr.mxu0 0.0
        %1992 = vmatpush1.msra.mxu0 %v1794
        %1993 = vmatprep.subr.mxu0 0.0
        %1994 = vmatpush1.msra.mxu0 %v1795
        %1995 = vmatprep.subr.mxu0 0.0
        %1996 = vmatpush1.msra.mxu0 %v1796
        %1997 = vmatprep.subr.mxu0 0.0
        %1998 = vmatpush1.msra.mxu0 %v1797
        %1999 = vmatprep.subr.mxu0 0.0
        %2000 = vmatpush1.msra.mxu0 %v1798
        %2001 = vmatprep.subr.mxu0 0.0
        %2002 = vmatpush1.msra.mxu0 %v1799
        %2003 = vmatprep.subr.mxu0 0.0
        %2004 = vmatpush1.msra.mxu0 %v1800
        %2005 = vmatprep.subr.mxu0 0.0
        %2006 = vmatpush1.msra.mxu0 %v1801
        %2007 = vmatprep.subr.mxu0 0.0
        %2008 = vmatpush1.msra.mxu0 %v1802
        %2009 = vmatprep.subr.mxu0 0.0
        %2010 = vmatpush1.msra.mxu0 %v1803
        %2011 = vmatprep.subr.mxu0 0.0
        %2012 = vmatpush1.msra.mxu0 %v1804
        %2013 = vmatprep.subr.mxu0 0.0
        %2014 = vmatpush1.msra.mxu0 %v1805
        %2015 = vmatprep.mubr.f32.mxu0 %v1681
        %2016 = vmatmul.mubr.f32.gmra.mrb[0].mxu0 %v1680
        %v2017 = vpop.f32.mrb[0].mxu0
        %v2018 = vadd.f32 %v1873, %v2017
        %v2019 = vpop.f32.mrb[0].mxu0
        %2020 = vmatprep.mubr.f32.mxu0 %v1685
        %2021 = vmatmul.mubr.f32.gmra.mrb[0].mxu0 %v1684
        %v2022 = vpop.f32.mrb[0].mxu0
        %v2023 = vadd.f32 %v1878, %v2022
        %v2024 = vpop.f32.mrb[0].mxu0
        %2025 = vmatprep.mubr.f32.mxu0 %v1689
        %2026 = vmatmul.mubr.f32.gmra.mrb[0].mxu0 %v1688
        %v2027 = vpop.f32.mrb[0].mxu0
        %v2028 = vadd.f32 %v1883, %v2027
        %v2029 = vpop.f32.mrb[0].mxu0
        %2030 = vmatprep.mubr.f32.mxu0 %v1693
        %2031 = vmatmul.mubr.f32.gmra.mrb[0].mxu0 %v1692
        %v2032 = vpop.f32.mrb[0].mxu0
        %v2033 = vadd.f32 %v1888, %v2032
        %v2034 = vpop.f32.mrb[0].mxu0
        %2035 = vmatprep.mubr.f32.mxu0 %v1697
        %2036 = vmatmul.mubr.f32.gmra.mrb[0].mxu0 %v1696
        %v2037 = vpop.f32.mrb[0].mxu0
        %v2038 = vadd.f32 %v1893, %v2037
        %v2039 = vpop.f32.mrb[0].mxu0
        %2040 = vmatprep.mubr.f32.mxu0 %v1701
        %2041 = vmatmul.mubr.f32.gmra.mrb[0].mxu0 %v1700
        %v2042 = vpop.f32.mrb[0].mxu0
        %v2043 = vadd.f32 %v1898, %v2042
        %v2044 = vpop.f32.mrb[0].mxu0
        %2045 = vmatprep.mubr.f32.mxu0 %v1705
        %2046 = vmatmul.mubr.f32.gmra.mrb[0].mxu0 %v1704
        %v2047 = vpop.f32.mrb[0].mxu0
        %v2048 = vadd.f32 %v1903, %v2047
        %v2049 = vpop.f32.mrb[0].mxu0
        %2050 = vmatprep.mubr.f32.mxu0 %v1709
        %2051 = vmatmul.mubr.f32.gmra.mrb[0].mxu0 %v1708
        %v2052 = vpop.f32.mrb[0].mxu0
        %v2053 = vadd.f32 %v1908, %v2052
        %v2054 = vpop.f32.mrb[0].mxu0
        %2055 = vmatprep.mubr.f32.mxu0 %v1713
        %2056 = vmatmul.mubr.f32.gmra.mrb[0].mxu0 %v1712
        %v2057 = vpop.f32.mrb[0].mxu0
        %v2058 = vadd.f32 %v1913, %v2057
        %v2059 = vpop.f32.mrb[0].mxu0
        %2060 = vmatprep.mubr.f32.mxu0 %v1717
        %2061 = vmatmul.mubr.f32.gmra.mrb[0].mxu0 %v1716
        %v2062 = vpop.f32.mrb[0].mxu0
        %v2063 = vadd.f32 %v1918, %v2062
        %v2064 = vpop.f32.mrb[0].mxu0
        %2065 = vmatprep.mubr.f32.mxu0 %v1721
        %2066 = vmatmul.mubr.f32.gmra.mrb[0].mxu0 %v1720
        %v2067 = vpop.f32.mrb[0].mxu0
        %v2068 = vadd.f32 %v1923, %v2067
        %v2069 = vpop.f32.mrb[0].mxu0
        %2070 = vmatprep.mubr.f32.mxu0 %v1725
        %2071 = vmatmul.mubr.f32.gmra.mrb[0].mxu0 %v1724
        %v2072 = vpop.f32.mrb[0].mxu0
        %v2073 = vadd.f32 %v1928, %v2072
        %v2074 = vpop.f32.mrb[0].mxu0
        %2075 = vmatprep.mubr.f32.mxu0 %v1729
        %2076 = vmatmul.mubr.f32.gmra.mrb[0].mxu0 %v1728
        %v2077 = vpop.f32.mrb[0].mxu0
        %v2078 = vadd.f32 %v1933, %v2077
        %v2079 = vpop.f32.mrb[0].mxu0
        %2080 = vmatprep.mubr.f32.mxu0 %v1733
        %2081 = vmatmul.mubr.f32.gmra.mrb[0].mxu0 %v1732
        %v2082 = vpop.f32.mrb[0].mxu0
        %v2083 = vadd.f32 %v1938, %v2082
        %v2084 = vpop.f32.mrb[0].mxu0
        %2085 = vmatprep.mubr.f32.mxu0 %v1737
        %2086 = vmatmul.mubr.f32.gmra.mrb[0].mxu0 %v1736
        %v2087 = vpop.f32.mrb[0].mxu0
        %v2088 = vadd.f32 %v1943, %v2087
        %v2089 = vpop.f32.mrb[0].mxu0
        %2090 = vmatprep.mubr.f32.mxu0 %v1741
        %2091 = vmatmul.mubr.f32.gmra.mrb[0].mxu0 %v1740
        %v2092 = vpop.f32.mrb[0].mxu0
        %v2093 = vadd.f32 %v1948, %v2092
        %v2094 = vpop.f32.mrb[0].mxu0
        %2095 = vdwg.mxu0
        %v2096 = vrsqrt.pop %v2018
        %v2097 = vmul.f32 %v2018, %v2096
        %vm2098 = vcmp.eq.f32.partialorder %v2018, inf
        %v2099 = vsel %vm2098, %v2018, %v2097
        %vm2100 = vcmp.eq.f32.partialorder %v2018, 0.0
        %v2101 = vand.u32 %v2018, 2147483648
        %v2102 = vsel %vm2100, %v2101, %v2099
        %v2103 = vrsqrt.pop %v2023
        %v2104 = vmul.f32 %v2023, %v2103
        %vm2105 = vcmp.eq.f32.partialorder %v2023, inf
        %v2106 = vsel %vm2105, %v2023, %v2104
        %vm2107 = vcmp.eq.f32.partialorder %v2023, 0.0
        %v2108 = vand.u32 %v2023, 2147483648
        %v2109 = vsel %vm2107, %v2108, %v2106
        %v2110 = vrsqrt.pop %v2028
        %v2111 = vmul.f32 %v2028, %v2110
        %vm2112 = vcmp.eq.f32.partialorder %v2028, inf
        %v2113 = vsel %vm2112, %v2028, %v2111
        %vm2114 = vcmp.eq.f32.partialorder %v2028, 0.0
        %v2115 = vand.u32 %v2028, 2147483648
        %v2116 = vsel %vm2114, %v2115, %v2113
        %v2117 = vrsqrt.pop %v2033
        %v2118 = vmul.f32 %v2033, %v2117
        %vm2119 = vcmp.eq.f32.partialorder %v2033, inf
        %v2120 = vsel %vm2119, %v2033, %v2118
        %vm2121 = vcmp.eq.f32.partialorder %v2033, 0.0
        %v2122 = vand.u32 %v2033, 2147483648
        %v2123 = vsel %vm2121, %v2122, %v2120
        %v2124 = vrsqrt.pop %v2038
        %v2125 = vmul.f32 %v2038, %v2124
        %vm2126 = vcmp.eq.f32.partialorder %v2038, inf
        %v2127 = vsel %vm2126, %v2038, %v2125
        %vm2128 = vcmp.eq.f32.partialorder %v2038, 0.0
        %v2129 = vand.u32 %v2038, 2147483648
        %v2130 = vsel %vm2128, %v2129, %v2127
        %v2131 = vrsqrt.pop %v2043
        %v2132 = vmul.f32 %v2043, %v2131
        %vm2133 = vcmp.eq.f32.partialorder %v2043, inf
        %v2134 = vsel %vm2133, %v2043, %v2132
        %vm2135 = vcmp.eq.f32.partialorder %v2043, 0.0
        %v2136 = vand.u32 %v2043, 2147483648
        %v2137 = vsel %vm2135, %v2136, %v2134
        %v2138 = vrsqrt.pop %v2048
        %v2139 = vmul.f32 %v2048, %v2138
        %vm2140 = vcmp.eq.f32.partialorder %v2048, inf
        %v2141 = vsel %vm2140, %v2048, %v2139
        %vm2142 = vcmp.eq.f32.partialorder %v2048, 0.0
        %v2143 = vand.u32 %v2048, 2147483648
        %v2144 = vsel %vm2142, %v2143, %v2141
        %v2145 = vrsqrt.pop %v2053
        %v2146 = vmul.f32 %v2053, %v2145
        %vm2147 = vcmp.eq.f32.partialorder %v2053, inf
        %v2148 = vsel %vm2147, %v2053, %v2146
        %vm2149 = vcmp.eq.f32.partialorder %v2053, 0.0
        %v2150 = vand.u32 %v2053, 2147483648
        %v2151 = vsel %vm2149, %v2150, %v2148
        %v2152 = vrsqrt.pop %v2058
        %v2153 = vmul.f32 %v2058, %v2152
        %vm2154 = vcmp.eq.f32.partialorder %v2058, inf
        %v2155 = vsel %vm2154, %v2058, %v2153
        %vm2156 = vcmp.eq.f32.partialorder %v2058, 0.0
        %v2157 = vand.u32 %v2058, 2147483648
        %v2158 = vsel %vm2156, %v2157, %v2155
        %v2159 = vrsqrt.pop %v2063
        %v2160 = vmul.f32 %v2063, %v2159
        %vm2161 = vcmp.eq.f32.partialorder %v2063, inf
        %v2162 = vsel %vm2161, %v2063, %v2160
        %vm2163 = vcmp.eq.f32.partialorder %v2063, 0.0
        %v2164 = vand.u32 %v2063, 2147483648
        %v2165 = vsel %vm2163, %v2164, %v2162
        %v2166 = vrsqrt.pop %v2068
        %v2167 = vmul.f32 %v2068, %v2166
        %vm2168 = vcmp.eq.f32.partialorder %v2068, inf
        %v2169 = vsel %vm2168, %v2068, %v2167
        %vm2170 = vcmp.eq.f32.partialorder %v2068, 0.0
        %v2171 = vand.u32 %v2068, 2147483648
        %v2172 = vsel %vm2170, %v2171, %v2169
        %v2173 = vrsqrt.pop %v2073
        %v2174 = vmul.f32 %v2073, %v2173
        %vm2175 = vcmp.eq.f32.partialorder %v2073, inf
        %v2176 = vsel %vm2175, %v2073, %v2174
        %vm2177 = vcmp.eq.f32.partialorder %v2073, 0.0
        %v2178 = vand.u32 %v2073, 2147483648
        %v2179 = vsel %vm2177, %v2178, %v2176
        %v2180 = vrsqrt.pop %v2078
        %v2181 = vmul.f32 %v2078, %v2180
        %vm2182 = vcmp.eq.f32.partialorder %v2078, inf
        %v2183 = vsel %vm2182, %v2078, %v2181
        %vm2184 = vcmp.eq.f32.partialorder %v2078, 0.0
        %v2185 = vand.u32 %v2078, 2147483648
        %v2186 = vsel %vm2184, %v2185, %v2183
        %v2187 = vrsqrt.pop %v2083
        %v2188 = vmul.f32 %v2083, %v2187
        %vm2189 = vcmp.eq.f32.partialorder %v2083, inf
        %v2190 = vsel %vm2189, %v2083, %v2188
        %vm2191 = vcmp.eq.f32.partialorder %v2083, 0.0
        %v2192 = vand.u32 %v2083, 2147483648
        %v2193 = vsel %vm2191, %v2192, %v2190
        %v2194 = vrsqrt.pop %v2088
        %v2195 = vmul.f32 %v2088, %v2194
        %vm2196 = vcmp.eq.f32.partialorder %v2088, inf
        %v2197 = vsel %vm2196, %v2088, %v2195
        %vm2198 = vcmp.eq.f32.partialorder %v2088, 0.0
        %v2199 = vand.u32 %v2088, 2147483648
        %v2200 = vsel %vm2198, %v2199, %v2197
        %v2201 = vrsqrt.pop %v2093
        %v2202 = vmul.f32 %v2093, %v2201
        %vm2203 = vcmp.eq.f32.partialorder %v2093, inf
        %v2204 = vsel %vm2203, %v2093, %v2202
        %vm2205 = vcmp.eq.f32.partialorder %v2093, 0.0
        %v2206 = vand.u32 %v2093, 2147483648
        %v2207 = vsel %vm2205, %v2206, %v2204
        %v2208 = vmax.f32 %v2102, 1e-12
        %v2209 = vmax.f32 %v2109, 1e-12
        %v2210 = vmax.f32 %v2116, 1e-12
        %v2211 = vmax.f32 %v2123, 1e-12
        %v2212 = vmax.f32 %v2130, 1e-12
        %v2213 = vmax.f32 %v2137, 1e-12
        %v2214 = vmax.f32 %v2144, 1e-12
        %v2215 = vmax.f32 %v2151, 1e-12
        %v2216 = vmax.f32 %v2158, 1e-12
        %v2217 = vmax.f32 %v2165, 1e-12
        %v2218 = vmax.f32 %v2172, 1e-12
        %v2219 = vmax.f32 %v2179, 1e-12
        %v2220 = vmax.f32 %v2186, 1e-12
        %v2221 = vmax.f32 %v2193, 1e-12
        %v2222 = vmax.f32 %v2200, 1e-12
        %v2223 = vmax.f32 %v2207, 1e-12
        %v2224 = vrcp.pop %v2208
        %v2225 = vmul.f32 1.0, %v2224
        %v2226 = vrcp.pop %v2209
        %v2227 = vmul.f32 1.0, %v2226
        %v2228 = vrcp.pop %v2210
        %v2229 = vmul.f32 1.0, %v2228
        %v2230 = vrcp.pop %v2211
        %v2231 = vmul.f32 1.0, %v2230
        %v2232 = vrcp.pop %v2212
        %v2233 = vmul.f32 1.0, %v2232
        %v2234 = vrcp.pop %v2213
        %v2235 = vmul.f32 1.0, %v2234
        %v2236 = vrcp.pop %v2214
        %v2237 = vmul.f32 1.0, %v2236
        %v2238 = vrcp.pop %v2215
        %v2239 = vmul.f32 1.0, %v2238
        %v2240 = vrcp.pop %v2216
        %v2241 = vmul.f32 1.0, %v2240
        %v2242 = vrcp.pop %v2217
        %v2243 = vmul.f32 1.0, %v2242
        %v2244 = vrcp.pop %v2218
        %v2245 = vmul.f32 1.0, %v2244
        %v2246 = vrcp.pop %v2219
        %v2247 = vmul.f32 1.0, %v2246
        %v2248 = vrcp.pop %v2220
        %v2249 = vmul.f32 1.0, %v2248
        %v2250 = vrcp.pop %v2221
        %v2251 = vmul.f32 1.0, %v2250
        %v2252 = vrcp.pop %v2222
        %v2253 = vmul.f32 1.0, %v2252
        %v2254 = vrcp.pop %v2223
        %v2255 = vmul.f32 1.0, %v2254
        %v2257 = vsel %vm763, %v2225, 0
        %v2260 = vsel %vm763, %v2227, 0
        %v2263 = vsel %vm763, %v2229, 0
        %v2266 = vsel %vm763, %v2231, 0
        %v2269 = vsel %vm763, %v2233, 0
        %v2272 = vsel %vm763, %v2235, 0
        %v2275 = vsel %vm763, %v2237, 0
        %v2278 = vsel %vm763, %v2239, 0
        %v2281 = vsel %vm763, %v2241, 0
        %v2284 = vsel %vm763, %v2243, 0
        %v2287 = vsel %vm763, %v2245, 0
        %v2290 = vsel %vm763, %v2247, 0
        %v2293 = vsel %vm763, %v2249, 0
        %v2296 = vsel %vm763, %v2251, 0
        %v2299 = vsel %vm763, %v2253, 0
        %v2302 = vsel %vm763, %v2255, 0
        %2304 = vmatprep.subr.mxu0 %v1151
        %2305 = vmatpush1.msra.mxu0 %v1150
        %2306 = vmatprep.subr.mxu0 %v1155
        %2307 = vmatpush1.msra.mxu0 %v1154
        %2308 = vmatprep.subr.mxu0 0.0
        %2309 = vmatpush1.msra.mxu0 0.0
        %2310 = vmatprep.subr.mxu0 0.0
        %2311 = vmatpush1.msra.mxu0 0.0
        %2312 = vmatprep.subr.mxu0 0.0
        %2313 = vmatpush1.msra.mxu0 0.0
        %2314 = vmatprep.subr.mxu0 0.0
        %2315 = vmatpush1.msra.mxu0 0.0
        %2316 = vmatprep.subr.mxu0 0.0
        %2317 = vmatpush1.msra.mxu0 0.0
        %2318 = vmatprep.subr.mxu0 0.0
        %2319 = vmatpush1.msra.mxu0 0.0
        %2320 = vmatprep.subr.mxu0 0.0
        %2321 = vmatpush1.msra.mxu0 0.0
        %2322 = vmatprep.subr.mxu0 0.0
        %2323 = vmatpush1.msra.mxu0 0.0
        %2324 = vmatprep.subr.mxu0 0.0
        %2325 = vmatpush1.msra.mxu0 0.0
        %2326 = vmatprep.subr.mxu0 0.0
        %2327 = vmatpush1.msra.mxu0 0.0
        %2328 = vmatprep.subr.mxu0 0.0
        %2329 = vmatpush1.msra.mxu0 0.0
        %2330 = vmatprep.subr.mxu0 0.0
        %2331 = vmatpush1.msra.mxu0 0.0
        %2332 = vmatprep.subr.mxu0 0.0
        %2333 = vmatpush1.msra.mxu0 0.0
        %2334 = vmatprep.subr.mxu0 0.0
        %2335 = vmatpush1.msra.mxu0 0.0
        %2336 = vmatprep.subr.mxu0 0.0
        %2337 = vmatpush1.msra.mxu0 0.0
        %2338 = vmatprep.subr.mxu0 0.0
        %2339 = vmatpush1.msra.mxu0 0.0
        %2340 = vmatprep.subr.mxu0 0.0
        %2341 = vmatpush1.msra.mxu0 0.0
        %2342 = vmatprep.subr.mxu0 0.0
        %2343 = vmatpush1.msra.mxu0 0.0
        %2344 = vmatprep.subr.mxu0 0.0
        %2345 = vmatpush1.msra.mxu0 0.0
        %2346 = vmatprep.subr.mxu0 0.0
        %2347 = vmatpush1.msra.mxu0 0.0
        %2348 = vmatprep.subr.mxu0 0.0
        %2349 = vmatpush1.msra.mxu0 0.0
        %2350 = vmatprep.subr.mxu0 0.0
        %2351 = vmatpush1.msra.mxu0 0.0
        %2352 = vmatprep.subr.mxu0 0.0
        %2353 = vmatpush1.msra.mxu0 0.0
        %2354 = vmatprep.subr.mxu0 0.0
        %2355 = vmatpush1.msra.mxu0 0.0
        %2356 = vmatprep.subr.mxu0 0.0
        %2357 = vmatpush1.msra.mxu0 0.0
        %2358 = vmatprep.subr.mxu0 0.0
        %2359 = vmatpush1.msra.mxu0 0.0
        %2360 = vmatprep.subr.mxu0 0.0
        %2361 = vmatpush1.msra.mxu0 0.0
        %2362 = vmatprep.subr.mxu0 0.0
        %2363 = vmatpush1.msra.mxu0 0.0
        %2364 = vmatprep.subr.mxu0 0.0
        %2365 = vmatpush1.msra.mxu0 0.0
        %2366 = vmatprep.subr.mxu0 0.0
        %2367 = vmatpush1.msra.mxu0 0.0
        %2368 = vmatprep.mubr.f32.mxu0 0.0
        %2369 = vmatmul.mubr.f32.gmra.mrb[0].mxu0 %v2257
        %v2370 = vpop.f32.mrb[0].mxu0
        %v2371 = vadd.f32 0.0, %v2370
        %v2372 = vpop.f32.mrb[0].mxu0
        %v2373 = vadd.f32 0.0, %v2372
        %2374 = vmatprep.mubr.f32.mxu0 0.0
        %2375 = vmatmul.mubr.f32.gmra.mrb[0].mxu0 %v2260
        %v2376 = vpop.f32.mrb[0].mxu0
        %v2377 = vadd.f32 0.0, %v2376
        %v2378 = vpop.f32.mrb[0].mxu0
        %v2379 = vadd.f32 0.0, %v2378
        %2380 = vmatprep.mubr.f32.mxu0 0.0
        %2381 = vmatmul.mubr.f32.gmra.mrb[0].mxu0 %v2263
        %v2382 = vpop.f32.mrb[0].mxu0
        %v2383 = vadd.f32 0.0, %v2382
        %v2384 = vpop.f32.mrb[0].mxu0
        %v2385 = vadd.f32 0.0, %v2384
        %2386 = vmatprep.mubr.f32.mxu0 0.0
        %2387 = vmatmul.mubr.f32.gmra.mrb[0].mxu0 %v2266
        %v2388 = vpop.f32.mrb[0].mxu0
        %v2389 = vadd.f32 0.0, %v2388
        %v2390 = vpop.f32.mrb[0].mxu0
        %v2391 = vadd.f32 0.0, %v2390
        %2392 = vmatprep.mubr.f32.mxu0 0.0
        %2393 = vmatmul.mubr.f32.gmra.mrb[0].mxu0 %v2269
        %v2394 = vpop.f32.mrb[0].mxu0
        %v2395 = vadd.f32 0.0, %v2394
        %v2396 = vpop.f32.mrb[0].mxu0
        %v2397 = vadd.f32 0.0, %v2396
        %2398 = vmatprep.mubr.f32.mxu0 0.0
        %2399 = vmatmul.mubr.f32.gmra.mrb[0].mxu0 %v2272
        %v2400 = vpop.f32.mrb[0].mxu0
        %v2401 = vadd.f32 0.0, %v2400
        %v2402 = vpop.f32.mrb[0].mxu0
        %v2403 = vadd.f32 0.0, %v2402
        %2404 = vmatprep.mubr.f32.mxu0 0.0
        %2405 = vmatmul.mubr.f32.gmra.mrb[0].mxu0 %v2275
        %v2406 = vpop.f32.mrb[0].mxu0
        %v2407 = vadd.f32 0.0, %v2406
        %v2408 = vpop.f32.mrb[0].mxu0
        %v2409 = vadd.f32 0.0, %v2408
        %2410 = vmatprep.mubr.f32.mxu0 0.0
        %2411 = vmatmul.mubr.f32.gmra.mrb[0].mxu0 %v2278
        %v2412 = vpop.f32.mrb[0].mxu0
        %v2413 = vadd.f32 0.0, %v2412
        %v2414 = vpop.f32.mrb[0].mxu0
        %v2415 = vadd.f32 0.0, %v2414
        %2416 = vmatprep.mubr.f32.mxu0 0.0
        %2417 = vmatmul.mubr.f32.gmra.mrb[0].mxu0 %v2281
        %v2418 = vpop.f32.mrb[0].mxu0
        %v2419 = vadd.f32 0.0, %v2418
        %v2420 = vpop.f32.mrb[0].mxu0
        %v2421 = vadd.f32 0.0, %v2420
        %2422 = vmatprep.mubr.f32.mxu0 0.0
        %2423 = vmatmul.mubr.f32.gmra.mrb[0].mxu0 %v2284
        %v2424 = vpop.f32.mrb[0].mxu0
        %v2425 = vadd.f32 0.0, %v2424
        %v2426 = vpop.f32.mrb[0].mxu0
        %v2427 = vadd.f32 0.0, %v2426
        %2428 = vmatprep.mubr.f32.mxu0 0.0
        %2429 = vmatmul.mubr.f32.gmra.mrb[0].mxu0 %v2287
        %v2430 = vpop.f32.mrb[0].mxu0
        %v2431 = vadd.f32 0.0, %v2430
        %v2432 = vpop.f32.mrb[0].mxu0
        %v2433 = vadd.f32 0.0, %v2432
        %2434 = vmatprep.mubr.f32.mxu0 0.0
        %2435 = vmatmul.mubr.f32.gmra.mrb[0].mxu0 %v2290
        %v2436 = vpop.f32.mrb[0].mxu0
        %v2437 = vadd.f32 0.0, %v2436
        %v2438 = vpop.f32.mrb[0].mxu0
        %v2439 = vadd.f32 0.0, %v2438
        %2440 = vmatprep.mubr.f32.mxu0 0.0
        %2441 = vmatmul.mubr.f32.gmra.mrb[0].mxu0 %v2293
        %v2442 = vpop.f32.mrb[0].mxu0
        %v2443 = vadd.f32 0.0, %v2442
        %v2444 = vpop.f32.mrb[0].mxu0
        %v2445 = vadd.f32 0.0, %v2444
        %2446 = vmatprep.mubr.f32.mxu0 0.0
        %2447 = vmatmul.mubr.f32.gmra.mrb[0].mxu0 %v2296
        %v2448 = vpop.f32.mrb[0].mxu0
        %v2449 = vadd.f32 0.0, %v2448
        %v2450 = vpop.f32.mrb[0].mxu0
        %v2451 = vadd.f32 0.0, %v2450
        %2452 = vmatprep.mubr.f32.mxu0 0.0
        %2453 = vmatmul.mubr.f32.gmra.mrb[0].mxu0 %v2299
        %v2454 = vpop.f32.mrb[0].mxu0
        %v2455 = vadd.f32 0.0, %v2454
        %v2456 = vpop.f32.mrb[0].mxu0
        %v2457 = vadd.f32 0.0, %v2456
        %2458 = vmatprep.mubr.f32.mxu0 0.0
        %2459 = vmatmul.mubr.f32.gmra.mrb[0].mxu0 %v2302
        %v2460 = vpop.f32.mrb[0].mxu0
        %v2461 = vadd.f32 0.0, %v2460
        %v2462 = vpop.f32.mrb[0].mxu0
        %v2463 = vadd.f32 0.0, %v2462
        %2464 = vdwg.mxu0
        %2465 = vmatprep.subr.mxu0 %v1153
        %2466 = vmatpush1.msra.mxu0 %v1152
        %2467 = vmatprep.subr.mxu0 %v1157
        %2468 = vmatpush1.msra.mxu0 %v1156
        %2469 = vmatprep.subr.mxu0 0.0
        %2470 = vmatpush1.msra.mxu0 0.0
        %2471 = vmatprep.subr.mxu0 0.0
        %2472 = vmatpush1.msra.mxu0 0.0
        %2473 = vmatprep.subr.mxu0 0.0
        %2474 = vmatpush1.msra.mxu0 0.0
        %2475 = vmatprep.subr.mxu0 0.0
        %2476 = vmatpush1.msra.mxu0 0.0
        %2477 = vmatprep.subr.mxu0 0.0
        %2478 = vmatpush1.msra.mxu0 0.0
        %2479 = vmatprep.subr.mxu0 0.0
        %2480 = vmatpush1.msra.mxu0 0.0
        %2481 = vmatprep.subr.mxu0 0.0
        %2482 = vmatpush1.msra.mxu0 0.0
        %2483 = vmatprep.subr.mxu0 0.0
        %2484 = vmatpush1.msra.mxu0 0.0
        %2485 = vmatprep.subr.mxu0 0.0
        %2486 = vmatpush1.msra.mxu0 0.0
        %2487 = vmatprep.subr.mxu0 0.0
        %2488 = vmatpush1.msra.mxu0 0.0
        %2489 = vmatprep.subr.mxu0 0.0
        %2490 = vmatpush1.msra.mxu0 0.0
        %2491 = vmatprep.subr.mxu0 0.0
        %2492 = vmatpush1.msra.mxu0 0.0
        %2493 = vmatprep.subr.mxu0 0.0
        %2494 = vmatpush1.msra.mxu0 0.0
        %2495 = vmatprep.subr.mxu0 0.0
        %2496 = vmatpush1.msra.mxu0 0.0
        %2497 = vmatprep.subr.mxu0 0.0
        %2498 = vmatpush1.msra.mxu0 0.0
        %2499 = vmatprep.subr.mxu0 0.0
        %2500 = vmatpush1.msra.mxu0 0.0
        %2501 = vmatprep.subr.mxu0 0.0
        %2502 = vmatpush1.msra.mxu0 0.0
        %2503 = vmatprep.subr.mxu0 0.0
        %2504 = vmatpush1.msra.mxu0 0.0
        %2505 = vmatprep.subr.mxu0 0.0
        %2506 = vmatpush1.msra.mxu0 0.0
        %2507 = vmatprep.subr.mxu0 0.0
        %2508 = vmatpush1.msra.mxu0 0.0
        %2509 = vmatprep.subr.mxu0 0.0
        %2510 = vmatpush1.msra.mxu0 0.0
        %2511 = vmatprep.subr.mxu0 0.0
        %2512 = vmatpush1.msra.mxu0 0.0
        %2513 = vmatprep.subr.mxu0 0.0
        %2514 = vmatpush1.msra.mxu0 0.0
        %2515 = vmatprep.subr.mxu0 0.0
        %2516 = vmatpush1.msra.mxu0 0.0
        %2517 = vmatprep.subr.mxu0 0.0
        %2518 = vmatpush1.msra.mxu0 0.0
        %2519 = vmatprep.subr.mxu0 0.0
        %2520 = vmatpush1.msra.mxu0 0.0
        %2521 = vmatprep.subr.mxu0 0.0
        %2522 = vmatpush1.msra.mxu0 0.0
        %2523 = vmatprep.subr.mxu0 0.0
        %2524 = vmatpush1.msra.mxu0 0.0
        %2525 = vmatprep.subr.mxu0 0.0
        %2526 = vmatpush1.msra.mxu0 0.0
        %2527 = vmatprep.subr.mxu0 0.0
        %2528 = vmatpush1.msra.mxu0 0.0
        %2529 = vmatprep.mubr.f32.mxu0 0.0
        %2530 = vmatmul.mubr.f32.gmra.mrb[0].mxu0 %v2257
        %v2531 = vpop.f32.mrb[0].mxu0
        %v2532 = vadd.f32 0.0, %v2531
        %v2533 = vpop.f32.mrb[0].mxu0
        %v2534 = vadd.f32 0.0, %v2533
        %2535 = vmatprep.mubr.f32.mxu0 0.0
        %2536 = vmatmul.mubr.f32.gmra.mrb[0].mxu0 %v2260
        %v2537 = vpop.f32.mrb[0].mxu0
        %v2538 = vadd.f32 0.0, %v2537
        %v2539 = vpop.f32.mrb[0].mxu0
        %v2540 = vadd.f32 0.0, %v2539
        %2541 = vmatprep.mubr.f32.mxu0 0.0
        %2542 = vmatmul.mubr.f32.gmra.mrb[0].mxu0 %v2263
        %v2543 = vpop.f32.mrb[0].mxu0
        %v2544 = vadd.f32 0.0, %v2543
        %v2545 = vpop.f32.mrb[0].mxu0
        %v2546 = vadd.f32 0.0, %v2545
        %2547 = vmatprep.mubr.f32.mxu0 0.0
        %2548 = vmatmul.mubr.f32.gmra.mrb[0].mxu0 %v2266
        %v2549 = vpop.f32.mrb[0].mxu0
        %v2550 = vadd.f32 0.0, %v2549
        %v2551 = vpop.f32.mrb[0].mxu0
        %v2552 = vadd.f32 0.0, %v2551
        %2553 = vmatprep.mubr.f32.mxu0 0.0
        %2554 = vmatmul.mubr.f32.gmra.mrb[0].mxu0 %v2269
        %v2555 = vpop.f32.mrb[0].mxu0
        %v2556 = vadd.f32 0.0, %v2555
        %v2557 = vpop.f32.mrb[0].mxu0
        %v2558 = vadd.f32 0.0, %v2557
        %2559 = vmatprep.mubr.f32.mxu0 0.0
        %2560 = vmatmul.mubr.f32.gmra.mrb[0].mxu0 %v2272
        %v2561 = vpop.f32.mrb[0].mxu0
        %v2562 = vadd.f32 0.0, %v2561
        %v2563 = vpop.f32.mrb[0].mxu0
        %v2564 = vadd.f32 0.0, %v2563
        %2565 = vmatprep.mubr.f32.mxu0 0.0
        %2566 = vmatmul.mubr.f32.gmra.mrb[0].mxu0 %v2275
        %v2567 = vpop.f32.mrb[0].mxu0
        %v2568 = vadd.f32 0.0, %v2567
        %v2569 = vpop.f32.mrb[0].mxu0
        %v2570 = vadd.f32 0.0, %v2569
        %2571 = vmatprep.mubr.f32.mxu0 0.0
        %2572 = vmatmul.mubr.f32.gmra.mrb[0].mxu0 %v2278
        %v2573 = vpop.f32.mrb[0].mxu0
        %v2574 = vadd.f32 0.0, %v2573
        %v2575 = vpop.f32.mrb[0].mxu0
        %v2576 = vadd.f32 0.0, %v2575
        %2577 = vmatprep.mubr.f32.mxu0 0.0
        %2578 = vmatmul.mubr.f32.gmra.mrb[0].mxu0 %v2281
        %v2579 = vpop.f32.mrb[0].mxu0
        %v2580 = vadd.f32 0.0, %v2579
        %v2581 = vpop.f32.mrb[0].mxu0
        %v2582 = vadd.f32 0.0, %v2581
        %2583 = vmatprep.mubr.f32.mxu0 0.0
        %2584 = vmatmul.mubr.f32.gmra.mrb[0].mxu0 %v2284
        %v2585 = vpop.f32.mrb[0].mxu0
        %v2586 = vadd.f32 0.0, %v2585
        %v2587 = vpop.f32.mrb[0].mxu0
        %v2588 = vadd.f32 0.0, %v2587
        %2589 = vmatprep.mubr.f32.mxu0 0.0
        %2590 = vmatmul.mubr.f32.gmra.mrb[0].mxu0 %v2287
        %v2591 = vpop.f32.mrb[0].mxu0
        %v2592 = vadd.f32 0.0, %v2591
        %v2593 = vpop.f32.mrb[0].mxu0
        %v2594 = vadd.f32 0.0, %v2593
        %2595 = vmatprep.mubr.f32.mxu0 0.0
        %2596 = vmatmul.mubr.f32.gmra.mrb[0].mxu0 %v2290
        %v2597 = vpop.f32.mrb[0].mxu0
        %v2598 = vadd.f32 0.0, %v2597
        %v2599 = vpop.f32.mrb[0].mxu0
        %v2600 = vadd.f32 0.0, %v2599
        %2601 = vmatprep.mubr.f32.mxu0 0.0
        %2602 = vmatmul.mubr.f32.gmra.mrb[0].mxu0 %v2293
        %v2603 = vpop.f32.mrb[0].mxu0
        %v2604 = vadd.f32 0.0, %v2603
        %v2605 = vpop.f32.mrb[0].mxu0
        %v2606 = vadd.f32 0.0, %v2605
        %2607 = vmatprep.mubr.f32.mxu0 0.0
        %2608 = vmatmul.mubr.f32.gmra.mrb[0].mxu0 %v2296
        %v2609 = vpop.f32.mrb[0].mxu0
        %v2610 = vadd.f32 0.0, %v2609
        %v2611 = vpop.f32.mrb[0].mxu0
        %v2612 = vadd.f32 0.0, %v2611
        %2613 = vmatprep.mubr.f32.mxu0 0.0
        %2614 = vmatmul.mubr.f32.gmra.mrb[0].mxu0 %v2299
        %v2615 = vpop.f32.mrb[0].mxu0
        %v2616 = vadd.f32 0.0, %v2615
        %v2617 = vpop.f32.mrb[0].mxu0
        %v2618 = vadd.f32 0.0, %v2617
        %2619 = vmatprep.mubr.f32.mxu0 0.0
        %2620 = vmatmul.mubr.f32.gmra.mrb[0].mxu0 %v2302
        %v2621 = vpop.f32.mrb[0].mxu0
        %v2622 = vadd.f32 0.0, %v2621
        %v2623 = vpop.f32.mrb[0].mxu0
        %v2624 = vadd.f32 0.0, %v2623
        %2625 = vdwg.mxu0
        %v2626 = vmul.f32 %v1614, %v2371
        %v2627 = vmul.f32 %v1615, %v2373
        %v2628 = vmul.f32 %v1616, %v2532
        %v2629 = vmul.f32 %v1617, %v2534
        %v2630 = vmul.f32 %v1618, %v2377
        %v2631 = vmul.f32 %v1619, %v2379
        %v2632 = vmul.f32 %v1620, %v2538
        %v2633 = vmul.f32 %v1621, %v2540
        %v2634 = vmul.f32 %v1622, %v2383
        %v2635 = vmul.f32 %v1623, %v2385
        %v2636 = vmul.f32 %v1624, %v2544
        %v2637 = vmul.f32 %v1625, %v2546
        %v2638 = vmul.f32 %v1626, %v2389
        %v2639 = vmul.f32 %v1627, %v2391
        %v2640 = vmul.f32 %v1628, %v2550
        %v2641 = vmul.f32 %v1629, %v2552
        %v2642 = vmul.f32 %v1630, %v2395
        %v2643 = vmul.f32 %v1631, %v2397
        %v2644 = vmul.f32 %v1632, %v2556
        %v2645 = vmul.f32 %v1633, %v2558
        %v2646 = vmul.f32 %v1634, %v2401
        %v2647 = vmul.f32 %v1635, %v2403
        %v2648 = vmul.f32 %v1636, %v2562
        %v2649 = vmul.f32 %v1637, %v2564
        %v2650 = vmul.f32 %v1638, %v2407
        %v2651 = vmul.f32 %v1639, %v2409
        %v2652 = vmul.f32 %v1640, %v2568
        %v2653 = vmul.f32 %v1641, %v2570
        %v2654 = vmul.f32 %v1642, %v2413
        %v2655 = vmul.f32 %v1643, %v2415
        %v2656 = vmul.f32 %v1644, %v2574
        %v2657 = vmul.f32 %v1645, %v2576
        %v2658 = vmul.f32 %v1646, %v2419
        %v2659 = vmul.f32 %v1647, %v2421
        %v2660 = vmul.f32 %v1648, %v2580
        %v2661 = vmul.f32 %v1649, %v2582
        %v2662 = vmul.f32 %v1650, %v2425
        %v2663 = vmul.f32 %v1651, %v2427
        %v2664 = vmul.f32 %v1652, %v2586
        %v2665 = vmul.f32 %v1653, %v2588
        %v2666 = vmul.f32 %v1654, %v2431
        %v2667 = vmul.f32 %v1655, %v2433
        %v2668 = vmul.f32 %v1656, %v2592
        %v2669 = vmul.f32 %v1657, %v2594
        %v2670 = vmul.f32 %v1658, %v2437
        %v2671 = vmul.f32 %v1659, %v2439
        %v2672 = vmul.f32 %v1660, %v2598
        %v2673 = vmul.f32 %v1661, %v2600
        %v2674 = vmul.f32 %v1662, %v2443
        %v2675 = vmul.f32 %v1663, %v2445
        %v2676 = vmul.f32 %v1664, %v2604
        %v2677 = vmul.f32 %v1665, %v2606
        %v2678 = vmul.f32 %v1666, %v2449
        %v2679 = vmul.f32 %v1667, %v2451
        %v2680 = vmul.f32 %v1668, %v2610
        %v2681 = vmul.f32 %v1669, %v2612
        %v2682 = vmul.f32 %v1670, %v2455
        %v2683 = vmul.f32 %v1671, %v2457
        %v2684 = vmul.f32 %v1672, %v2616
        %v2685 = vmul.f32 %v1673, %v2618
        %v2686 = vmul.f32 %v1674, %v2461
        %v2687 = vmul.f32 %v1675, %v2463
        %v2688 = vmul.f32 %v1676, %v2622
        %v2689 = vmul.f32 %v1677, %v2624
        %v2690 = vld [vmem:[%s299] sm:$0xff]
        %v2691 = vld [vmem:[%s299 + $0x8] sm:$0xff]
        %v2692 = vld [vmem:[%s299 + $0x10] sm:$0xff]
        %v2693 = vld [vmem:[%s299 + $0x18] sm:$0xff]
        %v2694 = vld [vmem:[%s299 + $0x20] sm:$0xff]
        %v2695 = vld [vmem:[%s299 + $0x28] sm:$0xff]
        %v2696 = vld [vmem:[%s299 + $0x30] sm:$0xff]
        %v2697 = vld [vmem:[%s299 + $0x38] sm:$0xff]
        %v2698 = vld [vmem:[%s299 + $0x40] sm:$0xff]
        %v2699 = vld [vmem:[%s299 + $0x48] sm:$0xff]
        %v2700 = vld [vmem:[%s299 + $0x50] sm:$0xff]
        %v2701 = vld [vmem:[%s299 + $0x58] sm:$0xff]
        %v2702 = vld [vmem:[%s299 + $0x60] sm:$0xff]
        %v2703 = vld [vmem:[%s299 + $0x68] sm:$0xff]
        %v2704 = vld [vmem:[%s299 + $0x70] sm:$0xff]
        %v2705 = vld [vmem:[%s299 + $0x78] sm:$0xff]
        %2707 = vset.pattern.permute.xlu0 0
        %2708 = vperm.xlu0 %2707, %v2690
        %v2709 = vpop.permute.xlu0 %2708
        %2712 = vset.pattern.permute.xlu0 0
        %2713 = vperm.xlu0 %2712, %v2691
        %v2714 = vpop.permute.xlu0 %2713
        %2717 = vset.pattern.permute.xlu0 0
        %2718 = vperm.xlu0 %2717, %v2692
        %v2719 = vpop.permute.xlu0 %2718
        %2722 = vset.pattern.permute.xlu0 0
        %2723 = vperm.xlu0 %2722, %v2693
        %v2724 = vpop.permute.xlu0 %2723
        %2727 = vset.pattern.permute.xlu0 0
        %2728 = vperm.xlu0 %2727, %v2694
        %v2729 = vpop.permute.xlu0 %2728
        %2732 = vset.pattern.permute.xlu0 0
        %2733 = vperm.xlu0 %2732, %v2695
        %v2734 = vpop.permute.xlu0 %2733
        %2737 = vset.pattern.permute.xlu0 0
        %2738 = vperm.xlu0 %2737, %v2696
        %v2739 = vpop.permute.xlu0 %2738
        %2742 = vset.pattern.permute.xlu0 0
        %2743 = vperm.xlu0 %2742, %v2697
        %v2744 = vpop.permute.xlu0 %2743
        %2747 = vset.pattern.permute.xlu0 0
        %2748 = vperm.xlu0 %2747, %v2698
        %v2749 = vpop.permute.xlu0 %2748
        %2752 = vset.pattern.permute.xlu0 0
        %2753 = vperm.xlu0 %2752, %v2699
        %v2754 = vpop.permute.xlu0 %2753
        %2757 = vset.pattern.permute.xlu0 0
        %2758 = vperm.xlu0 %2757, %v2700
        %v2759 = vpop.permute.xlu0 %2758
        %2762 = vset.pattern.permute.xlu0 0
        %2763 = vperm.xlu0 %2762, %v2701
        %v2764 = vpop.permute.xlu0 %2763
        %2767 = vset.pattern.permute.xlu0 0
        %2768 = vperm.xlu0 %2767, %v2702
        %v2769 = vpop.permute.xlu0 %2768
        %2772 = vset.pattern.permute.xlu0 0
        %2773 = vperm.xlu0 %2772, %v2703
        %v2774 = vpop.permute.xlu0 %2773
        %2777 = vset.pattern.permute.xlu0 0
        %2778 = vperm.xlu0 %2777, %v2704
        %v2779 = vpop.permute.xlu0 %2778
        %2782 = vset.pattern.permute.xlu0 0
        %2783 = vperm.xlu0 %2782, %v2705
        %v2784 = vpop.permute.xlu0 %2783
        %v2786 = vmul.f32 %v2626, %v2709
        %v2787 = vmul.f32 %v2627, %v2709
        %v2788 = vmul.f32 %v2628, %v2709
        %v2789 = vmul.f32 %v2629, %v2709
        %v2790 = vmul.f32 %v2630, %v2714
        %v2791 = vmul.f32 %v2631, %v2714
        %v2792 = vmul.f32 %v2632, %v2714
        %v2793 = vmul.f32 %v2633, %v2714
        %v2794 = vmul.f32 %v2634, %v2719
        %v2795 = vmul.f32 %v2635, %v2719
        %v2796 = vmul.f32 %v2636, %v2719
        %v2797 = vmul.f32 %v2637, %v2719
        %v2798 = vmul.f32 %v2638, %v2724
        %v2799 = vmul.f32 %v2639, %v2724
        %v2800 = vmul.f32 %v2640, %v2724
        %v2801 = vmul.f32 %v2641, %v2724
        %v2802 = vmul.f32 %v2642, %v2729
        %v2803 = vmul.f32 %v2643, %v2729
        %v2804 = vmul.f32 %v2644, %v2729
        %v2805 = vmul.f32 %v2645, %v2729
        %v2806 = vmul.f32 %v2646, %v2734
        %v2807 = vmul.f32 %v2647, %v2734
        %v2808 = vmul.f32 %v2648, %v2734
        %v2809 = vmul.f32 %v2649, %v2734
        %v2810 = vmul.f32 %v2650, %v2739
        %v2811 = vmul.f32 %v2651, %v2739
        %v2812 = vmul.f32 %v2652, %v2739
        %v2813 = vmul.f32 %v2653, %v2739
        %v2814 = vmul.f32 %v2654, %v2744
        %v2815 = vmul.f32 %v2655, %v2744
        %v2816 = vmul.f32 %v2656, %v2744
        %v2817 = vmul.f32 %v2657, %v2744
        %v2818 = vmul.f32 %v2658, %v2749
        %v2819 = vmul.f32 %v2659, %v2749
        %v2820 = vmul.f32 %v2660, %v2749
        %v2821 = vmul.f32 %v2661, %v2749
        %v2822 = vmul.f32 %v2662, %v2754
        %v2823 = vmul.f32 %v2663, %v2754
        %v2824 = vmul.f32 %v2664, %v2754
        %v2825 = vmul.f32 %v2665, %v2754
        %v2826 = vmul.f32 %v2666, %v2759
        %v2827 = vmul.f32 %v2667, %v2759
        %v2828 = vmul.f32 %v2668, %v2759
        %v2829 = vmul.f32 %v2669, %v2759
        %v2830 = vmul.f32 %v2670, %v2764
        %v2831 = vmul.f32 %v2671, %v2764
        %v2832 = vmul.f32 %v2672, %v2764
        %v2833 = vmul.f32 %v2673, %v2764
        %v2834 = vmul.f32 %v2674, %v2769
        %v2835 = vmul.f32 %v2675, %v2769
        %v2836 = vmul.f32 %v2676, %v2769
        %v2837 = vmul.f32 %v2677, %v2769
        %v2838 = vmul.f32 %v2678, %v2774
        %v2839 = vmul.f32 %v2679, %v2774
        %v2840 = vmul.f32 %v2680, %v2774
        %v2841 = vmul.f32 %v2681, %v2774
        %v2842 = vmul.f32 %v2682, %v2779
        %v2843 = vmul.f32 %v2683, %v2779
        %v2844 = vmul.f32 %v2684, %v2779
        %v2845 = vmul.f32 %v2685, %v2779
        %v2846 = vmul.f32 %v2686, %v2784
        %v2847 = vmul.f32 %v2687, %v2784
        %v2848 = vmul.f32 %v2688, %v2784
        %v2849 = vmul.f32 %v2689, %v2784
        %2850 = vset.pattern.permute.xlu0 1
        %2851 = vperm.xlu0 %2850, %v2690
        %v2852 = vpop.permute.xlu0 %2851
        %2854 = vset.pattern.permute.xlu0 1
        %2855 = vperm.xlu0 %2854, %v2691
        %v2856 = vpop.permute.xlu0 %2855
        %2858 = vset.pattern.permute.xlu0 1
        %2859 = vperm.xlu0 %2858, %v2692
        %v2860 = vpop.permute.xlu0 %2859
        %2862 = vset.pattern.permute.xlu0 1
        %2863 = vperm.xlu0 %2862, %v2693
        %v2864 = vpop.permute.xlu0 %2863
        %2866 = vset.pattern.permute.xlu0 1
        %2867 = vperm.xlu0 %2866, %v2694
        %v2868 = vpop.permute.xlu0 %2867
        %2870 = vset.pattern.permute.xlu0 1
        %2871 = vperm.xlu0 %2870, %v2695
        %v2872 = vpop.permute.xlu0 %2871
        %2874 = vset.pattern.permute.xlu0 1
        %2875 = vperm.xlu0 %2874, %v2696
        %v2876 = vpop.permute.xlu0 %2875
        %2878 = vset.pattern.permute.xlu0 1
        %2879 = vperm.xlu0 %2878, %v2697
        %v2880 = vpop.permute.xlu0 %2879
        %2882 = vset.pattern.permute.xlu0 1
        %2883 = vperm.xlu0 %2882, %v2698
        %v2884 = vpop.permute.xlu0 %2883
        %2886 = vset.pattern.permute.xlu0 1
        %2887 = vperm.xlu0 %2886, %v2699
        %v2888 = vpop.permute.xlu0 %2887
        %2890 = vset.pattern.permute.xlu0 1
        %2891 = vperm.xlu0 %2890, %v2700
        %v2892 = vpop.permute.xlu0 %2891
        %2894 = vset.pattern.permute.xlu0 1
        %2895 = vperm.xlu0 %2894, %v2701
        %v2896 = vpop.permute.xlu0 %2895
        %2898 = vset.pattern.permute.xlu0 1
        %2899 = vperm.xlu0 %2898, %v2702
        %v2900 = vpop.permute.xlu0 %2899
        %2902 = vset.pattern.permute.xlu0 1
        %2903 = vperm.xlu0 %2902, %v2703
        %v2904 = vpop.permute.xlu0 %2903
        %2906 = vset.pattern.permute.xlu0 1
        %2907 = vperm.xlu0 %2906, %v2704
        %v2908 = vpop.permute.xlu0 %2907
        %2910 = vset.pattern.permute.xlu0 1
        %2911 = vperm.xlu0 %2910, %v2705
        %v2912 = vpop.permute.xlu0 %2911
        %v2914 = vadd.f32 %v2786, %v2852
        %v2915 = vadd.f32 %v2787, %v2852
        %v2916 = vadd.f32 %v2788, %v2852
        %v2917 = vadd.f32 %v2789, %v2852
        %v2918 = vadd.f32 %v2790, %v2856
        %v2919 = vadd.f32 %v2791, %v2856
        %v2920 = vadd.f32 %v2792, %v2856
        %v2921 = vadd.f32 %v2793, %v2856
        %v2922 = vadd.f32 %v2794, %v2860
        %v2923 = vadd.f32 %v2795, %v2860
        %v2924 = vadd.f32 %v2796, %v2860
        %v2925 = vadd.f32 %v2797, %v2860
        %v2926 = vadd.f32 %v2798, %v2864
        %v2927 = vadd.f32 %v2799, %v2864
        %v2928 = vadd.f32 %v2800, %v2864
        %v2929 = vadd.f32 %v2801, %v2864
        %v2930 = vadd.f32 %v2802, %v2868
        %v2931 = vadd.f32 %v2803, %v2868
        %v2932 = vadd.f32 %v2804, %v2868
        %v2933 = vadd.f32 %v2805, %v2868
        %v2934 = vadd.f32 %v2806, %v2872
        %v2935 = vadd.f32 %v2807, %v2872
        %v2936 = vadd.f32 %v2808, %v2872
        %v2937 = vadd.f32 %v2809, %v2872
        %v2938 = vadd.f32 %v2810, %v2876
        %v2939 = vadd.f32 %v2811, %v2876
        %v2940 = vadd.f32 %v2812, %v2876
        %v2941 = vadd.f32 %v2813, %v2876
        %v2942 = vadd.f32 %v2814, %v2880
        %v2943 = vadd.f32 %v2815, %v2880
        %v2944 = vadd.f32 %v2816, %v2880
        %v2945 = vadd.f32 %v2817, %v2880
        %v2946 = vadd.f32 %v2818, %v2884
        %v2947 = vadd.f32 %v2819, %v2884
        %v2948 = vadd.f32 %v2820, %v2884
        %v2949 = vadd.f32 %v2821, %v2884
        %v2950 = vadd.f32 %v2822, %v2888
        %v2951 = vadd.f32 %v2823, %v2888
        %v2952 = vadd.f32 %v2824, %v2888
        %v2953 = vadd.f32 %v2825, %v2888
        %v2954 = vadd.f32 %v2826, %v2892
        %v2955 = vadd.f32 %v2827, %v2892
        %v2956 = vadd.f32 %v2828, %v2892
        %v2957 = vadd.f32 %v2829, %v2892
        %v2958 = vadd.f32 %v2830, %v2896
        %v2959 = vadd.f32 %v2831, %v2896
        %v2960 = vadd.f32 %v2832, %v2896
        %v2961 = vadd.f32 %v2833, %v2896
        %v2962 = vadd.f32 %v2834, %v2900
        %v2963 = vadd.f32 %v2835, %v2900
        %v2964 = vadd.f32 %v2836, %v2900
        %v2965 = vadd.f32 %v2837, %v2900
        %v2966 = vadd.f32 %v2838, %v2904
        %v2967 = vadd.f32 %v2839, %v2904
        %v2968 = vadd.f32 %v2840, %v2904
        %v2969 = vadd.f32 %v2841, %v2904
        %v2970 = vadd.f32 %v2842, %v2908
        %v2971 = vadd.f32 %v2843, %v2908
        %v2972 = vadd.f32 %v2844, %v2908
        %v2973 = vadd.f32 %v2845, %v2908
        %v2974 = vadd.f32 %v2846, %v2912
        %v2975 = vadd.f32 %v2847, %v2912
        %v2976 = vadd.f32 %v2848, %v2912
        %v2977 = vadd.f32 %v2849, %v2912
        %v2978 = vmul.f32 %v2914, %v2914
        %v2979 = vmul.f32 %v2915, %v2915
        %v2980 = vmul.f32 %v2916, %v2916
        %v2981 = vmul.f32 %v2917, %v2917
        %v2982 = vmul.f32 %v2918, %v2918
        %v2983 = vmul.f32 %v2919, %v2919
        %v2984 = vmul.f32 %v2920, %v2920
        %v2985 = vmul.f32 %v2921, %v2921
        %v2986 = vmul.f32 %v2922, %v2922
        %v2987 = vmul.f32 %v2923, %v2923
        %v2988 = vmul.f32 %v2924, %v2924
        %v2989 = vmul.f32 %v2925, %v2925
        %v2990 = vmul.f32 %v2926, %v2926
        %v2991 = vmul.f32 %v2927, %v2927
        %v2992 = vmul.f32 %v2928, %v2928
        %v2993 = vmul.f32 %v2929, %v2929
        %v2994 = vmul.f32 %v2930, %v2930
        %v2995 = vmul.f32 %v2931, %v2931
        %v2996 = vmul.f32 %v2932, %v2932
        %v2997 = vmul.f32 %v2933, %v2933
        %v2998 = vmul.f32 %v2934, %v2934
        %v2999 = vmul.f32 %v2935, %v2935
        %v3000 = vmul.f32 %v2936, %v2936
        %v3001 = vmul.f32 %v2937, %v2937
        %v3002 = vmul.f32 %v2938, %v2938
        %v3003 = vmul.f32 %v2939, %v2939
        %v3004 = vmul.f32 %v2940, %v2940
        %v3005 = vmul.f32 %v2941, %v2941
        %v3006 = vmul.f32 %v2942, %v2942
        %v3007 = vmul.f32 %v2943, %v2943
        %v3008 = vmul.f32 %v2944, %v2944
        %v3009 = vmul.f32 %v2945, %v2945
        %v3010 = vmul.f32 %v2946, %v2946
        %v3011 = vmul.f32 %v2947, %v2947
        %v3012 = vmul.f32 %v2948, %v2948
        %v3013 = vmul.f32 %v2949, %v2949
        %v3014 = vmul.f32 %v2950, %v2950
        %v3015 = vmul.f32 %v2951, %v2951
        %v3016 = vmul.f32 %v2952, %v2952
        %v3017 = vmul.f32 %v2953, %v2953
        %v3018 = vmul.f32 %v2954, %v2954
        %v3019 = vmul.f32 %v2955, %v2955
        %v3020 = vmul.f32 %v2956, %v2956
        %v3021 = vmul.f32 %v2957, %v2957
        %v3022 = vmul.f32 %v2958, %v2958
        %v3023 = vmul.f32 %v2959, %v2959
        %v3024 = vmul.f32 %v2960, %v2960
        %v3025 = vmul.f32 %v2961, %v2961
        %v3026 = vmul.f32 %v2962, %v2962
        %v3027 = vmul.f32 %v2963, %v2963
        %v3028 = vmul.f32 %v2964, %v2964
        %v3029 = vmul.f32 %v2965, %v2965
        %v3030 = vmul.f32 %v2966, %v2966
        %v3031 = vmul.f32 %v2967, %v2967
        %v3032 = vmul.f32 %v2968, %v2968
        %v3033 = vmul.f32 %v2969, %v2969
        %v3034 = vmul.f32 %v2970, %v2970
        %v3035 = vmul.f32 %v2971, %v2971
        %v3036 = vmul.f32 %v2972, %v2972
        %v3037 = vmul.f32 %v2973, %v2973
        %v3038 = vmul.f32 %v2974, %v2974
        %v3039 = vmul.f32 %v2975, %v2975
        %v3040 = vmul.f32 %v2976, %v2976
        %v3041 = vmul.f32 %v2977, %v2977
        %v3042 = vadd.f32 %v2978, %v2979
        %v3043 = vadd.f32 %v3042, %v2980
        %v3044 = vadd.f32 %v3043, %v2981
        %3045 = vadd.xlane.f32.xlu0 %v3044
        %v3046 = vpop.xlane.xlu0 %3045
        %v3047 = vadd.f32 %v2982, %v2983
        %v3048 = vadd.f32 %v3047, %v2984
        %v3049 = vadd.f32 %v3048, %v2985
        %3050 = vadd.xlane.f32.xlu0 %v3049
        %v3051 = vpop.xlane.xlu0 %3050
        %v3052 = vadd.f32 %v2986, %v2987
        %v3053 = vadd.f32 %v3052, %v2988
        %v3054 = vadd.f32 %v3053, %v2989
        %3055 = vadd.xlane.f32.xlu0 %v3054
        %v3056 = vpop.xlane.xlu0 %3055
        %v3057 = vadd.f32 %v2990, %v2991
        %v3058 = vadd.f32 %v3057, %v2992
        %v3059 = vadd.f32 %v3058, %v2993
        %3060 = vadd.xlane.f32.xlu0 %v3059
        %v3061 = vpop.xlane.xlu0 %3060
        %v3062 = vadd.f32 %v2994, %v2995
        %v3063 = vadd.f32 %v3062, %v2996
        %v3064 = vadd.f32 %v3063, %v2997
        %3065 = vadd.xlane.f32.xlu0 %v3064
        %v3066 = vpop.xlane.xlu0 %3065
        %v3067 = vadd.f32 %v2998, %v2999
        %v3068 = vadd.f32 %v3067, %v3000
        %v3069 = vadd.f32 %v3068, %v3001
        %3070 = vadd.xlane.f32.xlu0 %v3069
        %v3071 = vpop.xlane.xlu0 %3070
        %v3072 = vadd.f32 %v3002, %v3003
        %v3073 = vadd.f32 %v3072, %v3004
        %v3074 = vadd.f32 %v3073, %v3005
        %3075 = vadd.xlane.f32.xlu0 %v3074
        %v3076 = vpop.xlane.xlu0 %3075
        %v3077 = vadd.f32 %v3006, %v3007
        %v3078 = vadd.f32 %v3077, %v3008
        %v3079 = vadd.f32 %v3078, %v3009
        %3080 = vadd.xlane.f32.xlu0 %v3079
        %v3081 = vpop.xlane.xlu0 %3080
        %v3082 = vadd.f32 %v3010, %v3011
        %v3083 = vadd.f32 %v3082, %v3012
        %v3084 = vadd.f32 %v3083, %v3013
        %3085 = vadd.xlane.f32.xlu0 %v3084
        %v3086 = vpop.xlane.xlu0 %3085
        %v3087 = vadd.f32 %v3014, %v3015
        %v3088 = vadd.f32 %v3087, %v3016
        %v3089 = vadd.f32 %v3088, %v3017
        %3090 = vadd.xlane.f32.xlu0 %v3089
        %v3091 = vpop.xlane.xlu0 %3090
        %v3092 = vadd.f32 %v3018, %v3019
        %v3093 = vadd.f32 %v3092, %v3020
        %v3094 = vadd.f32 %v3093, %v3021
        %3095 = vadd.xlane.f32.xlu0 %v3094
        %v3096 = vpop.xlane.xlu0 %3095
        %v3097 = vadd.f32 %v3022, %v3023
        %v3098 = vadd.f32 %v3097, %v3024
        %v3099 = vadd.f32 %v3098, %v3025
        %3100 = vadd.xlane.f32.xlu0 %v3099
        %v3101 = vpop.xlane.xlu0 %3100
        %v3102 = vadd.f32 %v3026, %v3027
        %v3103 = vadd.f32 %v3102, %v3028
        %v3104 = vadd.f32 %v3103, %v3029
        %3105 = vadd.xlane.f32.xlu0 %v3104
        %v3106 = vpop.xlane.xlu0 %3105
        %v3107 = vadd.f32 %v3030, %v3031
        %v3108 = vadd.f32 %v3107, %v3032
        %v3109 = vadd.f32 %v3108, %v3033
        %3110 = vadd.xlane.f32.xlu0 %v3109
        %v3111 = vpop.xlane.xlu0 %3110
        %v3112 = vadd.f32 %v3034, %v3035
        %v3113 = vadd.f32 %v3112, %v3036
        %v3114 = vadd.f32 %v3113, %v3037
        %3115 = vadd.xlane.f32.xlu0 %v3114
        %v3116 = vpop.xlane.xlu0 %3115
        %v3117 = vadd.f32 %v3038, %v3039
        %v3118 = vadd.f32 %v3117, %v3040
        %v3119 = vadd.f32 %v3118, %v3041
        %3120 = vadd.xlane.f32.xlu0 %v3119
        %v3121 = vpop.xlane.xlu0 %3120
        %v3122 = vrsqrt.pop %v3046
        %v3123 = vmul.f32 %v3046, %v3122
        %vm3124 = vcmp.eq.f32.partialorder %v3046, inf
        %v3125 = vsel %vm3124, %v3046, %v3123
        %vm3126 = vcmp.eq.f32.partialorder %v3046, 0.0
        %v3127 = vand.u32 %v3046, 2147483648
        %v3128 = vsel %vm3126, %v3127, %v3125
        %v3129 = vrsqrt.pop %v3051
        %v3130 = vmul.f32 %v3051, %v3129
        %vm3131 = vcmp.eq.f32.partialorder %v3051, inf
        %v3132 = vsel %vm3131, %v3051, %v3130
        %vm3133 = vcmp.eq.f32.partialorder %v3051, 0.0
        %v3134 = vand.u32 %v3051, 2147483648
        %v3135 = vsel %vm3133, %v3134, %v3132
        %v3136 = vrsqrt.pop %v3056
        %v3137 = vmul.f32 %v3056, %v3136
        %vm3138 = vcmp.eq.f32.partialorder %v3056, inf
        %v3139 = vsel %vm3138, %v3056, %v3137
        %vm3140 = vcmp.eq.f32.partialorder %v3056, 0.0
        %v3141 = vand.u32 %v3056, 2147483648
        %v3142 = vsel %vm3140, %v3141, %v3139
        %v3143 = vrsqrt.pop %v3061
        %v3144 = vmul.f32 %v3061, %v3143
        %vm3145 = vcmp.eq.f32.partialorder %v3061, inf
        %v3146 = vsel %vm3145, %v3061, %v3144
        %vm3147 = vcmp.eq.f32.partialorder %v3061, 0.0
        %v3148 = vand.u32 %v3061, 2147483648
        %v3149 = vsel %vm3147, %v3148, %v3146
        %v3150 = vrsqrt.pop %v3066
        %v3151 = vmul.f32 %v3066, %v3150
        %vm3152 = vcmp.eq.f32.partialorder %v3066, inf
        %v3153 = vsel %vm3152, %v3066, %v3151
        %vm3154 = vcmp.eq.f32.partialorder %v3066, 0.0
        %v3155 = vand.u32 %v3066, 2147483648
        %v3156 = vsel %vm3154, %v3155, %v3153
        %v3157 = vrsqrt.pop %v3071
        %v3158 = vmul.f32 %v3071, %v3157
        %vm3159 = vcmp.eq.f32.partialorder %v3071, inf
        %v3160 = vsel %vm3159, %v3071, %v3158
        %vm3161 = vcmp.eq.f32.partialorder %v3071, 0.0
        %v3162 = vand.u32 %v3071, 2147483648
        %v3163 = vsel %vm3161, %v3162, %v3160
        %v3164 = vrsqrt.pop %v3076
        %v3165 = vmul.f32 %v3076, %v3164
        %vm3166 = vcmp.eq.f32.partialorder %v3076, inf
        %v3167 = vsel %vm3166, %v3076, %v3165
        %vm3168 = vcmp.eq.f32.partialorder %v3076, 0.0
        %v3169 = vand.u32 %v3076, 2147483648
        %v3170 = vsel %vm3168, %v3169, %v3167
        %v3171 = vrsqrt.pop %v3081
        %v3172 = vmul.f32 %v3081, %v3171
        %vm3173 = vcmp.eq.f32.partialorder %v3081, inf
        %v3174 = vsel %vm3173, %v3081, %v3172
        %vm3175 = vcmp.eq.f32.partialorder %v3081, 0.0
        %v3176 = vand.u32 %v3081, 2147483648
        %v3177 = vsel %vm3175, %v3176, %v3174
        %v3178 = vrsqrt.pop %v3086
        %v3179 = vmul.f32 %v3086, %v3178
        %vm3180 = vcmp.eq.f32.partialorder %v3086, inf
        %v3181 = vsel %vm3180, %v3086, %v3179
        %vm3182 = vcmp.eq.f32.partialorder %v3086, 0.0
        %v3183 = vand.u32 %v3086, 2147483648
        %v3184 = vsel %vm3182, %v3183, %v3181
        %v3185 = vrsqrt.pop %v3091
        %v3186 = vmul.f32 %v3091, %v3185
        %vm3187 = vcmp.eq.f32.partialorder %v3091, inf
        %v3188 = vsel %vm3187, %v3091, %v3186
        %vm3189 = vcmp.eq.f32.partialorder %v3091, 0.0
        %v3190 = vand.u32 %v3091, 2147483648
        %v3191 = vsel %vm3189, %v3190, %v3188
        %v3192 = vrsqrt.pop %v3096
        %v3193 = vmul.f32 %v3096, %v3192
        %vm3194 = vcmp.eq.f32.partialorder %v3096, inf
        %v3195 = vsel %vm3194, %v3096, %v3193
        %vm3196 = vcmp.eq.f32.partialorder %v3096, 0.0
        %v3197 = vand.u32 %v3096, 2147483648
        %v3198 = vsel %vm3196, %v3197, %v3195
        %v3199 = vrsqrt.pop %v3101
        %v3200 = vmul.f32 %v3101, %v3199
        %vm3201 = vcmp.eq.f32.partialorder %v3101, inf
        %v3202 = vsel %vm3201, %v3101, %v3200
        %vm3203 = vcmp.eq.f32.partialorder %v3101, 0.0
        %v3204 = vand.u32 %v3101, 2147483648
        %v3205 = vsel %vm3203, %v3204, %v3202
        %v3206 = vrsqrt.pop %v3106
        %v3207 = vmul.f32 %v3106, %v3206
        %vm3208 = vcmp.eq.f32.partialorder %v3106, inf
        %v3209 = vsel %vm3208, %v3106, %v3207
        %vm3210 = vcmp.eq.f32.partialorder %v3106, 0.0
        %v3211 = vand.u32 %v3106, 2147483648
        %v3212 = vsel %vm3210, %v3211, %v3209
        %v3213 = vrsqrt.pop %v3111
        %v3214 = vmul.f32 %v3111, %v3213
        %vm3215 = vcmp.eq.f32.partialorder %v3111, inf
        %v3216 = vsel %vm3215, %v3111, %v3214
        %vm3217 = vcmp.eq.f32.partialorder %v3111, 0.0
        %v3218 = vand.u32 %v3111, 2147483648
        %v3219 = vsel %vm3217, %v3218, %v3216
        %v3220 = vrsqrt.pop %v3116
        %v3221 = vmul.f32 %v3116, %v3220
        %vm3222 = vcmp.eq.f32.partialorder %v3116, inf
        %v3223 = vsel %vm3222, %v3116, %v3221
        %vm3224 = vcmp.eq.f32.partialorder %v3116, 0.0
        %v3225 = vand.u32 %v3116, 2147483648
        %v3226 = vsel %vm3224, %v3225, %v3223
        %v3227 = vrsqrt.pop %v3121
        %v3228 = vmul.f32 %v3121, %v3227
        %vm3229 = vcmp.eq.f32.partialorder %v3121, inf
        %v3230 = vsel %vm3229, %v3121, %v3228
        %vm3231 = vcmp.eq.f32.partialorder %v3121, 0.0
        %v3232 = vand.u32 %v3121, 2147483648
        %v3233 = vsel %vm3231, %v3232, %v3230
        %v3234 = vmax.f32 %v3128, 1e-12
        %v3235 = vmax.f32 %v3135, 1e-12
        %v3236 = vmax.f32 %v3142, 1e-12
        %v3237 = vmax.f32 %v3149, 1e-12
        %v3238 = vmax.f32 %v3156, 1e-12
        %v3239 = vmax.f32 %v3163, 1e-12
        %v3240 = vmax.f32 %v3170, 1e-12
        %v3241 = vmax.f32 %v3177, 1e-12
        %v3242 = vmax.f32 %v3184, 1e-12
        %v3243 = vmax.f32 %v3191, 1e-12
        %v3244 = vmax.f32 %v3198, 1e-12
        %v3245 = vmax.f32 %v3205, 1e-12
        %v3246 = vmax.f32 %v3212, 1e-12
        %v3247 = vmax.f32 %v3219, 1e-12
        %v3248 = vmax.f32 %v3226, 1e-12
        %v3249 = vmax.f32 %v3233, 1e-12
        %v3250 = vrcp.pop %v3234
        %v3251 = vmul.f32 1.0, %v3250
        %v3252 = vrcp.pop %v3235
        %v3253 = vmul.f32 1.0, %v3252
        %v3254 = vrcp.pop %v3236
        %v3255 = vmul.f32 1.0, %v3254
        %v3256 = vrcp.pop %v3237
        %v3257 = vmul.f32 1.0, %v3256
        %v3258 = vrcp.pop %v3238
        %v3259 = vmul.f32 1.0, %v3258
        %v3260 = vrcp.pop %v3239
        %v3261 = vmul.f32 1.0, %v3260
        %v3262 = vrcp.pop %v3240
        %v3263 = vmul.f32 1.0, %v3262
        %v3264 = vrcp.pop %v3241
        %v3265 = vmul.f32 1.0, %v3264
        %v3266 = vrcp.pop %v3242
        %v3267 = vmul.f32 1.0, %v3266
        %v3268 = vrcp.pop %v3243
        %v3269 = vmul.f32 1.0, %v3268
        %v3270 = vrcp.pop %v3244
        %v3271 = vmul.f32 1.0, %v3270
        %v3272 = vrcp.pop %v3245
        %v3273 = vmul.f32 1.0, %v3272
        %v3274 = vrcp.pop %v3246
        %v3275 = vmul.f32 1.0, %v3274
        %v3276 = vrcp.pop %v3247
        %v3277 = vmul.f32 1.0, %v3276
        %v3278 = vrcp.pop %v3248
        %v3279 = vmul.f32 1.0, %v3278
        %v3280 = vrcp.pop %v3249
        %v3281 = vmul.f32 1.0, %v3280
        %v3282 = vmul.f32 %v2914, %v3251
        %v3283 = vmul.f32 %v2915, %v3251
        %v3284 = vmul.f32 %v2916, %v3251
        %v3285 = vmul.f32 %v2917, %v3251
        %v3286 = vmul.f32 %v2918, %v3253
        %v3287 = vmul.f32 %v2919, %v3253
        %v3288 = vmul.f32 %v2920, %v3253
        %v3289 = vmul.f32 %v2921, %v3253
        %v3290 = vmul.f32 %v2922, %v3255
        %v3291 = vmul.f32 %v2923, %v3255
        %v3292 = vmul.f32 %v2924, %v3255
        %v3293 = vmul.f32 %v2925, %v3255
        %v3294 = vmul.f32 %v2926, %v3257
        %v3295 = vmul.f32 %v2927, %v3257
        %v3296 = vmul.f32 %v2928, %v3257
        %v3297 = vmul.f32 %v2929, %v3257
        %v3298 = vmul.f32 %v2930, %v3259
        %v3299 = vmul.f32 %v2931, %v3259
        %v3300 = vmul.f32 %v2932, %v3259
        %v3301 = vmul.f32 %v2933, %v3259
        %v3302 = vmul.f32 %v2934, %v3261
        %v3303 = vmul.f32 %v2935, %v3261
        %v3304 = vmul.f32 %v2936, %v3261
        %v3305 = vmul.f32 %v2937, %v3261
        %v3306 = vmul.f32 %v2938, %v3263
        %v3307 = vmul.f32 %v2939, %v3263
        %v3308 = vmul.f32 %v2940, %v3263
        %v3309 = vmul.f32 %v2941, %v3263
        %v3310 = vmul.f32 %v2942, %v3265
        %v3311 = vmul.f32 %v2943, %v3265
        %v3312 = vmul.f32 %v2944, %v3265
        %v3313 = vmul.f32 %v2945, %v3265
        %v3314 = vmul.f32 %v2946, %v3267
        %v3315 = vmul.f32 %v2947, %v3267
        %v3316 = vmul.f32 %v2948, %v3267
        %v3317 = vmul.f32 %v2949, %v3267
        %v3318 = vmul.f32 %v2950, %v3269
        %v3319 = vmul.f32 %v2951, %v3269
        %v3320 = vmul.f32 %v2952, %v3269
        %v3321 = vmul.f32 %v2953, %v3269
        %v3322 = vmul.f32 %v2954, %v3271
        %v3323 = vmul.f32 %v2955, %v3271
        %v3324 = vmul.f32 %v2956, %v3271
        %v3325 = vmul.f32 %v2957, %v3271
        %v3326 = vmul.f32 %v2958, %v3273
        %v3327 = vmul.f32 %v2959, %v3273
        %v3328 = vmul.f32 %v2960, %v3273
        %v3329 = vmul.f32 %v2961, %v3273
        %v3330 = vmul.f32 %v2962, %v3275
        %v3331 = vmul.f32 %v2963, %v3275
        %v3332 = vmul.f32 %v2964, %v3275
        %v3333 = vmul.f32 %v2965, %v3275
        %v3334 = vmul.f32 %v2966, %v3277
        %v3335 = vmul.f32 %v2967, %v3277
        %v3336 = vmul.f32 %v2968, %v3277
        %v3337 = vmul.f32 %v2969, %v3277
        %v3338 = vmul.f32 %v2970, %v3279
        %v3339 = vmul.f32 %v2971, %v3279
        %v3340 = vmul.f32 %v2972, %v3279
        %v3341 = vmul.f32 %v2973, %v3279
        %v3342 = vmul.f32 %v2974, %v3281
        %v3343 = vmul.f32 %v2975, %v3281
        %v3344 = vmul.f32 %v2976, %v3281
        %v3345 = vmul.f32 %v2977, %v3281
        %3346 = vst [vmem:[%s288] sm:$0xff] %v3282
        %3347 = vst [vmem:[%s288 + $0x8] sm:$0xff] %v3283
        %3348 = vst [vmem:[%s288 + $0x10] sm:$0xff] %v3284
        %3349 = vst [vmem:[%s288 + $0x18] sm:$0xff] %v3285
        %3350 = vst [vmem:[%s288 + $0x20] sm:$0xff] %v3286
        %3351 = vst [vmem:[%s288 + $0x28] sm:$0xff] %v3287
        %3352 = vst [vmem:[%s288 + $0x30] sm:$0xff] %v3288
        %3353 = vst [vmem:[%s288 + $0x38] sm:$0xff] %v3289
        %3354 = vst [vmem:[%s288 + $0x40] sm:$0xff] %v3290
        %3355 = vst [vmem:[%s288 + $0x48] sm:$0xff] %v3291
        %3356 = vst [vmem:[%s288 + $0x50] sm:$0xff] %v3292
        %3357 = vst [vmem:[%s288 + $0x58] sm:$0xff] %v3293
        %3358 = vst [vmem:[%s288 + $0x60] sm:$0xff] %v3294
        %3359 = vst [vmem:[%s288 + $0x68] sm:$0xff] %v3295
        %3360 = vst [vmem:[%s288 + $0x70] sm:$0xff] %v3296
        %3361 = vst [vmem:[%s288 + $0x78] sm:$0xff] %v3297
        %3362 = vst [vmem:[%s288 + $0x80] sm:$0xff] %v3298
        %3363 = vst [vmem:[%s288 + $0x88] sm:$0xff] %v3299
        %3364 = vst [vmem:[%s288 + $0x90] sm:$0xff] %v3300
        %3365 = vst [vmem:[%s288 + $0x98] sm:$0xff] %v3301
        %3366 = vst [vmem:[%s288 + $0xa0] sm:$0xff] %v3302
        %3367 = vst [vmem:[%s288 + $0xa8] sm:$0xff] %v3303
        %3368 = vst [vmem:[%s288 + $0xb0] sm:$0xff] %v3304
        %3369 = vst [vmem:[%s288 + $0xb8] sm:$0xff] %v3305
        %3370 = vst [vmem:[%s288 + $0xc0] sm:$0xff] %v3306
        %3371 = vst [vmem:[%s288 + $0xc8] sm:$0xff] %v3307
        %3372 = vst [vmem:[%s288 + $0xd0] sm:$0xff] %v3308
        %3373 = vst [vmem:[%s288 + $0xd8] sm:$0xff] %v3309
        %3374 = vst [vmem:[%s288 + $0xe0] sm:$0xff] %v3310
        %3375 = vst [vmem:[%s288 + $0xe8] sm:$0xff] %v3311
        %3376 = vst [vmem:[%s288 + $0xf0] sm:$0xff] %v3312
        %3377 = vst [vmem:[%s288 + $0xf8] sm:$0xff] %v3313
        %3378 = vst [vmem:[%s288 + $0x100] sm:$0xff] %v3314
        %3379 = vst [vmem:[%s288 + $0x108] sm:$0xff] %v3315
        %3380 = vst [vmem:[%s288 + $0x110] sm:$0xff] %v3316
        %3381 = vst [vmem:[%s288 + $0x118] sm:$0xff] %v3317
        %3382 = vst [vmem:[%s288 + $0x120] sm:$0xff] %v3318
        %3383 = vst [vmem:[%s288 + $0x128] sm:$0xff] %v3319
        %3384 = vst [vmem:[%s288 + $0x130] sm:$0xff] %v3320
        %3385 = vst [vmem:[%s288 + $0x138] sm:$0xff] %v3321
        %3386 = vst [vmem:[%s288 + $0x140] sm:$0xff] %v3322
        %3387 = vst [vmem:[%s288 + $0x148] sm:$0xff] %v3323
        %3388 = vst [vmem:[%s288 + $0x150] sm:$0xff] %v3324
        %3389 = vst [vmem:[%s288 + $0x158] sm:$0xff] %v3325
        %3390 = vst [vmem:[%s288 + $0x160] sm:$0xff] %v3326
        %3391 = vst [vmem:[%s288 + $0x168] sm:$0xff] %v3327
        %3392 = vst [vmem:[%s288 + $0x170] sm:$0xff] %v3328
        %3393 = vst [vmem:[%s288 + $0x178] sm:$0xff] %v3329
        %3394 = vst [vmem:[%s288 + $0x180] sm:$0xff] %v3330
        %3395 = vst [vmem:[%s288 + $0x188] sm:$0xff] %v3331
        %3396 = vst [vmem:[%s288 + $0x190] sm:$0xff] %v3332
        %3397 = vst [vmem:[%s288 + $0x198] sm:$0xff] %v3333
        %3398 = vst [vmem:[%s288 + $0x1a0] sm:$0xff] %v3334
        %3399 = vst [vmem:[%s288 + $0x1a8] sm:$0xff] %v3335
        %3400 = vst [vmem:[%s288 + $0x1b0] sm:$0xff] %v3336
        %3401 = vst [vmem:[%s288 + $0x1b8] sm:$0xff] %v3337
        %3402 = vst [vmem:[%s288 + $0x1c0] sm:$0xff] %v3338
        %3403 = vst [vmem:[%s288 + $0x1c8] sm:$0xff] %v3339
        %3404 = vst [vmem:[%s288 + $0x1d0] sm:$0xff] %v3340
        %3405 = vst [vmem:[%s288 + $0x1d8] sm:$0xff] %v3341
        %3406 = vst [vmem:[%s288 + $0x1e0] sm:$0xff] %v3342
        %3407 = vst [vmem:[%s288 + $0x1e8] sm:$0xff] %v3343
        %3408 = vst [vmem:[%s288 + $0x1f0] sm:$0xff] %v3344
        %3409 = vst [vmem:[%s288 + $0x1f8] sm:$0xff] %v3345
        %s3410 = sand.u32 %s186, 1
        %s3411 = scalar_lea.sflag [#allocation3], %s3410
        %s3412 = sand.u32 %s186, 1
        %s3413 = smul.addr %s3412, 512
        %s3414 = scalar_lea.vmem [#allocation2], %s3413
        // Predicated region
        $region49: #{tpu_custom_call.1} parent=47 // pred_check
          %p3415 = pneg %p196
        $region50: #{tpu_custom_call.1} parent=47 // pred_check_branch
          %3417 = sbr.rel (%p3415) target = $region52
        $region51: #{tpu_custom_call.1} parent=47 // pred_region
          %s3418 = smul.u32 16, %s21
          %s3420 = ssub.s32 8192, 8192
          %3421 = vsyncadd %s3411, %s3420
          %s3422 = smul.addr %s3418, 4
          %s3423 = smul.addr %s3422, 128
          %s3424 = scalar_lea.hbm %s7, %s3423
          %s3425 = sshll.u32 %s3414, 4
          %s3426 = int_to_ptr.vmem [resolvable:$true] %s3425
          %3431 = dma.vmem_to_hbm [thread:$0]  %s3426, 8192, %s3424, %s3411, 512, 512, 32
        $region52: #{tpu_custom_call.1} parent=47 // pred_fallthru
          _
      $region48: #{tpu_custom_call.1} parent=5 // pred_fallthru
        _
      %p3432 = scmp.le.s32.totalorder 2, %s16
      // Predicated region
      $region53: #{tpu_custom_call.1} parent=5 // pred_check
        %p3433 = pneg %p3432
      $region54: #{tpu_custom_call.1} parent=5 // pred_check_branch
        %3435 = sbr.rel (%p3433) target = $region56
      $region55: #{tpu_custom_call.1} parent=5 // pred_region
        %s3436 = ssub.s32 %s16, 2
        // Predicated region
        $region57: #{tpu_custom_call.1} parent=55 // pred_check
          %p3437 = pneg %p202
        $region58: #{tpu_custom_call.1} parent=55 // pred_check_branch
          %3439 = sbr.rel (%p3437) target = $region60
        $region59: #{tpu_custom_call.1} parent=55 // pred_region
          %s3440 = sand.u32 %s187, 1
          %s3441 = scalar_lea.sflag [#allocation3], %s3440
          %s3442 = sand.u32 %s187, 1
          %s3443 = smul.addr %s3442, 512
          %s3444 = scalar_lea.vmem [#allocation2], %s3443
          %3445 = dma.done %s3441, 8192
        $region60: #{tpu_custom_call.1} parent=55 // pred_fallthru
          _
      $region56: #{tpu_custom_call.1} parent=5 // pred_fallthru
        _
    $region6: #{tpu_custom_call.1} parent=1 // loop_footer
      %s20 = sadd.s32 1, %s16
    $region7: #{tpu_custom_call.1} parent=1 // loop_footer_branch
      %15 = sbr.rel target = $region3
    $region8: #{tpu_custom_call.1} parent=1 // loop_exit
      _
    %3446 = vsyncpa [#allocation3], 1
    %s3447 = scalar_lea.sflag [#allocation3], 1
    %3448 = vsyncpa %s3447, 1

</llo_original>
